<compile_context>
chip_gen: v6e
topology: v6e:2x2x1
jax: 0.10.0
libtpu: 0.0.40
codegen_flags: <defaults>
</compile_context>

<pallas_src>
import numpy as np
import jax
import jax.numpy as jnp
from jax.experimental import pallas as pl
from jax.experimental.pallas import tpu as pltpu

KS = 9                      # kernel_size of every conv in NetworkNoise2
MAX_SHIFT = (KS - 1) * 8    # largest causal tap shift (dilation 8) = 64
PAD = 128                   # in-kernel causal zero pad; >= MAX_SHIFT, lane aligned
HALO = 128                  # per-sequence-tile history; >= receptive field (120)

# Flat weight/bias table layout (PyTorch (C_out, C_in, K) order, bias follows its conv).
_SIZES = [("w1", 18), ("b1", 2), ("w0", 18), ("b0", 2),
          ("w2", 36), ("b2", 2), ("w3", 36), ("b3", 2),
          ("w4", 36), ("b4", 2)]
_OFF = {}
_o = 0
for _name, _sz in _SIZES:
    _OFF[_name] = _o
    _o += _sz
NWB = _o   # 154 scalars total


# ----------------------------- Pallas kernel --------------------------------
def _network_noise2_kernel(wb_ref, x_ref, means_ref, stds_ref, xbuf, hbuf):
    TB, WIN = x_ref.shape          # batch rows, window columns (halo + TT)
    TT = means_ref.shape[1]        # output columns of this tile
    OFF = WIN - TT                 # halo columns dropped from the output (0 or 128)

    # ---- stage the input window behind PAD columns of causal zeros
    xbuf[:, :PAD] = jnp.zeros((TB, PAD), jnp.float32)
    hbuf[:, :PAD] = jnp.zeros((2 * TB, PAD), jnp.float32)
    xbuf[:, PAD:] = x_ref[...]

    def wt(i):                      # scalar weight from the flat SMEM table
        return wb_ref[i]

    def conv_1to2(base, dil, lo, n):
        """Causal 1->2 conv over xbuf columns [lo, lo+n); returns (y0, y1)."""
        acc0 = None
        acc1 = None
        for j in range(KS):
            s = (KS - 1 - j) * dil
            tap = xbuf[:, PAD + lo - s: PAD + lo - s + n]
            t0 = wt(base + j) * tap              # w[0, 0, j]
            t1 = wt(base + KS + j) * tap         # w[1, 0, j]
            acc0 = t0 if acc0 is None else acc0 + t0
            acc1 = t1 if acc1 is None else acc1 + t1
        return acc0 + wt(base + 2 * KS), acc1 + wt(base + 2 * KS + 1)   # + bias

    def conv_2to2(base, dil, lo, n):
        """Causal 2->2 conv over hbuf columns [lo, lo+n); returns (y0, y1)."""
        acc0 = None
        acc1 = None
        for j in range(KS):
            s = (KS - 1 - j) * dil
            h0 = hbuf[0:TB, PAD + lo - s: PAD + lo - s + n]
            h1 = hbuf[TB:2 * TB, PAD + lo - s: PAD + lo - s + n]
            t0 = wt(base + j) * h0 + wt(base + KS + j) * h1              # w[0,0,j], w[0,1,j]
            t1 = wt(base + 2 * KS + j) * h0 + wt(base + 3 * KS + j) * h1  # w[1,0,j], w[1,1,j]
            acc0 = t0 if acc0 is None else acc0 + t0
            acc1 = t1 if acc1 is None else acc1 + t1
        return acc0 + wt(base + 4 * KS), acc1 + wt(base + 4 * KS + 1)    # + bias

    def store_hidden(h0, h1):
        hbuf[0:TB, PAD:] = h0
        hbuf[TB:2 * TB, PAD:] = h1

    x1_0, x1_1 = conv_1to2(_OFF["w1"], 1, 0, WIN)      # conv1, dilation 1 (full window)
    x2_0, x2_1 = conv_1to2(_OFF["w0"], 8, OFF, TT)     # conv0, dilation 8 (output cols only)
    r0 = x1_0[:, OFF:] + x2_0                          # residual, kept only for output cols
    r1 = x1_1[:, OFF:] + x2_1

    store_hidden(jnp.tanh(x1_0), jnp.tanh(x1_1))       # tanh1
    h0, h1 = conv_2to2(_OFF["w2"], 2, 0, WIN)          # conv2 + tanh2
    store_hidden(jnp.tanh(h0), jnp.tanh(h1))
    h0, h1 = conv_2to2(_OFF["w3"], 4, 0, WIN)          # conv3 + tanh3
    store_hidden(jnp.tanh(h0), jnp.tanh(h1))
    y0, y1 = conv_2to2(_OFF["w4"], 8, OFF, TT)         # conv4 (output cols only)

    means_ref[...] = y0 + r0
    stds_ref[...] = jnp.exp(0.5 * (y1 + r1))


# ------------------------------ wrapper --------------------------------------
def _round_up(v, m):
    return -(-v // m) * m


def _ceil_div(a, b):
    return -(-a // b)


def _vmem_capacity_bytes():
    """Physical VMEM per TensorCore; conservative when the chip is unknown."""
    kind = ""
    try:
        kind = jax.devices()[0].device_kind.lower()
    except Exception:
        pass
    if "v2" in kind or "v3" in kind:
        return 16 * 1024 * 1024
    if ("v5 lite" in kind or "v5e" in kind or "v5litepod" in kind
            or "v6" in kind or "trillium" in kind):
        return 128 * 1024 * 1024
    return 64 * 1024 * 1024        # v7x / unknown parts: assume 64 MiB per core


# Conservative resident bytes per (batch-row x window-column) cell: xbuf + hbuf
# scratch, double-buffered x / means / stds blocks and the handful of live
# (TB, WIN) f32 temporaries the conv body needs (actual ~70 B, margin on top).
_CELL = 96


def network_noise2_forward(x, cur_gt, params):
    """x: (B, 1, T) float32 (PyTorch NCT layout).  cur_gt unused (mirrors the
    PyTorch forward signature).  Returns (means, stds), each (B, T)."""
    del cur_gt  # unused in the reference forward
    B, C, T = x.shape
    assert C == 1
    x2d = x[:, 0, :].astype(jnp.float32)

    # ---------------- VMEM budget (per chip generation) ----------------
    cap = _vmem_capacity_bytes()
    vmem_limit = max(cap - 16 * 1024 * 1024, cap // 2)   # leave compiler headroom
    budget = (vmem_limit * 3) // 4                       # target resident footprint

    # ---------------- sequence (T) tiling ----------------
    T_pad = max(128, _round_up(T, 128))                  # lane-dense output blocks
    col_budget = budget // (8 * _CELL)                   # window cols allowed at TB=8
    units = T_pad // 128
    if PAD + T_pad <= col_budget:
        n_t, TT, halo = 1, T_pad, 0
    else:
        n_t = units
        for d in range(2, units + 1):
            if units % d == 0 and PAD + HALO + T_pad // d <= col_budget:
                n_t = d
                break
        TT, halo = T_pad // n_t, HALO
    WIN = halo + TT
    W = PAD + WIN

    # ---------------- batch (B) tiling ----------------
    B8 = _round_up(B, 8)
    tb_budget = max(8, min(512, (budget // (_CELL * W)) // 8 * 8))
    n_b = _ceil_div(B8, min(tb_budget, B8))
    TB = _round_up(_ceil_div(B8, n_b), 8)

    # Give the second TensorCore (v7x) work when a single block covers everything.
    if n_b * n_t == 1:
        if B8 >= 16:
            n_b = 2
            TB = _round_up(_ceil_div(B8, 2), 8)
        elif T_pad >= 8 * HALO:            # halo recompute overhead <= 12.5%
            n_t, TT, halo = 2, T_pad // 2, HALO
            WIN = halo + TT
            W = PAD + WIN
    B_pad = n_b * TB

    # ---------------- stage the input ----------------
    xp = jnp.pad(x2d, ((0, B_pad - B), (0, T_pad - T)))          # (B_pad, T_pad)
    if n_t == 1:
        x_win = xp.reshape(1, B_pad, WIN)
    else:
        x_lead = jnp.pad(xp, ((0, 0), (HALO, 0)))                # (B_pad, HALO + T_pad)
        cols = jnp.arange(n_t)[:, None] * TT + jnp.arange(WIN)[None, :]
        x_win = jnp.transpose(x_lead[:, cols], (1, 0, 2))        # (n_t, B_pad, WIN)

    # Flat SMEM weight/bias table.
    wb = jnp.concatenate(
        [jnp.asarray(params[name], jnp.float32).reshape(-1) for name, _ in _SIZES])
    assert wb.shape == (NWB,)

    grid_spec = pltpu.PrefetchScalarGridSpec(
        num_scalar_prefetch=0,
        grid=(n_b, n_t),
        in_specs=[
            pl.BlockSpec((NWB,), lambda bi, ti: (0,),
                         memory_space=pltpu.MemorySpace.SMEM),          # weights/biases
            pl.BlockSpec((None, TB, WIN), lambda bi, ti: (ti, bi, 0)),  # x window
        ],
        out_specs=[
            pl.BlockSpec((TB, TT), lambda bi, ti: (bi, ti)),            # means
            pl.BlockSpec((TB, TT), lambda bi, ti: (bi, ti)),            # stds
        ],
        scratch_shapes=[
            pltpu.VMEM((TB, W), jnp.float32),        # zero-padded input window
            pltpu.VMEM((2 * TB, W), jnp.float32),    # zero-padded hidden [h0 ; h1]
        ],
    )

    means, stds = pl.pallas_call(
        _network_noise2_kernel,
        out_shape=(jax.ShapeDtypeStruct((B_pad, T_pad), jnp.float32),
                   jax.ShapeDtypeStruct((B_pad, T_pad), jnp.float32)),
        grid_spec=grid_spec,
        compiler_params=pltpu.CompilerParams(
            dimension_semantics=("parallel", "parallel"),
            vmem_limit_bytes=int(vmem_limit)),
    )(wb, x_win)
    return means[:B, :T], stds[:B, :T]


# -------------------------- deterministic params ------------------------------
def init_params(key):
    """PyTorch-Conv1d-style shapes: w (C_out, C_in, K), b (C_out,)."""
    specs = {  # name -> (c_out, c_in)
        "w0": (2, 1), "w1": (2, 1), "w2": (2, 2), "w3": (2, 2), "w4": (2, 2),
    }
    params = {}
    keys = jax.random.split(key, 2 * len(specs))
    for i, (name, (co, ci)) in enumerate(sorted(specs.items())):
        bound = 1.0 / np.sqrt(ci * KS)
        params[name] = jax.random.uniform(keys[2 * i], (co, ci, KS),
                                          jnp.float32, -bound, bound)
        params["b" + name[1:]] = jax.random.uniform(keys[2 * i + 1], (co,),
                                                    jnp.float32, -bound, bound)
    return params


# ------------------------------ numpy reference -------------------------------
def _ref_causal_conv(x, w, b, dilation):
    B, Cin, T = x.shape
    Cout, _, K = w.shape
    out = np.zeros((B, Cout, T), np.float64)
    for co in range(Cout):
        out[:, co, :] = b[co]
        for ci in range(Cin):
            for j in range(K):
                s = (K - 1 - j) * dilation
                shifted = np.zeros((B, T), np.float64)
                if s == 0:
                    shifted[:] = x[:, ci, :]
                else:
                    shifted[:, s:] = x[:, ci, : T - s]
                out[:, co, :] += w[co, ci, j] * shifted
    return out


def _ref_forward(x, p):
    x = np.asarray(x, np.float64)
    np_p = {k: np.asarray(v, np.float64) for k, v in p.items()}
    x1 = _ref_causal_conv(x, np_p["w1"], np_p["b1"], 1)
    x2 = _ref_causal_conv(x, np_p["w0"], np_p["b0"], 8)
    h = np.tanh(x1)
    h = _ref_causal_conv(h, np_p["w2"], np_p["b2"], 2)
    h = np.tanh(h)
    h = _ref_causal_conv(h, np_p["w3"], np_p["b3"], 4)
    h = np.tanh(h)
    h = _ref_causal_conv(h, np_p["w4"], np_p["b4"], 8)
    out = h + x1 + x2
    return out[:, 0, :], np.exp(0.5 * out[:, 1, :])


# ----------------------------------- main -------------------------------------
if __name__ == "__main__":
    B, T = 2, 256  # small shapes; T multiple of 128 (lane width)
    key = jax.random.PRNGKey(0)
    k_x, k_gt, k_p = jax.random.split(key, 3)

    x = jax.random.normal(k_x, (B, 1, T), jnp.float32)
    cur_gt = jax.random.normal(k_gt, (B, 1, T), jnp.float32)  # unused by forward
    params = init_params(k_p)

    means, stds = network_noise2_forward(x, cur_gt, params)
    means = jax.block_until_ready(means)
    stds = jax.block_until_ready(stds)

    ref_means, ref_stds = _ref_forward(np.asarray(x), params)
    np.testing.assert_allclose(np.asarray(means), ref_means, rtol=1e-4, atol=1e-4)
    np.testing.assert_allclose(np.asarray(stds), ref_stds, rtol=1e-4, atol=1e-4)

    print("KERNEL_OK")
</pallas_src>

<mosaic_0001>
module attributes {stable_mosaic.version = 11 : i64} {
  func.func @_network_noise2_kernel(%arg0: i32, %arg1: i32, %arg2: memref<154xf32, #tpu.memory_space<smem>>, %arg3: memref<1x8x256xf32, #tpu.memory_space<vmem>>, %arg4: memref<8x256xf32, #tpu.memory_space<vmem>>, %arg5: memref<8x256xf32, #tpu.memory_space<vmem>>, %arg6: memref<8x384xf32, #tpu.memory_space<vmem>>, %arg7: memref<16x384xf32, #tpu.memory_space<vmem>>) attributes {dimension_semantics = [#tpu.dimension_semantics<parallel>, #tpu.dimension_semantics<parallel>], iteration_bounds = array<i64: 1, 1>, scalar_prefetch = 0 : i64, scratch_operands = 2 : i64, tpu.core_type = #tpu.core_type<tc>, window_params = [{transform_indices = @transform_0, window_bounds = array<i64: 154>}, {transform_indices = @transform_1, window_bounds = array<i64: 1, 8, 256>}, {transform_indices = @transform_2, window_bounds = array<i64: 8, 256>}, {transform_indices = @transform_3, window_bounds = array<i64: 8, 256>}]} {
    %cst = arith.constant 0.000000e+00 : f32
    %0 = vector.broadcast %cst : f32 to vector<8x128xf32>
    %c0 = arith.constant 0 : index
    %c0_0 = arith.constant 0 : index
    %1 = vector.load %arg6[%c0, %c0_0] : memref<8x384xf32, #tpu.memory_space<vmem>>, vector<8x128xf32>
    tpu.vector_store %arg6[%c0, %c0_0], %0 {strides = array<i32>} : memref<8x384xf32, #tpu.memory_space<vmem>>, vector<8x128xf32>,
    %cst_1 = arith.constant 0.000000e+00 : f32
    %2 = vector.broadcast %cst_1 : f32 to vector<16x128xf32>
    %c0_2 = arith.constant 0 : index
    %c0_3 = arith.constant 0 : index
    %3 = vector.load %arg7[%c0_2, %c0_3] : memref<16x384xf32, #tpu.memory_space<vmem>>, vector<16x128xf32>
    tpu.vector_store %arg7[%c0_2, %c0_3], %2 {strides = array<i32>} : memref<16x384xf32, #tpu.memory_space<vmem>>, vector<16x128xf32>,
    %c0_4 = arith.constant 0 : index
    %c0_5 = arith.constant 0 : index
    %c0_6 = arith.constant 0 : index
    %4 = vector.load %arg3[%c0_4, %c0_5, %c0_6] : memref<1x8x256xf32, #tpu.memory_space<vmem>>, vector<1x8x256xf32>
    %5 = vector.shape_cast %4 : vector<1x8x256xf32> to vector<8x256xf32>
    %c0_7 = arith.constant 0 : index
    %c128 = arith.constant 128 : index
    %6 = vector.load %arg6[%c0_7, %c128] : memref<8x384xf32, #tpu.memory_space<vmem>>, vector<8x256xf32>
    tpu.vector_store %arg6[%c0_7, %c128], %5 {strides = array<i32>} : memref<8x384xf32, #tpu.memory_space<vmem>>, vector<8x256xf32>,
    %c0_8 = arith.constant 0 : index
    %c120 = arith.constant 120 : index
    %7 = vector.load %arg6[%c0_8, %c120] : memref<8x384xf32, #tpu.memory_space<vmem>>, vector<8x256xf32>
    %c0_9 = arith.constant 0 : index
    %8 = memref.load %arg2[%c0_9] : memref<154xf32, #tpu.memory_space<smem>>
    %9 = vector.broadcast %8 : f32 to vector<8x256xf32>
    %10 = arith.mulf %9, %7 : vector<8x256xf32>
    %c9 = arith.constant 9 : index
    %11 = memref.load %arg2[%c9] : memref<154xf32, #tpu.memory_space<smem>>
    %12 = vector.broadcast %11 : f32 to vector<8x256xf32>
    %13 = arith.mulf %12, %7 : vector<8x256xf32>
    %c0_10 = arith.constant 0 : index
    %c121 = arith.constant 121 : index
    %14 = vector.load %arg6[%c0_10, %c121] : memref<8x384xf32, #tpu.memory_space<vmem>>, vector<8x256xf32>
    %c1 = arith.constant 1 : index
    %15 = memref.load %arg2[%c1] : memref<154xf32, #tpu.memory_space<smem>>
    %16 = vector.broadcast %15 : f32 to vector<8x256xf32>
    %17 = arith.mulf %16, %14 : vector<8x256xf32>
    %c10 = arith.constant 10 : index
    %18 = memref.load %arg2[%c10] : memref<154xf32, #tpu.memory_space<smem>>
    %19 = vector.broadcast %18 : f32 to vector<8x256xf32>
    %20 = arith.mulf %19, %14 : vector<8x256xf32>
    %21 = arith.addf %10, %17 : vector<8x256xf32>
    %22 = arith.addf %13, %20 : vector<8x256xf32>
    %c0_11 = arith.constant 0 : index
    %c122 = arith.constant 122 : index
    %23 = vector.load %arg6[%c0_11, %c122] : memref<8x384xf32, #tpu.memory_space<vmem>>, vector<8x256xf32>
    %c2 = arith.constant 2 : index
    %24 = memref.load %arg2[%c2] : memref<154xf32, #tpu.memory_space<smem>>
    %25 = vector.broadcast %24 : f32 to vector<8x256xf32>
    %26 = arith.mulf %25, %23 : vector<8x256xf32>
    %c11 = arith.constant 11 : index
    %27 = memref.load %arg2[%c11] : memref<154xf32, #tpu.memory_space<smem>>
    %28 = vector.broadcast %27 : f32 to vector<8x256xf32>
    %29 = arith.mulf %28, %23 : vector<8x256xf32>
    %30 = arith.addf %21, %26 : vector<8x256xf32>
    %31 = arith.addf %22, %29 : vector<8x256xf32>
    %c0_12 = arith.constant 0 : index
    %c123 = arith.constant 123 : index
    %32 = vector.load %arg6[%c0_12, %c123] : memref<8x384xf32, #tpu.memory_space<vmem>>, vector<8x256xf32>
    %c3 = arith.constant 3 : index
    %33 = memref.load %arg2[%c3] : memref<154xf32, #tpu.memory_space<smem>>
    %34 = vector.broadcast %33 : f32 to vector<8x256xf32>
    %35 = arith.mulf %34, %32 : vector<8x256xf32>
    %c12 = arith.constant 12 : index
    %36 = memref.load %arg2[%c12] : memref<154xf32, #tpu.memory_space<smem>>
    %37 = vector.broadcast %36 : f32 to vector<8x256xf32>
    %38 = arith.mulf %37, %32 : vector<8x256xf32>
    %39 = arith.addf %30, %35 : vector<8x256xf32>
    %40 = arith.addf %31, %38 : vector<8x256xf32>
    %c0_13 = arith.constant 0 : index
    %c124 = arith.constant 124 : index
    %41 = vector.load %arg6[%c0_13, %c124] : memref<8x384xf32, #tpu.memory_space<vmem>>, vector<8x256xf32>
    %c4 = arith.constant 4 : index
    %42 = memref.load %arg2[%c4] : memref<154xf32, #tpu.memory_space<smem>>
    %43 = vector.broadcast %42 : f32 to vector<8x256xf32>
    %44 = arith.mulf %43, %41 : vector<8x256xf32>
    %c13 = arith.constant 13 : index
    %45 = memref.load %arg2[%c13] : memref<154xf32, #tpu.memory_space<smem>>
    %46 = vector.broadcast %45 : f32 to vector<8x256xf32>
    %47 = arith.mulf %46, %41 : vector<8x256xf32>
    %48 = arith.addf %39, %44 : vector<8x256xf32>
    %49 = arith.addf %40, %47 : vector<8x256xf32>
    %c0_14 = arith.constant 0 : index
    %c125 = arith.constant 125 : index
    %50 = vector.load %arg6[%c0_14, %c125] : memref<8x384xf32, #tpu.memory_space<vmem>>, vector<8x256xf32>
    %c5 = arith.constant 5 : index
    %51 = memref.load %arg2[%c5] : memref<154xf32, #tpu.memory_space<smem>>
    %52 = vector.broadcast %51 : f32 to vector<8x256xf32>
    %53 = arith.mulf %52, %50 : vector<8x256xf32>
    %c14 = arith.constant 14 : index
    %54 = memref.load %arg2[%c14] : memref<154xf32, #tpu.memory_space<smem>>
    %55 = vector.broadcast %54 : f32 to vector<8x256xf32>
    %56 = arith.mulf %55, %50 : vector<8x256xf32>
    %57 = arith.addf %48, %53 : vector<8x256xf32>
    %58 = arith.addf %49, %56 : vector<8x256xf32>
    %c0_15 = arith.constant 0 : index
    %c126 = arith.constant 126 : index
    %59 = vector.load %arg6[%c0_15, %c126] : memref<8x384xf32, #tpu.memory_space<vmem>>, vector<8x256xf32>
    %c6 = arith.constant 6 : index
    %60 = memref.load %arg2[%c6] : memref<154xf32, #tpu.memory_space<smem>>
    %61 = vector.broadcast %60 : f32 to vector<8x256xf32>
    %62 = arith.mulf %61, %59 : vector<8x256xf32>
    %c15 = arith.constant 15 : index
    %63 = memref.load %arg2[%c15] : memref<154xf32, #tpu.memory_space<smem>>
    %64 = vector.broadcast %63 : f32 to vector<8x256xf32>
    %65 = arith.mulf %64, %59 : vector<8x256xf32>
    %66 = arith.addf %57, %62 : vector<8x256xf32>
    %67 = arith.addf %58, %65 : vector<8x256xf32>
    %c0_16 = arith.constant 0 : index
    %c127 = arith.constant 127 : index
    %68 = vector.load %arg6[%c0_16, %c127] : memref<8x384xf32, #tpu.memory_space<vmem>>, vector<8x256xf32>
    %c7 = arith.constant 7 : index
    %69 = memref.load %arg2[%c7] : memref<154xf32, #tpu.memory_space<smem>>
    %70 = vector.broadcast %69 : f32 to vector<8x256xf32>
    %71 = arith.mulf %70, %68 : vector<8x256xf32>
    %c16 = arith.constant 16 : index
    %72 = memref.load %arg2[%c16] : memref<154xf32, #tpu.memory_space<smem>>
    %73 = vector.broadcast %72 : f32 to vector<8x256xf32>
    %74 = arith.mulf %73, %68 : vector<8x256xf32>
    %75 = arith.addf %66, %71 : vector<8x256xf32>
    %76 = arith.addf %67, %74 : vector<8x256xf32>
    %c0_17 = arith.constant 0 : index
    %c128_18 = arith.constant 128 : index
    %77 = vector.load %arg6[%c0_17, %c128_18] : memref<8x384xf32, #tpu.memory_space<vmem>>, vector<8x256xf32>
    %c8 = arith.constant 8 : index
    %78 = memref.load %arg2[%c8] : memref<154xf32, #tpu.memory_space<smem>>
    %79 = vector.broadcast %78 : f32 to vector<8x256xf32>
    %80 = arith.mulf %79, %77 : vector<8x256xf32>
    %c17 = arith.constant 17 : index
    %81 = memref.load %arg2[%c17] : memref<154xf32, #tpu.memory_space<smem>>
    %82 = vector.broadcast %81 : f32 to vector<8x256xf32>
    %83 = arith.mulf %82, %77 : vector<8x256xf32>
    %84 = arith.addf %75, %80 : vector<8x256xf32>
    %85 = arith.addf %76, %83 : vector<8x256xf32>
    %c18 = arith.constant 18 : index
    %86 = memref.load %arg2[%c18] : memref<154xf32, #tpu.memory_space<smem>>
    %87 = vector.broadcast %86 : f32 to vector<8x256xf32>
    %88 = arith.addf %84, %87 : vector<8x256xf32>
    %c19 = arith.constant 19 : index
    %89 = memref.load %arg2[%c19] : memref<154xf32, #tpu.memory_space<smem>>
    %90 = vector.broadcast %89 : f32 to vector<8x256xf32>
    %91 = arith.addf %85, %90 : vector<8x256xf32>
    %c0_19 = arith.constant 0 : index
    %c64 = arith.constant 64 : index
    %92 = vector.load %arg6[%c0_19, %c64] : memref<8x384xf32, #tpu.memory_space<vmem>>, vector<8x256xf32>
    %c20 = arith.constant 20 : index
    %93 = memref.load %arg2[%c20] : memref<154xf32, #tpu.memory_space<smem>>
    %94 = vector.broadcast %93 : f32 to vector<8x256xf32>
    %95 = arith.mulf %94, %92 : vector<8x256xf32>
    %c29 = arith.constant 29 : index
    %96 = memref.load %arg2[%c29] : memref<154xf32, #tpu.memory_space<smem>>
    %97 = vector.broadcast %96 : f32 to vector<8x256xf32>
    %98 = arith.mulf %97, %92 : vector<8x256xf32>
    %c0_20 = arith.constant 0 : index
    %c72 = arith.constant 72 : index
    %99 = vector.load %arg6[%c0_20, %c72] : memref<8x384xf32, #tpu.memory_space<vmem>>, vector<8x256xf32>
    %c21 = arith.constant 21 : index
    %100 = memref.load %arg2[%c21] : memref<154xf32, #tpu.memory_space<smem>>
    %101 = vector.broadcast %100 : f32 to vector<8x256xf32>
    %102 = arith.mulf %101, %99 : vector<8x256xf32>
    %c30 = arith.constant 30 : index
    %103 = memref.load %arg2[%c30] : memref<154xf32, #tpu.memory_space<smem>>
    %104 = vector.broadcast %103 : f32 to vector<8x256xf32>
    %105 = arith.mulf %104, %99 : vector<8x256xf32>
    %106 = arith.addf %95, %102 : vector<8x256xf32>
    %107 = arith.addf %98, %105 : vector<8x256xf32>
    %c0_21 = arith.constant 0 : index
    %c80 = arith.constant 80 : index
    %108 = vector.load %arg6[%c0_21, %c80] : memref<8x384xf32, #tpu.memory_space<vmem>>, vector<8x256xf32>
    %c22 = arith.constant 22 : index
    %109 = memref.load %arg2[%c22] : memref<154xf32, #tpu.memory_space<smem>>
    %110 = vector.broadcast %109 : f32 to vector<8x256xf32>
    %111 = arith.mulf %110, %108 : vector<8x256xf32>
    %c31 = arith.constant 31 : index
    %112 = memref.load %arg2[%c31] : memref<154xf32, #tpu.memory_space<smem>>
    %113 = vector.broadcast %112 : f32 to vector<8x256xf32>
    %114 = arith.mulf %113, %108 : vector<8x256xf32>
    %115 = arith.addf %106, %111 : vector<8x256xf32>
    %116 = arith.addf %107, %114 : vector<8x256xf32>
    %c0_22 = arith.constant 0 : index
    %c88 = arith.constant 88 : index
    %117 = vector.load %arg6[%c0_22, %c88] : memref<8x384xf32, #tpu.memory_space<vmem>>, vector<8x256xf32>
    %c23 = arith.constant 23 : index
    %118 = memref.load %arg2[%c23] : memref<154xf32, #tpu.memory_space<smem>>
    %119 = vector.broadcast %118 : f32 to vector<8x256xf32>
    %120 = arith.mulf %119, %117 : vector<8x256xf32>
    %c32 = arith.constant 32 : index
    %121 = memref.load %arg2[%c32] : memref<154xf32, #tpu.memory_space<smem>>
    %122 = vector.broadcast %121 : f32 to vector<8x256xf32>
    %123 = arith.mulf %122, %117 : vector<8x256xf32>
    %124 = arith.addf %115, %120 : vector<8x256xf32>
    %125 = arith.addf %116, %123 : vector<8x256xf32>
    %c0_23 = arith.constant 0 : index
    %c96 = arith.constant 96 : index
    %126 = vector.load %arg6[%c0_23, %c96] : memref<8x384xf32, #tpu.memory_space<vmem>>, vector<8x256xf32>
    %c24 = arith.constant 24 : index
    %127 = memref.load %arg2[%c24] : memref<154xf32, #tpu.memory_space<smem>>
    %128 = vector.broadcast %127 : f32 to vector<8x256xf32>
    %129 = arith.mulf %128, %126 : vector<8x256xf32>
    %c33 = arith.constant 33 : index
    %130 = memref.load %arg2[%c33] : memref<154xf32, #tpu.memory_space<smem>>
    %131 = vector.broadcast %130 : f32 to vector<8x256xf32>
    %132 = arith.mulf %131, %126 : vector<8x256xf32>
    %133 = arith.addf %124, %129 : vector<8x256xf32>
    %134 = arith.addf %125, %132 : vector<8x256xf32>
    %c0_24 = arith.constant 0 : index
    %c104 = arith.constant 104 : index
    %135 = vector.load %arg6[%c0_24, %c104] : memref<8x384xf32, #tpu.memory_space<vmem>>, vector<8x256xf32>
    %c25 = arith.constant 25 : index
    %136 = memref.load %arg2[%c25] : memref<154xf32, #tpu.memory_space<smem>>
    %137 = vector.broadcast %136 : f32 to vector<8x256xf32>
    %138 = arith.mulf %137, %135 : vector<8x256xf32>
    %c34 = arith.constant 34 : index
    %139 = memref.load %arg2[%c34] : memref<154xf32, #tpu.memory_space<smem>>
    %140 = vector.broadcast %139 : f32 to vector<8x256xf32>
    %141 = arith.mulf %140, %135 : vector<8x256xf32>
    %142 = arith.addf %133, %138 : vector<8x256xf32>
    %143 = arith.addf %134, %141 : vector<8x256xf32>
    %c0_25 = arith.constant 0 : index
    %c112 = arith.constant 112 : index
    %144 = vector.load %arg6[%c0_25, %c112] : memref<8x384xf32, #tpu.memory_space<vmem>>, vector<8x256xf32>
    %c26 = arith.constant 26 : index
    %145 = memref.load %arg2[%c26] : memref<154xf32, #tpu.memory_space<smem>>
    %146 = vector.broadcast %145 : f32 to vector<8x256xf32>
    %147 = arith.mulf %146, %144 : vector<8x256xf32>
    %c35 = arith.constant 35 : index
    %148 = memref.load %arg2[%c35] : memref<154xf32, #tpu.memory_space<smem>>
    %149 = vector.broadcast %148 : f32 to vector<8x256xf32>
    %150 = arith.mulf %149, %144 : vector<8x256xf32>
    %151 = arith.addf %142, %147 : vector<8x256xf32>
    %152 = arith.addf %143, %150 : vector<8x256xf32>
    %c0_26 = arith.constant 0 : index
    %c120_27 = arith.constant 120 : index
    %153 = vector.load %arg6[%c0_26, %c120_27] : memref<8x384xf32, #tpu.memory_space<vmem>>, vector<8x256xf32>
    %c27 = arith.constant 27 : index
    %154 = memref.load %arg2[%c27] : memref<154xf32, #tpu.memory_space<smem>>
    %155 = vector.broadcast %154 : f32 to vector<8x256xf32>
    %156 = arith.mulf %155, %153 : vector<8x256xf32>
    %c36 = arith.constant 36 : index
    %157 = memref.load %arg2[%c36] : memref<154xf32, #tpu.memory_space<smem>>
    %158 = vector.broadcast %157 : f32 to vector<8x256xf32>
    %159 = arith.mulf %158, %153 : vector<8x256xf32>
    %160 = arith.addf %151, %156 : vector<8x256xf32>
    %161 = arith.addf %152, %159 : vector<8x256xf32>
    %c0_28 = arith.constant 0 : index
    %c128_29 = arith.constant 128 : index
    %162 = vector.load %arg6[%c0_28, %c128_29] : memref<8x384xf32, #tpu.memory_space<vmem>>, vector<8x256xf32>
    %c28 = arith.constant 28 : index
    %163 = memref.load %arg2[%c28] : memref<154xf32, #tpu.memory_space<smem>>
    %164 = vector.broadcast %163 : f32 to vector<8x256xf32>
    %165 = arith.mulf %164, %162 : vector<8x256xf32>
    %c37 = arith.constant 37 : index
    %166 = memref.load %arg2[%c37] : memref<154xf32, #tpu.memory_space<smem>>
    %167 = vector.broadcast %166 : f32 to vector<8x256xf32>
    %168 = arith.mulf %167, %162 : vector<8x256xf32>
    %169 = arith.addf %160, %165 : vector<8x256xf32>
    %170 = arith.addf %161, %168 : vector<8x256xf32>
    %c38 = arith.constant 38 : index
    %171 = memref.load %arg2[%c38] : memref<154xf32, #tpu.memory_space<smem>>
    %172 = vector.broadcast %171 : f32 to vector<8x256xf32>
    %173 = arith.addf %169, %172 : vector<8x256xf32>
    %c39 = arith.constant 39 : index
    %174 = memref.load %arg2[%c39] : memref<154xf32, #tpu.memory_space<smem>>
    %175 = vector.broadcast %174 : f32 to vector<8x256xf32>
    %176 = arith.addf %170, %175 : vector<8x256xf32>
    %177 = arith.addf %88, %173 : vector<8x256xf32>
    %178 = arith.addf %91, %176 : vector<8x256xf32>
    %179 = math.tanh %88 : vector<8x256xf32>
    %180 = math.tanh %91 : vector<8x256xf32>
    %c0_30 = arith.constant 0 : index
    %c128_31 = arith.constant 128 : index
    %181 = vector.load %arg7[%c0_30, %c128_31] : memref<16x384xf32, #tpu.memory_space<vmem>>, vector<8x256xf32>
    tpu.vector_store %arg7[%c0_30, %c128_31], %179 {strides = array<i32>} : memref<16x384xf32, #tpu.memory_space<vmem>>, vector<8x256xf32>,
    %c8_32 = arith.constant 8 : index
    %c128_33 = arith.constant 128 : index
    %182 = vector.load %arg7[%c8_32, %c128_33] : memref<16x384xf32, #tpu.memory_space<vmem>>, vector<8x256xf32>
    tpu.vector_store %arg7[%c8_32, %c128_33], %180 {strides = array<i32>} : memref<16x384xf32, #tpu.memory_space<vmem>>, vector<8x256xf32>,
    %c0_34 = arith.constant 0 : index
    %c112_35 = arith.constant 112 : index
    %183 = vector.load %arg7[%c0_34, %c112_35] : memref<16x384xf32, #tpu.memory_space<vmem>>, vector<8x256xf32>
    %c8_36 = arith.constant 8 : index
    %c112_37 = arith.constant 112 : index
    %184 = vector.load %arg7[%c8_36, %c112_37] : memref<16x384xf32, #tpu.memory_space<vmem>>, vector<8x256xf32>
    %c40 = arith.constant 40 : index
    %185 = memref.load %arg2[%c40] : memref<154xf32, #tpu.memory_space<smem>>
    %186 = vector.broadcast %185 : f32 to vector<8x256xf32>
    %187 = arith.mulf %186, %183 : vector<8x256xf32>
    %c49 = arith.constant 49 : index
    %188 = memref.load %arg2[%c49] : memref<154xf32, #tpu.memory_space<smem>>
    %189 = vector.broadcast %188 : f32 to vector<8x256xf32>
    %190 = arith.mulf %189, %184 : vector<8x256xf32>
    %191 = arith.addf %187, %190 : vector<8x256xf32>
    %c58 = arith.constant 58 : index
    %192 = memref.load %arg2[%c58] : memref<154xf32, #tpu.memory_space<smem>>
    %193 = vector.broadcast %192 : f32 to vector<8x256xf32>
    %194 = arith.mulf %193, %183 : vector<8x256xf32>
    %c67 = arith.constant 67 : index
    %195 = memref.load %arg2[%c67] : memref<154xf32, #tpu.memory_space<smem>>
    %196 = vector.broadcast %195 : f32 to vector<8x256xf32>
    %197 = arith.mulf %196, %184 : vector<8x256xf32>
    %198 = arith.addf %194, %197 : vector<8x256xf32>
    %c0_38 = arith.constant 0 : index
    %c114 = arith.constant 114 : index
    %199 = vector.load %arg7[%c0_38, %c114] : memref<16x384xf32, #tpu.memory_space<vmem>>, vector<8x256xf32>
    %c8_39 = arith.constant 8 : index
    %c114_40 = arith.constant 114 : index
    %200 = vector.load %arg7[%c8_39, %c114_40] : memref<16x384xf32, #tpu.memory_space<vmem>>, vector<8x256xf32>
    %c41 = arith.constant 41 : index
    %201 = memref.load %arg2[%c41] : memref<154xf32, #tpu.memory_space<smem>>
    %202 = vector.broadcast %201 : f32 to vector<8x256xf32>
    %203 = arith.mulf %202, %199 : vector<8x256xf32>
    %c50 = arith.constant 50 : index
    %204 = memref.load %arg2[%c50] : memref<154xf32, #tpu.memory_space<smem>>
    %205 = vector.broadcast %204 : f32 to vector<8x256xf32>
    %206 = arith.mulf %205, %200 : vector<8x256xf32>
    %207 = arith.addf %203, %206 : vector<8x256xf32>
    %c59 = arith.constant 59 : index
    %208 = memref.load %arg2[%c59] : memref<154xf32, #tpu.memory_space<smem>>
    %209 = vector.broadcast %208 : f32 to vector<8x256xf32>
    %210 = arith.mulf %209, %199 : vector<8x256xf32>
    %c68 = arith.constant 68 : index
    %211 = memref.load %arg2[%c68] : memref<154xf32, #tpu.memory_space<smem>>
    %212 = vector.broadcast %211 : f32 to vector<8x256xf32>
    %213 = arith.mulf %212, %200 : vector<8x256xf32>
    %214 = arith.addf %210, %213 : vector<8x256xf32>
    %215 = arith.addf %191, %207 : vector<8x256xf32>
    %216 = arith.addf %198, %214 : vector<8x256xf32>
    %c0_41 = arith.constant 0 : index
    %c116 = arith.constant 116 : index
    %217 = vector.load %arg7[%c0_41, %c116] : memref<16x384xf32, #tpu.memory_space<vmem>>, vector<8x256xf32>
    %c8_42 = arith.constant 8 : index
    %c116_43 = arith.constant 116 : index
    %218 = vector.load %arg7[%c8_42, %c116_43] : memref<16x384xf32, #tpu.memory_space<vmem>>, vector<8x256xf32>
    %c42 = arith.constant 42 : index
    %219 = memref.load %arg2[%c42] : memref<154xf32, #tpu.memory_space<smem>>
    %220 = vector.broadcast %219 : f32 to vector<8x256xf32>
    %221 = arith.mulf %220, %217 : vector<8x256xf32>
    %c51 = arith.constant 51 : index
    %222 = memref.load %arg2[%c51] : memref<154xf32, #tpu.memory_space<smem>>
    %223 = vector.broadcast %222 : f32 to vector<8x256xf32>
    %224 = arith.mulf %223, %218 : vector<8x256xf32>
    %225 = arith.addf %221, %224 : vector<8x256xf32>
    %c60 = arith.constant 60 : index
    %226 = memref.load %arg2[%c60] : memref<154xf32, #tpu.memory_space<smem>>
    %227 = vector.broadcast %226 : f32 to vector<8x256xf32>
    %228 = arith.mulf %227, %217 : vector<8x256xf32>
    %c69 = arith.constant 69 : index
    %229 = memref.load %arg2[%c69] : memref<154xf32, #tpu.memory_space<smem>>
    %230 = vector.broadcast %229 : f32 to vector<8x256xf32>
    %231 = arith.mulf %230, %218 : vector<8x256xf32>
    %232 = arith.addf %228, %231 : vector<8x256xf32>
    %233 = arith.addf %215, %225 : vector<8x256xf32>
    %234 = arith.addf %216, %232 : vector<8x256xf32>
    %c0_44 = arith.constant 0 : index
    %c118 = arith.constant 118 : index
    %235 = vector.load %arg7[%c0_44, %c118] : memref<16x384xf32, #tpu.memory_space<vmem>>, vector<8x256xf32>
    %c8_45 = arith.constant 8 : index
    %c118_46 = arith.constant 118 : index
    %236 = vector.load %arg7[%c8_45, %c118_46] : memref<16x384xf32, #tpu.memory_space<vmem>>, vector<8x256xf32>
    %c43 = arith.constant 43 : index
    %237 = memref.load %arg2[%c43] : memref<154xf32, #tpu.memory_space<smem>>
    %238 = vector.broadcast %237 : f32 to vector<8x256xf32>
    %239 = arith.mulf %238, %235 : vector<8x256xf32>
    %c52 = arith.constant 52 : index
    %240 = memref.load %arg2[%c52] : memref<154xf32, #tpu.memory_space<smem>>
    %241 = vector.broadcast %240 : f32 to vector<8x256xf32>
    %242 = arith.mulf %241, %236 : vector<8x256xf32>
    %243 = arith.addf %239, %242 : vector<8x256xf32>
    %c61 = arith.constant 61 : index
    %244 = memref.load %arg2[%c61] : memref<154xf32, #tpu.memory_space<smem>>
    %245 = vector.broadcast %244 : f32 to vector<8x256xf32>
    %246 = arith.mulf %245, %235 : vector<8x256xf32>
    %c70 = arith.constant 70 : index
    %247 = memref.load %arg2[%c70] : memref<154xf32, #tpu.memory_space<smem>>
    %248 = vector.broadcast %247 : f32 to vector<8x256xf32>
    %249 = arith.mulf %248, %236 : vector<8x256xf32>
    %250 = arith.addf %246, %249 : vector<8x256xf32>
    %251 = arith.addf %233, %243 : vector<8x256xf32>
    %252 = arith.addf %234, %250 : vector<8x256xf32>
    %c0_47 = arith.constant 0 : index
    %c120_48 = arith.constant 120 : index
    %253 = vector.load %arg7[%c0_47, %c120_48] : memref<16x384xf32, #tpu.memory_space<vmem>>, vector<8x256xf32>
    %c8_49 = arith.constant 8 : index
    %c120_50 = arith.constant 120 : index
    %254 = vector.load %arg7[%c8_49, %c120_50] : memref<16x384xf32, #tpu.memory_space<vmem>>, vector<8x256xf32>
    %c44 = arith.constant 44 : index
    %255 = memref.load %arg2[%c44] : memref<154xf32, #tpu.memory_space<smem>>
    %256 = vector.broadcast %255 : f32 to vector<8x256xf32>
    %257 = arith.mulf %256, %253 : vector<8x256xf32>
    %c53 = arith.constant 53 : index
    %258 = memref.load %arg2[%c53] : memref<154xf32, #tpu.memory_space<smem>>
    %259 = vector.broadcast %258 : f32 to vector<8x256xf32>
    %260 = arith.mulf %259, %254 : vector<8x256xf32>
    %261 = arith.addf %257, %260 : vector<8x256xf32>
    %c62 = arith.constant 62 : index
    %262 = memref.load %arg2[%c62] : memref<154xf32, #tpu.memory_space<smem>>
    %263 = vector.broadcast %262 : f32 to vector<8x256xf32>
    %264 = arith.mulf %263, %253 : vector<8x256xf32>
    %c71 = arith.constant 71 : index
    %265 = memref.load %arg2[%c71] : memref<154xf32, #tpu.memory_space<smem>>
    %266 = vector.broadcast %265 : f32 to vector<8x256xf32>
    %267 = arith.mulf %266, %254 : vector<8x256xf32>
    %268 = arith.addf %264, %267 : vector<8x256xf32>
    %269 = arith.addf %251, %261 : vector<8x256xf32>
    %270 = arith.addf %252, %268 : vector<8x256xf32>
    %c0_51 = arith.constant 0 : index
    %c122_52 = arith.constant 122 : index
    %271 = vector.load %arg7[%c0_51, %c122_52] : memref<16x384xf32, #tpu.memory_space<vmem>>, vector<8x256xf32>
    %c8_53 = arith.constant 8 : index
    %c122_54 = arith.constant 122 : index
    %272 = vector.load %arg7[%c8_53, %c122_54] : memref<16x384xf32, #tpu.memory_space<vmem>>, vector<8x256xf32>
    %c45 = arith.constant 45 : index
    %273 = memref.load %arg2[%c45] : memref<154xf32, #tpu.memory_space<smem>>
    %274 = vector.broadcast %273 : f32 to vector<8x256xf32>
    %275 = arith.mulf %274, %271 : vector<8x256xf32>
    %c54 = arith.constant 54 : index
    %276 = memref.load %arg2[%c54] : memref<154xf32, #tpu.memory_space<smem>>
    %277 = vector.broadcast %276 : f32 to vector<8x256xf32>
    %278 = arith.mulf %277, %272 : vector<8x256xf32>
    %279 = arith.addf %275, %278 : vector<8x256xf32>
    %c63 = arith.constant 63 : index
    %280 = memref.load %arg2[%c63] : memref<154xf32, #tpu.memory_space<smem>>
    %281 = vector.broadcast %280 : f32 to vector<8x256xf32>
    %282 = arith.mulf %281, %271 : vector<8x256xf32>
    %c72_55 = arith.constant 72 : index
    %283 = memref.load %arg2[%c72_55] : memref<154xf32, #tpu.memory_space<smem>>
    %284 = vector.broadcast %283 : f32 to vector<8x256xf32>
    %285 = arith.mulf %284, %272 : vector<8x256xf32>
    %286 = arith.addf %282, %285 : vector<8x256xf32>
    %287 = arith.addf %269, %279 : vector<8x256xf32>
    %288 = arith.addf %270, %286 : vector<8x256xf32>
    %c0_56 = arith.constant 0 : index
    %c124_57 = arith.constant 124 : index
    %289 = vector.load %arg7[%c0_56, %c124_57] : memref<16x384xf32, #tpu.memory_space<vmem>>, vector<8x256xf32>
    %c8_58 = arith.constant 8 : index
    %c124_59 = arith.constant 124 : index
    %290 = vector.load %arg7[%c8_58, %c124_59] : memref<16x384xf32, #tpu.memory_space<vmem>>, vector<8x256xf32>
    %c46 = arith.constant 46 : index
    %291 = memref.load %arg2[%c46] : memref<154xf32, #tpu.memory_space<smem>>
    %292 = vector.broadcast %291 : f32 to vector<8x256xf32>
    %293 = arith.mulf %292, %289 : vector<8x256xf32>
    %c55 = arith.constant 55 : index
    %294 = memref.load %arg2[%c55] : memref<154xf32, #tpu.memory_space<smem>>
    %295 = vector.broadcast %294 : f32 to vector<8x256xf32>
    %296 = arith.mulf %295, %290 : vector<8x256xf32>
    %297 = arith.addf %293, %296 : vector<8x256xf32>
    %c64_60 = arith.constant 64 : index
    %298 = memref.load %arg2[%c64_60] : memref<154xf32, #tpu.memory_space<smem>>
    %299 = vector.broadcast %298 : f32 to vector<8x256xf32>
    %300 = arith.mulf %299, %289 : vector<8x256xf32>
    %c73 = arith.constant 73 : index
    %301 = memref.load %arg2[%c73] : memref<154xf32, #tpu.memory_space<smem>>
    %302 = vector.broadcast %301 : f32 to vector<8x256xf32>
    %303 = arith.mulf %302, %290 : vector<8x256xf32>
    %304 = arith.addf %300, %303 : vector<8x256xf32>
    %305 = arith.addf %287, %297 : vector<8x256xf32>
    %306 = arith.addf %288, %304 : vector<8x256xf32>
    %c0_61 = arith.constant 0 : index
    %c126_62 = arith.constant 126 : index
    %307 = vector.load %arg7[%c0_61, %c126_62] : memref<16x384xf32, #tpu.memory_space<vmem>>, vector<8x256xf32>
    %c8_63 = arith.constant 8 : index
    %c126_64 = arith.constant 126 : index
    %308 = vector.load %arg7[%c8_63, %c126_64] : memref<16x384xf32, #tpu.memory_space<vmem>>, vector<8x256xf32>
    %c47 = arith.constant 47 : index
    %309 = memref.load %arg2[%c47] : memref<154xf32, #tpu.memory_space<smem>>
    %310 = vector.broadcast %309 : f32 to vector<8x256xf32>
    %311 = arith.mulf %310, %307 : vector<8x256xf32>
    %c56 = arith.constant 56 : index
    %312 = memref.load %arg2[%c56] : memref<154xf32, #tpu.memory_space<smem>>
    %313 = vector.broadcast %312 : f32 to vector<8x256xf32>
    %314 = arith.mulf %313, %308 : vector<8x256xf32>
    %315 = arith.addf %311, %314 : vector<8x256xf32>
    %c65 = arith.constant 65 : index
    %316 = memref.load %arg2[%c65] : memref<154xf32, #tpu.memory_space<smem>>
    %317 = vector.broadcast %316 : f32 to vector<8x256xf32>
    %318 = arith.mulf %317, %307 : vector<8x256xf32>
    %c74 = arith.constant 74 : index
    %319 = memref.load %arg2[%c74] : memref<154xf32, #tpu.memory_space<smem>>
    %320 = vector.broadcast %319 : f32 to vector<8x256xf32>
    %321 = arith.mulf %320, %308 : vector<8x256xf32>
    %322 = arith.addf %318, %321 : vector<8x256xf32>
    %323 = arith.addf %305, %315 : vector<8x256xf32>
    %324 = arith.addf %306, %322 : vector<8x256xf32>
    %c0_65 = arith.constant 0 : index
    %c128_66 = arith.constant 128 : index
    %325 = vector.load %arg7[%c0_65, %c128_66] : memref<16x384xf32, #tpu.memory_space<vmem>>, vector<8x256xf32>
    %c8_67 = arith.constant 8 : index
    %c128_68 = arith.constant 128 : index
    %326 = vector.load %arg7[%c8_67, %c128_68] : memref<16x384xf32, #tpu.memory_space<vmem>>, vector<8x256xf32>
    %c48 = arith.constant 48 : index
    %327 = memref.load %arg2[%c48] : memref<154xf32, #tpu.memory_space<smem>>
    %328 = vector.broadcast %327 : f32 to vector<8x256xf32>
    %329 = arith.mulf %328, %325 : vector<8x256xf32>
    %c57 = arith.constant 57 : index
    %330 = memref.load %arg2[%c57] : memref<154xf32, #tpu.memory_space<smem>>
    %331 = vector.broadcast %330 : f32 to vector<8x256xf32>
    %332 = arith.mulf %331, %326 : vector<8x256xf32>
    %333 = arith.addf %329, %332 : vector<8x256xf32>
    %c66 = arith.constant 66 : index
    %334 = memref.load %arg2[%c66] : memref<154xf32, #tpu.memory_space<smem>>
    %335 = vector.broadcast %334 : f32 to vector<8x256xf32>
    %336 = arith.mulf %335, %325 : vector<8x256xf32>
    %c75 = arith.constant 75 : index
    %337 = memref.load %arg2[%c75] : memref<154xf32, #tpu.memory_space<smem>>
    %338 = vector.broadcast %337 : f32 to vector<8x256xf32>
    %339 = arith.mulf %338, %326 : vector<8x256xf32>
    %340 = arith.addf %336, %339 : vector<8x256xf32>
    %341 = arith.addf %323, %333 : vector<8x256xf32>
    %342 = arith.addf %324, %340 : vector<8x256xf32>
    %c76 = arith.constant 76 : index
    %343 = memref.load %arg2[%c76] : memref<154xf32, #tpu.memory_space<smem>>
    %344 = vector.broadcast %343 : f32 to vector<8x256xf32>
    %345 = arith.addf %341, %344 : vector<8x256xf32>
    %c77 = arith.constant 77 : index
    %346 = memref.load %arg2[%c77] : memref<154xf32, #tpu.memory_space<smem>>
    %347 = vector.broadcast %346 : f32 to vector<8x256xf32>
    %348 = arith.addf %342, %347 : vector<8x256xf32>
    %349 = math.tanh %345 : vector<8x256xf32>
    %350 = math.tanh %348 : vector<8x256xf32>
    %c0_69 = arith.constant 0 : index
    %c128_70 = arith.constant 128 : index
    %351 = vector.load %arg7[%c0_69, %c128_70] : memref<16x384xf32, #tpu.memory_space<vmem>>, vector<8x256xf32>
    tpu.vector_store %arg7[%c0_69, %c128_70], %349 {strides = array<i32>} : memref<16x384xf32, #tpu.memory_space<vmem>>, vector<8x256xf32>,
    %c8_71 = arith.constant 8 : index
    %c128_72 = arith.constant 128 : index
    %352 = vector.load %arg7[%c8_71, %c128_72] : memref<16x384xf32, #tpu.memory_space<vmem>>, vector<8x256xf32>
    tpu.vector_store %arg7[%c8_71, %c128_72], %350 {strides = array<i32>} : memref<16x384xf32, #tpu.memory_space<vmem>>, vector<8x256xf32>,
    %c0_73 = arith.constant 0 : index
    %c96_74 = arith.constant 96 : index
    %353 = vector.load %arg7[%c0_73, %c96_74] : memref<16x384xf32, #tpu.memory_space<vmem>>, vector<8x256xf32>
    %c8_75 = arith.constant 8 : index
    %c96_76 = arith.constant 96 : index
    %354 = vector.load %arg7[%c8_75, %c96_76] : memref<16x384xf32, #tpu.memory_space<vmem>>, vector<8x256xf32>
    %c78 = arith.constant 78 : index
    %355 = memref.load %arg2[%c78] : memref<154xf32, #tpu.memory_space<smem>>
    %356 = vector.broadcast %355 : f32 to vector<8x256xf32>
    %357 = arith.mulf %356, %353 : vector<8x256xf32>
    %c87 = arith.constant 87 : index
    %358 = memref.load %arg2[%c87] : memref<154xf32, #tpu.memory_space<smem>>
    %359 = vector.broadcast %358 : f32 to vector<8x256xf32>
    %360 = arith.mulf %359, %354 : vector<8x256xf32>
    %361 = arith.addf %357, %360 : vector<8x256xf32>
    %c96_77 = arith.constant 96 : index
    %362 = memref.load %arg2[%c96_77] : memref<154xf32, #tpu.memory_space<smem>>
    %363 = vector.broadcast %362 : f32 to vector<8x256xf32>
    %364 = arith.mulf %363, %353 : vector<8x256xf32>
    %c105 = arith.constant 105 : index
    %365 = memref.load %arg2[%c105] : memref<154xf32, #tpu.memory_space<smem>>
    %366 = vector.broadcast %365 : f32 to vector<8x256xf32>
    %367 = arith.mulf %366, %354 : vector<8x256xf32>
    %368 = arith.addf %364, %367 : vector<8x256xf32>
    %c0_78 = arith.constant 0 : index
    %c100 = arith.constant 100 : index
    %369 = vector.load %arg7[%c0_78, %c100] : memref<16x384xf32, #tpu.memory_space<vmem>>, vector<8x256xf32>
    %c8_79 = arith.constant 8 : index
    %c100_80 = arith.constant 100 : index
    %370 = vector.load %arg7[%c8_79, %c100_80] : memref<16x384xf32, #tpu.memory_space<vmem>>, vector<8x256xf32>
    %c79 = arith.constant 79 : index
    %371 = memref.load %arg2[%c79] : memref<154xf32, #tpu.memory_space<smem>>
    %372 = vector.broadcast %371 : f32 to vector<8x256xf32>
    %373 = arith.mulf %372, %369 : vector<8x256xf32>
    %c88_81 = arith.constant 88 : index
    %374 = memref.load %arg2[%c88_81] : memref<154xf32, #tpu.memory_space<smem>>
    %375 = vector.broadcast %374 : f32 to vector<8x256xf32>
    %376 = arith.mulf %375, %370 : vector<8x256xf32>
    %377 = arith.addf %373, %376 : vector<8x256xf32>
    %c97 = arith.constant 97 : index
    %378 = memref.load %arg2[%c97] : memref<154xf32, #tpu.memory_space<smem>>
    %379 = vector.broadcast %378 : f32 to vector<8x256xf32>
    %380 = arith.mulf %379, %369 : vector<8x256xf32>
    %c106 = arith.constant 106 : index
    %381 = memref.load %arg2[%c106] : memref<154xf32, #tpu.memory_space<smem>>
    %382 = vector.broadcast %381 : f32 to vector<8x256xf32>
    %383 = arith.mulf %382, %370 : vector<8x256xf32>
    %384 = arith.addf %380, %383 : vector<8x256xf32>
    %385 = arith.addf %361, %377 : vector<8x256xf32>
    %386 = arith.addf %368, %384 : vector<8x256xf32>
    %c0_82 = arith.constant 0 : index
    %c104_83 = arith.constant 104 : index
    %387 = vector.load %arg7[%c0_82, %c104_83] : memref<16x384xf32, #tpu.memory_space<vmem>>, vector<8x256xf32>
    %c8_84 = arith.constant 8 : index
    %c104_85 = arith.constant 104 : index
    %388 = vector.load %arg7[%c8_84, %c104_85] : memref<16x384xf32, #tpu.memory_space<vmem>>, vector<8x256xf32>
    %c80_86 = arith.constant 80 : index
    %389 = memref.load %arg2[%c80_86] : memref<154xf32, #tpu.memory_space<smem>>
    %390 = vector.broadcast %389 : f32 to vector<8x256xf32>
    %391 = arith.mulf %390, %387 : vector<8x256xf32>
    %c89 = arith.constant 89 : index
    %392 = memref.load %arg2[%c89] : memref<154xf32, #tpu.memory_space<smem>>
    %393 = vector.broadcast %392 : f32 to vector<8x256xf32>
    %394 = arith.mulf %393, %388 : vector<8x256xf32>
    %395 = arith.addf %391, %394 : vector<8x256xf32>
    %c98 = arith.constant 98 : index
    %396 = memref.load %arg2[%c98] : memref<154xf32, #tpu.memory_space<smem>>
    %397 = vector.broadcast %396 : f32 to vector<8x256xf32>
    %398 = arith.mulf %397, %387 : vector<8x256xf32>
    %c107 = arith.constant 107 : index
    %399 = memref.load %arg2[%c107] : memref<154xf32, #tpu.memory_space<smem>>
    %400 = vector.broadcast %399 : f32 to vector<8x256xf32>
    %401 = arith.mulf %400, %388 : vector<8x256xf32>
    %402 = arith.addf %398, %401 : vector<8x256xf32>
    %403 = arith.addf %385, %395 : vector<8x256xf32>
    %404 = arith.addf %386, %402 : vector<8x256xf32>
    %c0_87 = arith.constant 0 : index
    %c108 = arith.constant 108 : index
    %405 = vector.load %arg7[%c0_87, %c108] : memref<16x384xf32, #tpu.memory_space<vmem>>, vector<8x256xf32>
    %c8_88 = arith.constant 8 : index
    %c108_89 = arith.constant 108 : index
    %406 = vector.load %arg7[%c8_88, %c108_89] : memref<16x384xf32, #tpu.memory_space<vmem>>, vector<8x256xf32>
    %c81 = arith.constant 81 : index
    %407 = memref.load %arg2[%c81] : memref<154xf32, #tpu.memory_space<smem>>
    %408 = vector.broadcast %407 : f32 to vector<8x256xf32>
    %409 = arith.mulf %408, %405 : vector<8x256xf32>
    %c90 = arith.constant 90 : index
    %410 = memref.load %arg2[%c90] : memref<154xf32, #tpu.memory_space<smem>>
    %411 = vector.broadcast %410 : f32 to vector<8x256xf32>
    %412 = arith.mulf %411, %406 : vector<8x256xf32>
    %413 = arith.addf %409, %412 : vector<8x256xf32>
    %c99 = arith.constant 99 : index
    %414 = memref.load %arg2[%c99] : memref<154xf32, #tpu.memory_space<smem>>
    %415 = vector.broadcast %414 : f32 to vector<8x256xf32>
    %416 = arith.mulf %415, %405 : vector<8x256xf32>
    %c108_90 = arith.constant 108 : index
    %417 = memref.load %arg2[%c108_90] : memref<154xf32, #tpu.memory_space<smem>>
    %418 = vector.broadcast %417 : f32 to vector<8x256xf32>
    %419 = arith.mulf %418, %406 : vector<8x256xf32>
    %420 = arith.addf %416, %419 : vector<8x256xf32>
    %421 = arith.addf %403, %413 : vector<8x256xf32>
    %422 = arith.addf %404, %420 : vector<8x256xf32>
    %c0_91 = arith.constant 0 : index
    %c112_92 = arith.constant 112 : index
    %423 = vector.load %arg7[%c0_91, %c112_92] : memref<16x384xf32, #tpu.memory_space<vmem>>, vector<8x256xf32>
    %c8_93 = arith.constant 8 : index
    %c112_94 = arith.constant 112 : index
    %424 = vector.load %arg7[%c8_93, %c112_94] : memref<16x384xf32, #tpu.memory_space<vmem>>, vector<8x256xf32>
    %c82 = arith.constant 82 : index
    %425 = memref.load %arg2[%c82] : memref<154xf32, #tpu.memory_space<smem>>
    %426 = vector.broadcast %425 : f32 to vector<8x256xf32>
    %427 = arith.mulf %426, %423 : vector<8x256xf32>
    %c91 = arith.constant 91 : index
    %428 = memref.load %arg2[%c91] : memref<154xf32, #tpu.memory_space<smem>>
    %429 = vector.broadcast %428 : f32 to vector<8x256xf32>
    %430 = arith.mulf %429, %424 : vector<8x256xf32>
    %431 = arith.addf %427, %430 : vector<8x256xf32>
    %c100_95 = arith.constant 100 : index
    %432 = memref.load %arg2[%c100_95] : memref<154xf32, #tpu.memory_space<smem>>
    %433 = vector.broadcast %432 : f32 to vector<8x256xf32>
    %434 = arith.mulf %433, %423 : vector<8x256xf32>
    %c109 = arith.constant 109 : index
    %435 = memref.load %arg2[%c109] : memref<154xf32, #tpu.memory_space<smem>>
    %436 = vector.broadcast %435 : f32 to vector<8x256xf32>
    %437 = arith.mulf %436, %424 : vector<8x256xf32>
    %438 = arith.addf %434, %437 : vector<8x256xf32>
    %439 = arith.addf %421, %431 : vector<8x256xf32>
    %440 = arith.addf %422, %438 : vector<8x256xf32>
    %c0_96 = arith.constant 0 : index
    %c116_97 = arith.constant 116 : index
    %441 = vector.load %arg7[%c0_96, %c116_97] : memref<16x384xf32, #tpu.memory_space<vmem>>, vector<8x256xf32>
    %c8_98 = arith.constant 8 : index
    %c116_99 = arith.constant 116 : index
    %442 = vector.load %arg7[%c8_98, %c116_99] : memref<16x384xf32, #tpu.memory_space<vmem>>, vector<8x256xf32>
    %c83 = arith.constant 83 : index
    %443 = memref.load %arg2[%c83] : memref<154xf32, #tpu.memory_space<smem>>
    %444 = vector.broadcast %443 : f32 to vector<8x256xf32>
    %445 = arith.mulf %444, %441 : vector<8x256xf32>
    %c92 = arith.constant 92 : index
    %446 = memref.load %arg2[%c92] : memref<154xf32, #tpu.memory_space<smem>>
    %447 = vector.broadcast %446 : f32 to vector<8x256xf32>
    %448 = arith.mulf %447, %442 : vector<8x256xf32>
    %449 = arith.addf %445, %448 : vector<8x256xf32>
    %c101 = arith.constant 101 : index
    %450 = memref.load %arg2[%c101] : memref<154xf32, #tpu.memory_space<smem>>
    %451 = vector.broadcast %450 : f32 to vector<8x256xf32>
    %452 = arith.mulf %451, %441 : vector<8x256xf32>
    %c110 = arith.constant 110 : index
    %453 = memref.load %arg2[%c110] : memref<154xf32, #tpu.memory_space<smem>>
    %454 = vector.broadcast %453 : f32 to vector<8x256xf32>
    %455 = arith.mulf %454, %442 : vector<8x256xf32>
    %456 = arith.addf %452, %455 : vector<8x256xf32>
    %457 = arith.addf %439, %449 : vector<8x256xf32>
    %458 = arith.addf %440, %456 : vector<8x256xf32>
    %c0_100 = arith.constant 0 : index
    %c120_101 = arith.constant 120 : index
    %459 = vector.load %arg7[%c0_100, %c120_101] : memref<16x384xf32, #tpu.memory_space<vmem>>, vector<8x256xf32>
    %c8_102 = arith.constant 8 : index
    %c120_103 = arith.constant 120 : index
    %460 = vector.load %arg7[%c8_102, %c120_103] : memref<16x384xf32, #tpu.memory_space<vmem>>, vector<8x256xf32>
    %c84 = arith.constant 84 : index
    %461 = memref.load %arg2[%c84] : memref<154xf32, #tpu.memory_space<smem>>
    %462 = vector.broadcast %461 : f32 to vector<8x256xf32>
    %463 = arith.mulf %462, %459 : vector<8x256xf32>
    %c93 = arith.constant 93 : index
    %464 = memref.load %arg2[%c93] : memref<154xf32, #tpu.memory_space<smem>>
    %465 = vector.broadcast %464 : f32 to vector<8x256xf32>
    %466 = arith.mulf %465, %460 : vector<8x256xf32>
    %467 = arith.addf %463, %466 : vector<8x256xf32>
    %c102 = arith.constant 102 : index
    %468 = memref.load %arg2[%c102] : memref<154xf32, #tpu.memory_space<smem>>
    %469 = vector.broadcast %468 : f32 to vector<8x256xf32>
    %470 = arith.mulf %469, %459 : vector<8x256xf32>
    %c111 = arith.constant 111 : index
    %471 = memref.load %arg2[%c111] : memref<154xf32, #tpu.memory_space<smem>>
    %472 = vector.broadcast %471 : f32 to vector<8x256xf32>
    %473 = arith.mulf %472, %460 : vector<8x256xf32>
    %474 = arith.addf %470, %473 : vector<8x256xf32>
    %475 = arith.addf %457, %467 : vector<8x256xf32>
    %476 = arith.addf %458, %474 : vector<8x256xf32>
    %c0_104 = arith.constant 0 : index
    %c124_105 = arith.constant 124 : index
    %477 = vector.load %arg7[%c0_104, %c124_105] : memref<16x384xf32, #tpu.memory_space<vmem>>, vector<8x256xf32>
    %c8_106 = arith.constant 8 : index
    %c124_107 = arith.constant 124 : index
    %478 = vector.load %arg7[%c8_106, %c124_107] : memref<16x384xf32, #tpu.memory_space<vmem>>, vector<8x256xf32>
    %c85 = arith.constant 85 : index
    %479 = memref.load %arg2[%c85] : memref<154xf32, #tpu.memory_space<smem>>
    %480 = vector.broadcast %479 : f32 to vector<8x256xf32>
    %481 = arith.mulf %480, %477 : vector<8x256xf32>
    %c94 = arith.constant 94 : index
    %482 = memref.load %arg2[%c94] : memref<154xf32, #tpu.memory_space<smem>>
    %483 = vector.broadcast %482 : f32 to vector<8x256xf32>
    %484 = arith.mulf %483, %478 : vector<8x256xf32>
    %485 = arith.addf %481, %484 : vector<8x256xf32>
    %c103 = arith.constant 103 : index
    %486 = memref.load %arg2[%c103] : memref<154xf32, #tpu.memory_space<smem>>
    %487 = vector.broadcast %486 : f32 to vector<8x256xf32>
    %488 = arith.mulf %487, %477 : vector<8x256xf32>
    %c112_108 = arith.constant 112 : index
    %489 = memref.load %arg2[%c112_108] : memref<154xf32, #tpu.memory_space<smem>>
    %490 = vector.broadcast %489 : f32 to vector<8x256xf32>
    %491 = arith.mulf %490, %478 : vector<8x256xf32>
    %492 = arith.addf %488, %491 : vector<8x256xf32>
    %493 = arith.addf %475, %485 : vector<8x256xf32>
    %494 = arith.addf %476, %492 : vector<8x256xf32>
    %c0_109 = arith.constant 0 : index
    %c128_110 = arith.constant 128 : index
    %495 = vector.load %arg7[%c0_109, %c128_110] : memref<16x384xf32, #tpu.memory_space<vmem>>, vector<8x256xf32>
    %c8_111 = arith.constant 8 : index
    %c128_112 = arith.constant 128 : index
    %496 = vector.load %arg7[%c8_111, %c128_112] : memref<16x384xf32, #tpu.memory_space<vmem>>, vector<8x256xf32>
    %c86 = arith.constant 86 : index
    %497 = memref.load %arg2[%c86] : memref<154xf32, #tpu.memory_space<smem>>
    %498 = vector.broadcast %497 : f32 to vector<8x256xf32>
    %499 = arith.mulf %498, %495 : vector<8x256xf32>
    %c95 = arith.constant 95 : index
    %500 = memref.load %arg2[%c95] : memref<154xf32, #tpu.memory_space<smem>>
    %501 = vector.broadcast %500 : f32 to vector<8x256xf32>
    %502 = arith.mulf %501, %496 : vector<8x256xf32>
    %503 = arith.addf %499, %502 : vector<8x256xf32>
    %c104_113 = arith.constant 104 : index
    %504 = memref.load %arg2[%c104_113] : memref<154xf32, #tpu.memory_space<smem>>
    %505 = vector.broadcast %504 : f32 to vector<8x256xf32>
    %506 = arith.mulf %505, %495 : vector<8x256xf32>
    %c113 = arith.constant 113 : index
    %507 = memref.load %arg2[%c113] : memref<154xf32, #tpu.memory_space<smem>>
    %508 = vector.broadcast %507 : f32 to vector<8x256xf32>
    %509 = arith.mulf %508, %496 : vector<8x256xf32>
    %510 = arith.addf %506, %509 : vector<8x256xf32>
    %511 = arith.addf %493, %503 : vector<8x256xf32>
    %512 = arith.addf %494, %510 : vector<8x256xf32>
    %c114_114 = arith.constant 114 : index
    %513 = memref.load %arg2[%c114_114] : memref<154xf32, #tpu.memory_space<smem>>
    %514 = vector.broadcast %513 : f32 to vector<8x256xf32>
    %515 = arith.addf %511, %514 : vector<8x256xf32>
    %c115 = arith.constant 115 : index
    %516 = memref.load %arg2[%c115] : memref<154xf32, #tpu.memory_space<smem>>
    %517 = vector.broadcast %516 : f32 to vector<8x256xf32>
    %518 = arith.addf %512, %517 : vector<8x256xf32>
    %519 = math.tanh %515 : vector<8x256xf32>
    %520 = math.tanh %518 : vector<8x256xf32>
    %c0_115 = arith.constant 0 : index
    %c128_116 = arith.constant 128 : index
    %521 = vector.load %arg7[%c0_115, %c128_116] : memref<16x384xf32, #tpu.memory_space<vmem>>, vector<8x256xf32>
    tpu.vector_store %arg7[%c0_115, %c128_116], %519 {strides = array<i32>} : memref<16x384xf32, #tpu.memory_space<vmem>>, vector<8x256xf32>,
    %c8_117 = arith.constant 8 : index
    %c128_118 = arith.constant 128 : index
    %522 = vector.load %arg7[%c8_117, %c128_118] : memref<16x384xf32, #tpu.memory_space<vmem>>, vector<8x256xf32>
    tpu.vector_store %arg7[%c8_117, %c128_118], %520 {strides = array<i32>} : memref<16x384xf32, #tpu.memory_space<vmem>>, vector<8x256xf32>,
    %c0_119 = arith.constant 0 : index
    %c64_120 = arith.constant 64 : index
    %523 = vector.load %arg7[%c0_119, %c64_120] : memref<16x384xf32, #tpu.memory_space<vmem>>, vector<8x256xf32>
    %c8_121 = arith.constant 8 : index
    %c64_122 = arith.constant 64 : index
    %524 = vector.load %arg7[%c8_121, %c64_122] : memref<16x384xf32, #tpu.memory_space<vmem>>, vector<8x256xf32>
    %c116_123 = arith.constant 116 : index
    %525 = memref.load %arg2[%c116_123] : memref<154xf32, #tpu.memory_space<smem>>
    %526 = vector.broadcast %525 : f32 to vector<8x256xf32>
    %527 = arith.mulf %526, %523 : vector<8x256xf32>
    %c125_124 = arith.constant 125 : index
    %528 = memref.load %arg2[%c125_124] : memref<154xf32, #tpu.memory_space<smem>>
    %529 = vector.broadcast %528 : f32 to vector<8x256xf32>
    %530 = arith.mulf %529, %524 : vector<8x256xf32>
    %531 = arith.addf %527, %530 : vector<8x256xf32>
    %c134 = arith.constant 134 : index
    %532 = memref.load %arg2[%c134] : memref<154xf32, #tpu.memory_space<smem>>
    %533 = vector.broadcast %532 : f32 to vector<8x256xf32>
    %534 = arith.mulf %533, %523 : vector<8x256xf32>
    %c143 = arith.constant 143 : index
    %535 = memref.load %arg2[%c143] : memref<154xf32, #tpu.memory_space<smem>>
    %536 = vector.broadcast %535 : f32 to vector<8x256xf32>
    %537 = arith.mulf %536, %524 : vector<8x256xf32>
    %538 = arith.addf %534, %537 : vector<8x256xf32>
    %c0_125 = arith.constant 0 : index
    %c72_126 = arith.constant 72 : index
    %539 = vector.load %arg7[%c0_125, %c72_126] : memref<16x384xf32, #tpu.memory_space<vmem>>, vector<8x256xf32>
    %c8_127 = arith.constant 8 : index
    %c72_128 = arith.constant 72 : index
    %540 = vector.load %arg7[%c8_127, %c72_128] : memref<16x384xf32, #tpu.memory_space<vmem>>, vector<8x256xf32>
    %c117 = arith.constant 117 : index
    %541 = memref.load %arg2[%c117] : memref<154xf32, #tpu.memory_space<smem>>
    %542 = vector.broadcast %541 : f32 to vector<8x256xf32>
    %543 = arith.mulf %542, %539 : vector<8x256xf32>
    %c126_129 = arith.constant 126 : index
    %544 = memref.load %arg2[%c126_129] : memref<154xf32, #tpu.memory_space<smem>>
    %545 = vector.broadcast %544 : f32 to vector<8x256xf32>
    %546 = arith.mulf %545, %540 : vector<8x256xf32>
    %547 = arith.addf %543, %546 : vector<8x256xf32>
    %c135 = arith.constant 135 : index
    %548 = memref.load %arg2[%c135] : memref<154xf32, #tpu.memory_space<smem>>
    %549 = vector.broadcast %548 : f32 to vector<8x256xf32>
    %550 = arith.mulf %549, %539 : vector<8x256xf32>
    %c144 = arith.constant 144 : index
    %551 = memref.load %arg2[%c144] : memref<154xf32, #tpu.memory_space<smem>>
    %552 = vector.broadcast %551 : f32 to vector<8x256xf32>
    %553 = arith.mulf %552, %540 : vector<8x256xf32>
    %554 = arith.addf %550, %553 : vector<8x256xf32>
    %555 = arith.addf %531, %547 : vector<8x256xf32>
    %556 = arith.addf %538, %554 : vector<8x256xf32>
    %c0_130 = arith.constant 0 : index
    %c80_131 = arith.constant 80 : index
    %557 = vector.load %arg7[%c0_130, %c80_131] : memref<16x384xf32, #tpu.memory_space<vmem>>, vector<8x256xf32>
    %c8_132 = arith.constant 8 : index
    %c80_133 = arith.constant 80 : index
    %558 = vector.load %arg7[%c8_132, %c80_133] : memref<16x384xf32, #tpu.memory_space<vmem>>, vector<8x256xf32>
    %c118_134 = arith.constant 118 : index
    %559 = memref.load %arg2[%c118_134] : memref<154xf32, #tpu.memory_space<smem>>
    %560 = vector.broadcast %559 : f32 to vector<8x256xf32>
    %561 = arith.mulf %560, %557 : vector<8x256xf32>
    %c127_135 = arith.constant 127 : index
    %562 = memref.load %arg2[%c127_135] : memref<154xf32, #tpu.memory_space<smem>>
    %563 = vector.broadcast %562 : f32 to vector<8x256xf32>
    %564 = arith.mulf %563, %558 : vector<8x256xf32>
    %565 = arith.addf %561, %564 : vector<8x256xf32>
    %c136 = arith.constant 136 : index
    %566 = memref.load %arg2[%c136] : memref<154xf32, #tpu.memory_space<smem>>
    %567 = vector.broadcast %566 : f32 to vector<8x256xf32>
    %568 = arith.mulf %567, %557 : vector<8x256xf32>
    %c145 = arith.constant 145 : index
    %569 = memref.load %arg2[%c145] : memref<154xf32, #tpu.memory_space<smem>>
    %570 = vector.broadcast %569 : f32 to vector<8x256xf32>
    %571 = arith.mulf %570, %558 : vector<8x256xf32>
    %572 = arith.addf %568, %571 : vector<8x256xf32>
    %573 = arith.addf %555, %565 : vector<8x256xf32>
    %574 = arith.addf %556, %572 : vector<8x256xf32>
    %c0_136 = arith.constant 0 : index
    %c88_137 = arith.constant 88 : index
    %575 = vector.load %arg7[%c0_136, %c88_137] : memref<16x384xf32, #tpu.memory_space<vmem>>, vector<8x256xf32>
    %c8_138 = arith.constant 8 : index
    %c88_139 = arith.constant 88 : index
    %576 = vector.load %arg7[%c8_138, %c88_139] : memref<16x384xf32, #tpu.memory_space<vmem>>, vector<8x256xf32>
    %c119 = arith.constant 119 : index
    %577 = memref.load %arg2[%c119] : memref<154xf32, #tpu.memory_space<smem>>
    %578 = vector.broadcast %577 : f32 to vector<8x256xf32>
    %579 = arith.mulf %578, %575 : vector<8x256xf32>
    %c128_140 = arith.constant 128 : index
    %580 = memref.load %arg2[%c128_140] : memref<154xf32, #tpu.memory_space<smem>>
    %581 = vector.broadcast %580 : f32 to vector<8x256xf32>
    %582 = arith.mulf %581, %576 : vector<8x256xf32>
    %583 = arith.addf %579, %582 : vector<8x256xf32>
    %c137 = arith.constant 137 : index
    %584 = memref.load %arg2[%c137] : memref<154xf32, #tpu.memory_space<smem>>
    %585 = vector.broadcast %584 : f32 to vector<8x256xf32>
    %586 = arith.mulf %585, %575 : vector<8x256xf32>
    %c146 = arith.constant 146 : index
    %587 = memref.load %arg2[%c146] : memref<154xf32, #tpu.memory_space<smem>>
    %588 = vector.broadcast %587 : f32 to vector<8x256xf32>
    %589 = arith.mulf %588, %576 : vector<8x256xf32>
    %590 = arith.addf %586, %589 : vector<8x256xf32>
    %591 = arith.addf %573, %583 : vector<8x256xf32>
    %592 = arith.addf %574, %590 : vector<8x256xf32>
    %c0_141 = arith.constant 0 : index
    %c96_142 = arith.constant 96 : index
    %593 = vector.load %arg7[%c0_141, %c96_142] : memref<16x384xf32, #tpu.memory_space<vmem>>, vector<8x256xf32>
    %c8_143 = arith.constant 8 : index
    %c96_144 = arith.constant 96 : index
    %594 = vector.load %arg7[%c8_143, %c96_144] : memref<16x384xf32, #tpu.memory_space<vmem>>, vector<8x256xf32>
    %c120_145 = arith.constant 120 : index
    %595 = memref.load %arg2[%c120_145] : memref<154xf32, #tpu.memory_space<smem>>
    %596 = vector.broadcast %595 : f32 to vector<8x256xf32>
    %597 = arith.mulf %596, %593 : vector<8x256xf32>
    %c129 = arith.constant 129 : index
    %598 = memref.load %arg2[%c129] : memref<154xf32, #tpu.memory_space<smem>>
    %599 = vector.broadcast %598 : f32 to vector<8x256xf32>
    %600 = arith.mulf %599, %594 : vector<8x256xf32>
    %601 = arith.addf %597, %600 : vector<8x256xf32>
    %c138 = arith.constant 138 : index
    %602 = memref.load %arg2[%c138] : memref<154xf32, #tpu.memory_space<smem>>
    %603 = vector.broadcast %602 : f32 to vector<8x256xf32>
    %604 = arith.mulf %603, %593 : vector<8x256xf32>
    %c147 = arith.constant 147 : index
    %605 = memref.load %arg2[%c147] : memref<154xf32, #tpu.memory_space<smem>>
    %606 = vector.broadcast %605 : f32 to vector<8x256xf32>
    %607 = arith.mulf %606, %594 : vector<8x256xf32>
    %608 = arith.addf %604, %607 : vector<8x256xf32>
    %609 = arith.addf %591, %601 : vector<8x256xf32>
    %610 = arith.addf %592, %608 : vector<8x256xf32>
    %c0_146 = arith.constant 0 : index
    %c104_147 = arith.constant 104 : index
    %611 = vector.load %arg7[%c0_146, %c104_147] : memref<16x384xf32, #tpu.memory_space<vmem>>, vector<8x256xf32>
    %c8_148 = arith.constant 8 : index
    %c104_149 = arith.constant 104 : index
    %612 = vector.load %arg7[%c8_148, %c104_149] : memref<16x384xf32, #tpu.memory_space<vmem>>, vector<8x256xf32>
    %c121_150 = arith.constant 121 : index
    %613 = memref.load %arg2[%c121_150] : memref<154xf32, #tpu.memory_space<smem>>
    %614 = vector.broadcast %613 : f32 to vector<8x256xf32>
    %615 = arith.mulf %614, %611 : vector<8x256xf32>
    %c130 = arith.constant 130 : index
    %616 = memref.load %arg2[%c130] : memref<154xf32, #tpu.memory_space<smem>>
    %617 = vector.broadcast %616 : f32 to vector<8x256xf32>
    %618 = arith.mulf %617, %612 : vector<8x256xf32>
    %619 = arith.addf %615, %618 : vector<8x256xf32>
    %c139 = arith.constant 139 : index
    %620 = memref.load %arg2[%c139] : memref<154xf32, #tpu.memory_space<smem>>
    %621 = vector.broadcast %620 : f32 to vector<8x256xf32>
    %622 = arith.mulf %621, %611 : vector<8x256xf32>
    %c148 = arith.constant 148 : index
    %623 = memref.load %arg2[%c148] : memref<154xf32, #tpu.memory_space<smem>>
    %624 = vector.broadcast %623 : f32 to vector<8x256xf32>
    %625 = arith.mulf %624, %612 : vector<8x256xf32>
    %626 = arith.addf %622, %625 : vector<8x256xf32>
    %627 = arith.addf %609, %619 : vector<8x256xf32>
    %628 = arith.addf %610, %626 : vector<8x256xf32>
    %c0_151 = arith.constant 0 : index
    %c112_152 = arith.constant 112 : index
    %629 = vector.load %arg7[%c0_151, %c112_152] : memref<16x384xf32, #tpu.memory_space<vmem>>, vector<8x256xf32>
    %c8_153 = arith.constant 8 : index
    %c112_154 = arith.constant 112 : index
    %630 = vector.load %arg7[%c8_153, %c112_154] : memref<16x384xf32, #tpu.memory_space<vmem>>, vector<8x256xf32>
    %c122_155 = arith.constant 122 : index
    %631 = memref.load %arg2[%c122_155] : memref<154xf32, #tpu.memory_space<smem>>
    %632 = vector.broadcast %631 : f32 to vector<8x256xf32>
    %633 = arith.mulf %632, %629 : vector<8x256xf32>
    %c131 = arith.constant 131 : index
    %634 = memref.load %arg2[%c131] : memref<154xf32, #tpu.memory_space<smem>>
    %635 = vector.broadcast %634 : f32 to vector<8x256xf32>
    %636 = arith.mulf %635, %630 : vector<8x256xf32>
    %637 = arith.addf %633, %636 : vector<8x256xf32>
    %c140 = arith.constant 140 : index
    %638 = memref.load %arg2[%c140] : memref<154xf32, #tpu.memory_space<smem>>
    %639 = vector.broadcast %638 : f32 to vector<8x256xf32>
    %640 = arith.mulf %639, %629 : vector<8x256xf32>
    %c149 = arith.constant 149 : index
    %641 = memref.load %arg2[%c149] : memref<154xf32, #tpu.memory_space<smem>>
    %642 = vector.broadcast %641 : f32 to vector<8x256xf32>
    %643 = arith.mulf %642, %630 : vector<8x256xf32>
    %644 = arith.addf %640, %643 : vector<8x256xf32>
    %645 = arith.addf %627, %637 : vector<8x256xf32>
    %646 = arith.addf %628, %644 : vector<8x256xf32>
    %c0_156 = arith.constant 0 : index
    %c120_157 = arith.constant 120 : index
    %647 = vector.load %arg7[%c0_156, %c120_157] : memref<16x384xf32, #tpu.memory_space<vmem>>, vector<8x256xf32>
    %c8_158 = arith.constant 8 : index
    %c120_159 = arith.constant 120 : index
    %648 = vector.load %arg7[%c8_158, %c120_159] : memref<16x384xf32, #tpu.memory_space<vmem>>, vector<8x256xf32>
    %c123_160 = arith.constant 123 : index
    %649 = memref.load %arg2[%c123_160] : memref<154xf32, #tpu.memory_space<smem>>
    %650 = vector.broadcast %649 : f32 to vector<8x256xf32>
    %651 = arith.mulf %650, %647 : vector<8x256xf32>
    %c132 = arith.constant 132 : index
    %652 = memref.load %arg2[%c132] : memref<154xf32, #tpu.memory_space<smem>>
    %653 = vector.broadcast %652 : f32 to vector<8x256xf32>
    %654 = arith.mulf %653, %648 : vector<8x256xf32>
    %655 = arith.addf %651, %654 : vector<8x256xf32>
    %c141 = arith.constant 141 : index
    %656 = memref.load %arg2[%c141] : memref<154xf32, #tpu.memory_space<smem>>
    %657 = vector.broadcast %656 : f32 to vector<8x256xf32>
    %658 = arith.mulf %657, %647 : vector<8x256xf32>
    %c150 = arith.constant 150 : index
    %659 = memref.load %arg2[%c150] : memref<154xf32, #tpu.memory_space<smem>>
    %660 = vector.broadcast %659 : f32 to vector<8x256xf32>
    %661 = arith.mulf %660, %648 : vector<8x256xf32>
    %662 = arith.addf %658, %661 : vector<8x256xf32>
    %663 = arith.addf %645, %655 : vector<8x256xf32>
    %664 = arith.addf %646, %662 : vector<8x256xf32>
    %c0_161 = arith.constant 0 : index
    %c128_162 = arith.constant 128 : index
    %665 = vector.load %arg7[%c0_161, %c128_162] : memref<16x384xf32, #tpu.memory_space<vmem>>, vector<8x256xf32>
    %c8_163 = arith.constant 8 : index
    %c128_164 = arith.constant 128 : index
    %666 = vector.load %arg7[%c8_163, %c128_164] : memref<16x384xf32, #tpu.memory_space<vmem>>, vector<8x256xf32>
    %c124_165 = arith.constant 124 : index
    %667 = memref.load %arg2[%c124_165] : memref<154xf32, #tpu.memory_space<smem>>
    %668 = vector.broadcast %667 : f32 to vector<8x256xf32>
    %669 = arith.mulf %668, %665 : vector<8x256xf32>
    %c133 = arith.constant 133 : index
    %670 = memref.load %arg2[%c133] : memref<154xf32, #tpu.memory_space<smem>>
    %671 = vector.broadcast %670 : f32 to vector<8x256xf32>
    %672 = arith.mulf %671, %666 : vector<8x256xf32>
    %673 = arith.addf %669, %672 : vector<8x256xf32>
    %c142 = arith.constant 142 : index
    %674 = memref.load %arg2[%c142] : memref<154xf32, #tpu.memory_space<smem>>
    %675 = vector.broadcast %674 : f32 to vector<8x256xf32>
    %676 = arith.mulf %675, %665 : vector<8x256xf32>
    %c151 = arith.constant 151 : index
    %677 = memref.load %arg2[%c151] : memref<154xf32, #tpu.memory_space<smem>>
    %678 = vector.broadcast %677 : f32 to vector<8x256xf32>
    %679 = arith.mulf %678, %666 : vector<8x256xf32>
    %680 = arith.addf %676, %679 : vector<8x256xf32>
    %681 = arith.addf %663, %673 : vector<8x256xf32>
    %682 = arith.addf %664, %680 : vector<8x256xf32>
    %c152 = arith.constant 152 : index
    %683 = memref.load %arg2[%c152] : memref<154xf32, #tpu.memory_space<smem>>
    %684 = vector.broadcast %683 : f32 to vector<8x256xf32>
    %685 = arith.addf %681, %684 : vector<8x256xf32>
    %c153 = arith.constant 153 : index
    %686 = memref.load %arg2[%c153] : memref<154xf32, #tpu.memory_space<smem>>
    %687 = vector.broadcast %686 : f32 to vector<8x256xf32>
    %688 = arith.addf %682, %687 : vector<8x256xf32>
    %689 = arith.addf %685, %177 : vector<8x256xf32>
    %c0_166 = arith.constant 0 : index
    %c0_167 = arith.constant 0 : index
    %690 = vector.load %arg4[%c0_166, %c0_167] : memref<8x256xf32, #tpu.memory_space<vmem>>, vector<8x256xf32>
    tpu.vector_store %arg4[%c0_166, %c0_167], %689 {strides = array<i32>} : memref<8x256xf32, #tpu.memory_space<vmem>>, vector<8x256xf32>,
    %691 = arith.addf %688, %178 : vector<8x256xf32>
    %cst_168 = arith.constant 5.000000e-01 : f32
    %692 = vector.broadcast %cst_168 : f32 to vector<8x256xf32>
    %693 = arith.mulf %692, %691 : vector<8x256xf32>
    %694 = math.exp %693 : vector<8x256xf32>
    %c0_169 = arith.constant 0 : index
    %c0_170 = arith.constant 0 : index
    %695 = vector.load %arg5[%c0_169, %c0_170] : memref<8x256xf32, #tpu.memory_space<vmem>>, vector<8x256xf32>
    tpu.vector_store %arg5[%c0_169, %c0_170], %694 {strides = array<i32>} : memref<8x256xf32, #tpu.memory_space<vmem>>, vector<8x256xf32>,
    return
  }
  func.func @transform_0(%arg0: i32, %arg1: i32) -> i32 {
    %c0_i32 = arith.constant 0 : i32
    %c0_i32_0 = arith.constant 0 : i32
    return %c0_i32 : i32
  }
  func.func @transform_1(%arg0: i32, %arg1: i32) -> (i32, i32, i32) {
    %c0_i32 = arith.constant 0 : i32
    %c0_i32_0 = arith.constant 0 : i32
    return %arg1, %arg0, %c0_i32 : i32, i32, i32
  }
  func.func @transform_2(%arg0: i32, %arg1: i32) -> (i32, i32) {
    %c0_i32 = arith.constant 0 : i32
    return %arg0, %arg1 : i32, i32
  }
  func.func @transform_3(%arg0: i32, %arg1: i32) -> (i32, i32) {
    %c0_i32 = arith.constant 0 : i32
    return %arg0, %arg1 : i32, i32
  }
}

</mosaic_0001>

<llo_original>
// kernel: tpu_custom_call.1
$region0: #{tpu_custom_call.1}
  #allocation0 [shape = 'u32[]', space=smem, size = 0x4, offset = 0x4, fixed_abs, tag = 'smem constant byte address 0x4 - core index']
  #allocation1 [shape = 'u32[144,128]{1,0:T(1,128)}', space=vmem, size = 0x12000, scoped, tag = 'internal scratch']
  #allocation2 [shape = 'f32[8,384]{1,0:T(8,128)}', space=vmem, size = 0x3000, scoped, tag = 'scratch operand']
  #allocation3 [shape = 'f32[16,384]{1,0:T(8,128)}', space=vmem, size = 0x6000, scoped, tag = 'scratch operand']
  %s0 = inlined_call_operand.hbm [shape: f32[154], index: 0, kind: input, shape index: {}]
  %s1 = inlined_call_operand.hbm [shape: f32[1,8,256], index: 1, kind: input, shape index: {}]
  %s2 = inlined_call_operand.hbm [shape: f32[8,256], index: 2, kind: output, shape index: {0}]
  %s3 = inlined_call_operand.hbm [shape: f32[8,256], index: 3, kind: output, shape index: {1}]
  %4 = xla_tuple %s2, %s3
  %s5 = sld [smem:[#allocation0]]
  $region34: #{tpu_custom_call.1} parent=0
    _
  %s7 = ssub.s32 1, %s5
  %s8 = scalar_select 0, %s7, %s5
  $region1: #{tpu_custom_call.1} parent=0
    #allocation4 [shape = 'u8[1024]{0}', space=smem, size = 0x400, scoped, tag = 'input window, operand 0, single buffered']
    #allocation5 [shape = 's32[1]{0}', space=sflag, size = 0x4, scoped, tag = 'scoped memory for tpu_custom_call.1']
    #allocation6 [shape = 's32[1]{0}', space=sflag, size = 0x4, scoped, tag = 'scoped memory for tpu_custom_call.1']
    #allocation7 [shape = 's32[1]{0}', space=sflag, size = 0x4, scoped, tag = 'scoped memory for tpu_custom_call.1']
    #allocation8 [shape = 'u8[8192]{0}', space=vmem, size = 0x2000, scoped, tag = 'input window, operand 1, single buffered']
    #allocation9 [shape = 'u8[8192]{0}', space=vmem, size = 0x2000, scoped, tag = 'output window, operand 0, single buffered']
    #allocation10 [shape = 'u8[8192]{0}', space=vmem, size = 0x2000, scoped, tag = 'output window, operand 1, single buffered']
    #allocation11 [shape = 's32[1]{0}', space=sflag, size = 0x4, scoped, tag = 'scoped memory for tpu_custom_call.1']
    %9 = vsyncpa [#allocation7], 0
    %10 = vsyncpa [#allocation5], 0
    %11 = vsyncpa [#allocation6], 0
    %12 = vsyncpa [#allocation11], 0
    // Predicated region
    $region2: #{tpu_custom_call.1} parent=1 // pred_check
      _
    $region3: #{tpu_custom_call.1} parent=1 // pred_check_branch
      %14 = sbr.rel (0) target = $region5
    $region4: #{tpu_custom_call.1} parent=1 // pred_region
      %s16 = ssub.s32 32, 32
      %17 = vsyncadd [#allocation7], %s16
      %20 = dma.hbm_to_smem %s0, 32, [#allocation4], [#allocation7]
    $region5: #{tpu_custom_call.1} parent=1 // pred_fallthru
      _
    // Predicated region
    $region6: #{tpu_custom_call.1} parent=1 // pred_check
      _
    $region7: #{tpu_custom_call.1} parent=1 // pred_check_branch
      %22 = sbr.rel (0) target = $region9
    $region8: #{tpu_custom_call.1} parent=1 // pred_region
      %s24 = ssub.s32 256, 256
      %25 = vsyncadd [#allocation5], %s24
      %s27 = sshll.u32 [#allocation8], 4
      %s28 = int_to_ptr.vmem [resolvable:$true] %s27
      %30 = dma.hbm_to_vmem [thread:$0]  %s1, 256, %s28, [#allocation5]
    $region9: #{tpu_custom_call.1} parent=1 // pred_fallthru
      _
    // Predicated region
    $region10: #{tpu_custom_call.1} parent=1 // pred_check
      _
    $region11: #{tpu_custom_call.1} parent=1 // pred_check_branch
      %32 = sbr.rel (0) target = $region13
    $region12: #{tpu_custom_call.1} parent=1 // pred_region
      %33 = dma.done [#allocation7], 32
    $region13: #{tpu_custom_call.1} parent=1 // pred_fallthru
      _
    // Predicated region
    $region14: #{tpu_custom_call.1} parent=1 // pred_check
      _
    $region15: #{tpu_custom_call.1} parent=1 // pred_check_branch
      %35 = sbr.rel (0) target = $region17
    $region16: #{tpu_custom_call.1} parent=1 // pred_region
      %36 = dma.done [#allocation5], 256
    $region17: #{tpu_custom_call.1} parent=1 // pred_fallthru
      _
    %37 = sfence
    %38 = vst [vmem:[#allocation2] sm:$0xff] 0.0
    %39 = vst [vmem:[#allocation3] sm:$0xff] 0.0
    %40 = vst [vmem:[#allocation3 + $0x18] sm:$0xff] 0.0
    %v41 = vld [vmem:[#allocation8] sm:$0xff]
    %v42 = vld [vmem:[#allocation8 + $0x8] sm:$0xff]
    %43 = vst [vmem:[#allocation2 + $0x8] sm:$0xff] %v41
    %44 = vst [vmem:[#allocation2 + $0x10] sm:$0xff] %v42
    %v45 = vld [vmem:[#allocation2] sm:$0xff]
    %v46 = vld [vmem:[#allocation2 + $0x8] sm:$0xff]
    %v47 = vld [vmem:[#allocation2 + $0x10] sm:$0xff]
    %s48 = sld [smem:[#allocation4]]
    %v49 = vstv %s48
    %v50 = vmul.f32 %v49, %v45
    %v51 = vmul.f32 %v49, %v46
    %v52 = vmul.f32 %v49, %v47
    %s53 = sld [smem:[#allocation4 + $0x9]]
    %v54 = vstv %s53
    %v55 = vmul.f32 %v54, %v45
    %v56 = vmul.f32 %v54, %v46
    %v57 = vmul.f32 %v54, %v47
    %s58 = sld [smem:[#allocation4 + $0x1]]
    %v59 = vstv %s58
    %v60 = vmul.f32 %v59, %v45
    %v61 = vmul.f32 %v59, %v46
    %v62 = vmul.f32 %v59, %v47
    %s63 = sld [smem:[#allocation4 + $0xa]]
    %v64 = vstv %s63
    %v65 = vmul.f32 %v64, %v45
    %v66 = vmul.f32 %v64, %v46
    %v67 = vmul.f32 %v64, %v47
    %71 = vrot.lane.b32.xlu0 %v60, 127
    %v72 = vpop.permute.xlu0 %71
    %73 = vrot.lane.b32.xlu0 %v61, 127
    %v74 = vpop.permute.xlu0 %73
    %75 = vrot.lane.b32.xlu0 %v62, 127
    %v76 = vpop.permute.xlu0 %75
    %vm77 = vcmask 1039360
    %v78 = vsel %vm77, %v72, %v74
    %v79 = vsel %vm77, %v74, %v76
    %v83 = vadd.f32 %v50, %v78
    %v84 = vadd.f32 %v51, %v79
    %v85 = vadd.f32 %v52, %v76
    %89 = vrot.lane.b32.xlu0 %v65, 127
    %v90 = vpop.permute.xlu0 %89
    %91 = vrot.lane.b32.xlu0 %v66, 127
    %v92 = vpop.permute.xlu0 %91
    %93 = vrot.lane.b32.xlu0 %v67, 127
    %v94 = vpop.permute.xlu0 %93
    %v95 = vsel %vm77, %v90, %v92
    %v96 = vsel %vm77, %v92, %v94
    %v100 = vadd.f32 %v55, %v95
    %v101 = vadd.f32 %v56, %v96
    %v102 = vadd.f32 %v57, %v94
    %s103 = sld [smem:[#allocation4 + $0x2]]
    %v104 = vstv %s103
    %v105 = vmul.f32 %v104, %v45
    %v106 = vmul.f32 %v104, %v46
    %v107 = vmul.f32 %v104, %v47
    %s108 = sld [smem:[#allocation4 + $0xb]]
    %v109 = vstv %s108
    %v110 = vmul.f32 %v109, %v45
    %v111 = vmul.f32 %v109, %v46
    %v112 = vmul.f32 %v109, %v47
    %116 = vrot.lane.b32.xlu0 %v105, 126
    %v117 = vpop.permute.xlu0 %116
    %118 = vrot.lane.b32.xlu0 %v106, 126
    %v119 = vpop.permute.xlu0 %118
    %120 = vrot.lane.b32.xlu0 %v107, 126
    %v121 = vpop.permute.xlu0 %120
    %vm122 = vcmask 1031168
    %v123 = vsel %vm122, %v117, %v119
    %v124 = vsel %vm122, %v119, %v121
    %v128 = vadd.f32 %v83, %v123
    %v129 = vadd.f32 %v84, %v124
    %v130 = vadd.f32 %v85, %v121
    %134 = vrot.lane.b32.xlu0 %v110, 126
    %v135 = vpop.permute.xlu0 %134
    %136 = vrot.lane.b32.xlu0 %v111, 126
    %v137 = vpop.permute.xlu0 %136
    %138 = vrot.lane.b32.xlu0 %v112, 126
    %v139 = vpop.permute.xlu0 %138
    %v140 = vsel %vm122, %v135, %v137
    %v141 = vsel %vm122, %v137, %v139
    %v145 = vadd.f32 %v100, %v140
    %v146 = vadd.f32 %v101, %v141
    %v147 = vadd.f32 %v102, %v139
    %s148 = sld [smem:[#allocation4 + $0x3]]
    %v149 = vstv %s148
    %v150 = vmul.f32 %v149, %v45
    %v151 = vmul.f32 %v149, %v46
    %v152 = vmul.f32 %v149, %v47
    %s153 = sld [smem:[#allocation4 + $0xc]]
    %v154 = vstv %s153
    %v155 = vmul.f32 %v154, %v45
    %v156 = vmul.f32 %v154, %v46
    %v157 = vmul.f32 %v154, %v47
    %161 = vrot.lane.b32.xlu0 %v150, 125
    %v162 = vpop.permute.xlu0 %161
    %163 = vrot.lane.b32.xlu0 %v151, 125
    %v164 = vpop.permute.xlu0 %163
    %165 = vrot.lane.b32.xlu0 %v152, 125
    %v166 = vpop.permute.xlu0 %165
    %vm167 = vcmask 1022976
    %v168 = vsel %vm167, %v162, %v164
    %v169 = vsel %vm167, %v164, %v166
    %v173 = vadd.f32 %v128, %v168
    %v174 = vadd.f32 %v129, %v169
    %v175 = vadd.f32 %v130, %v166
    %179 = vrot.lane.b32.xlu0 %v155, 125
    %v180 = vpop.permute.xlu0 %179
    %181 = vrot.lane.b32.xlu0 %v156, 125
    %v182 = vpop.permute.xlu0 %181
    %183 = vrot.lane.b32.xlu0 %v157, 125
    %v184 = vpop.permute.xlu0 %183
    %v185 = vsel %vm167, %v180, %v182
    %v186 = vsel %vm167, %v182, %v184
    %v190 = vadd.f32 %v145, %v185
    %v191 = vadd.f32 %v146, %v186
    %v192 = vadd.f32 %v147, %v184
    %s193 = sld [smem:[#allocation4 + $0x4]]
    %v194 = vstv %s193
    %v195 = vmul.f32 %v194, %v45
    %v196 = vmul.f32 %v194, %v46
    %v197 = vmul.f32 %v194, %v47
    %s198 = sld [smem:[#allocation4 + $0xd]]
    %v199 = vstv %s198
    %v200 = vmul.f32 %v199, %v45
    %v201 = vmul.f32 %v199, %v46
    %v202 = vmul.f32 %v199, %v47
    %206 = vrot.lane.b32.xlu0 %v195, 124
    %v207 = vpop.permute.xlu0 %206
    %208 = vrot.lane.b32.xlu0 %v196, 124
    %v209 = vpop.permute.xlu0 %208
    %210 = vrot.lane.b32.xlu0 %v197, 124
    %v211 = vpop.permute.xlu0 %210
    %vm212 = vcmask 1014784
    %v213 = vsel %vm212, %v207, %v209
    %v214 = vsel %vm212, %v209, %v211
    %v218 = vadd.f32 %v173, %v213
    %v219 = vadd.f32 %v174, %v214
    %v220 = vadd.f32 %v175, %v211
    %224 = vrot.lane.b32.xlu0 %v200, 124
    %v225 = vpop.permute.xlu0 %224
    %226 = vrot.lane.b32.xlu0 %v201, 124
    %v227 = vpop.permute.xlu0 %226
    %228 = vrot.lane.b32.xlu0 %v202, 124
    %v229 = vpop.permute.xlu0 %228
    %v230 = vsel %vm212, %v225, %v227
    %v231 = vsel %vm212, %v227, %v229
    %v235 = vadd.f32 %v190, %v230
    %v236 = vadd.f32 %v191, %v231
    %v237 = vadd.f32 %v192, %v229
    %s238 = sld [smem:[#allocation4 + $0x5]]
    %v239 = vstv %s238
    %v240 = vmul.f32 %v239, %v45
    %v241 = vmul.f32 %v239, %v46
    %v242 = vmul.f32 %v239, %v47
    %s243 = sld [smem:[#allocation4 + $0xe]]
    %v244 = vstv %s243
    %v245 = vmul.f32 %v244, %v45
    %v246 = vmul.f32 %v244, %v46
    %v247 = vmul.f32 %v244, %v47
    %251 = vrot.lane.b32.xlu0 %v240, 123
    %v252 = vpop.permute.xlu0 %251
    %253 = vrot.lane.b32.xlu0 %v241, 123
    %v254 = vpop.permute.xlu0 %253
    %255 = vrot.lane.b32.xlu0 %v242, 123
    %v256 = vpop.permute.xlu0 %255
    %vm257 = vcmask 1006592
    %v258 = vsel %vm257, %v252, %v254
    %v259 = vsel %vm257, %v254, %v256
    %v263 = vadd.f32 %v218, %v258
    %v264 = vadd.f32 %v219, %v259
    %v265 = vadd.f32 %v220, %v256
    %269 = vrot.lane.b32.xlu0 %v245, 123
    %v270 = vpop.permute.xlu0 %269
    %271 = vrot.lane.b32.xlu0 %v246, 123
    %v272 = vpop.permute.xlu0 %271
    %273 = vrot.lane.b32.xlu0 %v247, 123
    %v274 = vpop.permute.xlu0 %273
    %v275 = vsel %vm257, %v270, %v272
    %v276 = vsel %vm257, %v272, %v274
    %v280 = vadd.f32 %v235, %v275
    %v281 = vadd.f32 %v236, %v276
    %v282 = vadd.f32 %v237, %v274
    %s283 = sld [smem:[#allocation4 + $0x6]]
    %v284 = vstv %s283
    %v285 = vmul.f32 %v284, %v45
    %v286 = vmul.f32 %v284, %v46
    %v287 = vmul.f32 %v284, %v47
    %s288 = sld [smem:[#allocation4 + $0xf]]
    %v289 = vstv %s288
    %v290 = vmul.f32 %v289, %v45
    %v291 = vmul.f32 %v289, %v46
    %v292 = vmul.f32 %v289, %v47
    %296 = vrot.lane.b32.xlu0 %v285, 122
    %v297 = vpop.permute.xlu0 %296
    %298 = vrot.lane.b32.xlu0 %v286, 122
    %v299 = vpop.permute.xlu0 %298
    %300 = vrot.lane.b32.xlu0 %v287, 122
    %v301 = vpop.permute.xlu0 %300
    %vm302 = vcmask 998400
    %v303 = vsel %vm302, %v297, %v299
    %v304 = vsel %vm302, %v299, %v301
    %v308 = vadd.f32 %v263, %v303
    %v309 = vadd.f32 %v264, %v304
    %v310 = vadd.f32 %v265, %v301
    %314 = vrot.lane.b32.xlu0 %v290, 122
    %v315 = vpop.permute.xlu0 %314
    %316 = vrot.lane.b32.xlu0 %v291, 122
    %v317 = vpop.permute.xlu0 %316
    %318 = vrot.lane.b32.xlu0 %v292, 122
    %v319 = vpop.permute.xlu0 %318
    %v320 = vsel %vm302, %v315, %v317
    %v321 = vsel %vm302, %v317, %v319
    %v325 = vadd.f32 %v280, %v320
    %v326 = vadd.f32 %v281, %v321
    %v327 = vadd.f32 %v282, %v319
    %s328 = sld [smem:[#allocation4 + $0x7]]
    %v329 = vstv %s328
    %v330 = vmul.f32 %v329, %v45
    %v331 = vmul.f32 %v329, %v46
    %v332 = vmul.f32 %v329, %v47
    %s333 = sld [smem:[#allocation4 + $0x10]]
    %v334 = vstv %s333
    %v335 = vmul.f32 %v334, %v45
    %v336 = vmul.f32 %v334, %v46
    %v337 = vmul.f32 %v334, %v47
    %341 = vrot.lane.b32.xlu0 %v330, 121
    %v342 = vpop.permute.xlu0 %341
    %343 = vrot.lane.b32.xlu0 %v331, 121
    %v344 = vpop.permute.xlu0 %343
    %345 = vrot.lane.b32.xlu0 %v332, 121
    %v346 = vpop.permute.xlu0 %345
    %vm347 = vcmask 990208
    %v348 = vsel %vm347, %v342, %v344
    %v349 = vsel %vm347, %v344, %v346
    %v353 = vadd.f32 %v308, %v348
    %v354 = vadd.f32 %v309, %v349
    %v355 = vadd.f32 %v310, %v346
    %359 = vrot.lane.b32.xlu0 %v335, 121
    %v360 = vpop.permute.xlu0 %359
    %361 = vrot.lane.b32.xlu0 %v336, 121
    %v362 = vpop.permute.xlu0 %361
    %363 = vrot.lane.b32.xlu0 %v337, 121
    %v364 = vpop.permute.xlu0 %363
    %v365 = vsel %vm347, %v360, %v362
    %v366 = vsel %vm347, %v362, %v364
    %v370 = vadd.f32 %v325, %v365
    %v371 = vadd.f32 %v326, %v366
    %v372 = vadd.f32 %v327, %v364
    %s373 = sld [smem:[#allocation4 + $0x8]]
    %v374 = vstv %s373
    %v375 = vmul.f32 %v374, %v46
    %v376 = vmul.f32 %v374, %v47
    %s377 = sld [smem:[#allocation4 + $0x11]]
    %v378 = vstv %s377
    %v379 = vmul.f32 %v378, %v46
    %v380 = vmul.f32 %v378, %v47
    %383 = vrot.lane.b32.xlu0 %v375, 120
    %v384 = vpop.permute.xlu0 %383
    %385 = vrot.lane.b32.xlu0 %v376, 120
    %v386 = vpop.permute.xlu0 %385
    %vm387 = vcmask 982016
    %v388 = vsel %vm387, %v384, %v386
    %v392 = vadd.f32 %v353, %v384
    %v393 = vadd.f32 %v354, %v388
    %v394 = vadd.f32 %v355, %v386
    %397 = vrot.lane.b32.xlu0 %v379, 120
    %v398 = vpop.permute.xlu0 %397
    %399 = vrot.lane.b32.xlu0 %v380, 120
    %v400 = vpop.permute.xlu0 %399
    %v401 = vsel %vm387, %v398, %v400
    %v405 = vadd.f32 %v370, %v398
    %v406 = vadd.f32 %v371, %v401
    %v407 = vadd.f32 %v372, %v400
    %s408 = sld [smem:[#allocation4 + $0x12]]
    %v409 = vstv %s408
    %v410 = vadd.f32 %v392, %v409
    %v411 = vadd.f32 %v393, %v409
    %v412 = vadd.f32 %v394, %v409
    %s413 = sld [smem:[#allocation4 + $0x13]]
    %v414 = vstv %s413
    %v415 = vadd.f32 %v405, %v414
    %v416 = vadd.f32 %v406, %v414
    %v417 = vadd.f32 %v407, %v414
    %s418 = sld [smem:[#allocation4 + $0x14]]
    %v419 = vstv %s418
    %v420 = vmul.f32 %v419, %v45
    %v421 = vmul.f32 %v419, %v46
    %v422 = vmul.f32 %v419, %v47
    %s423 = sld [smem:[#allocation4 + $0x1d]]
    %v424 = vstv %s423
    %v425 = vmul.f32 %v424, %v45
    %v426 = vmul.f32 %v424, %v46
    %v427 = vmul.f32 %v424, %v47
    %s428 = sld [smem:[#allocation4 + $0x15]]
    %v429 = vstv %s428
    %v430 = vmul.f32 %v429, %v45
    %v431 = vmul.f32 %v429, %v46
    %v432 = vmul.f32 %v429, %v47
    %s433 = sld [smem:[#allocation4 + $0x1e]]
    %v434 = vstv %s433
    %v435 = vmul.f32 %v434, %v45
    %v436 = vmul.f32 %v434, %v46
    %v437 = vmul.f32 %v434, %v47
    %441 = vrot.lane.b32.xlu0 %v430, 120
    %v442 = vpop.permute.xlu0 %441
    %443 = vrot.lane.b32.xlu0 %v431, 120
    %v444 = vpop.permute.xlu0 %443
    %445 = vrot.lane.b32.xlu0 %v432, 120
    %v446 = vpop.permute.xlu0 %445
    %v447 = vsel %vm387, %v442, %v444
    %v448 = vsel %vm387, %v444, %v446
    %v452 = vadd.f32 %v420, %v447
    %v453 = vadd.f32 %v421, %v448
    %v454 = vadd.f32 %v422, %v446
    %458 = vrot.lane.b32.xlu0 %v435, 120
    %v459 = vpop.permute.xlu0 %458
    %460 = vrot.lane.b32.xlu0 %v436, 120
    %v461 = vpop.permute.xlu0 %460
    %462 = vrot.lane.b32.xlu0 %v437, 120
    %v463 = vpop.permute.xlu0 %462
    %v464 = vsel %vm387, %v459, %v461
    %v465 = vsel %vm387, %v461, %v463
    %v469 = vadd.f32 %v425, %v464
    %v470 = vadd.f32 %v426, %v465
    %v471 = vadd.f32 %v427, %v463
    %s472 = sld [smem:[#allocation4 + $0x16]]
    %v473 = vstv %s472
    %v474 = vmul.f32 %v473, %v45
    %v475 = vmul.f32 %v473, %v46
    %v476 = vmul.f32 %v473, %v47
    %s477 = sld [smem:[#allocation4 + $0x1f]]
    %v478 = vstv %s477
    %v479 = vmul.f32 %v478, %v45
    %v480 = vmul.f32 %v478, %v46
    %v481 = vmul.f32 %v478, %v47
    %485 = vrot.lane.b32.xlu0 %v474, 112
    %v486 = vpop.permute.xlu0 %485
    %487 = vrot.lane.b32.xlu0 %v475, 112
    %v488 = vpop.permute.xlu0 %487
    %489 = vrot.lane.b32.xlu0 %v476, 112
    %v490 = vpop.permute.xlu0 %489
    %vm491 = vcmask 916480
    %v492 = vsel %vm491, %v486, %v488
    %v493 = vsel %vm491, %v488, %v490
    %v497 = vadd.f32 %v452, %v492
    %v498 = vadd.f32 %v453, %v493
    %v499 = vadd.f32 %v454, %v490
    %503 = vrot.lane.b32.xlu0 %v479, 112
    %v504 = vpop.permute.xlu0 %503
    %505 = vrot.lane.b32.xlu0 %v480, 112
    %v506 = vpop.permute.xlu0 %505
    %507 = vrot.lane.b32.xlu0 %v481, 112
    %v508 = vpop.permute.xlu0 %507
    %v509 = vsel %vm491, %v504, %v506
    %v510 = vsel %vm491, %v506, %v508
    %v514 = vadd.f32 %v469, %v509
    %v515 = vadd.f32 %v470, %v510
    %v516 = vadd.f32 %v471, %v508
    %s517 = sld [smem:[#allocation4 + $0x17]]
    %v518 = vstv %s517
    %v519 = vmul.f32 %v518, %v45
    %v520 = vmul.f32 %v518, %v46
    %v521 = vmul.f32 %v518, %v47
    %s522 = sld [smem:[#allocation4 + $0x20]]
    %v523 = vstv %s522
    %v524 = vmul.f32 %v523, %v45
    %v525 = vmul.f32 %v523, %v46
    %v526 = vmul.f32 %v523, %v47
    %530 = vrot.lane.b32.xlu0 %v519, 104
    %v531 = vpop.permute.xlu0 %530
    %532 = vrot.lane.b32.xlu0 %v520, 104
    %v533 = vpop.permute.xlu0 %532
    %534 = vrot.lane.b32.xlu0 %v521, 104
    %v535 = vpop.permute.xlu0 %534
    %vm536 = vcmask 850944
    %v537 = vsel %vm536, %v531, %v533
    %v538 = vsel %vm536, %v533, %v535
    %v542 = vadd.f32 %v497, %v537
    %v543 = vadd.f32 %v498, %v538
    %v544 = vadd.f32 %v499, %v535
    %548 = vrot.lane.b32.xlu0 %v524, 104
    %v549 = vpop.permute.xlu0 %548
    %550 = vrot.lane.b32.xlu0 %v525, 104
    %v551 = vpop.permute.xlu0 %550
    %552 = vrot.lane.b32.xlu0 %v526, 104
    %v553 = vpop.permute.xlu0 %552
    %v554 = vsel %vm536, %v549, %v551
    %v555 = vsel %vm536, %v551, %v553
    %v559 = vadd.f32 %v514, %v554
    %v560 = vadd.f32 %v515, %v555
    %v561 = vadd.f32 %v516, %v553
    %s562 = sld [smem:[#allocation4 + $0x18]]
    %v563 = vstv %s562
    %v564 = vmul.f32 %v563, %v45
    %v565 = vmul.f32 %v563, %v46
    %v566 = vmul.f32 %v563, %v47
    %s567 = sld [smem:[#allocation4 + $0x21]]
    %v568 = vstv %s567
    %v569 = vmul.f32 %v568, %v45
    %v570 = vmul.f32 %v568, %v46
    %v571 = vmul.f32 %v568, %v47
    %575 = vrot.lane.b32.xlu0 %v564, 96
    %v576 = vpop.permute.xlu0 %575
    %577 = vrot.lane.b32.xlu0 %v565, 96
    %v578 = vpop.permute.xlu0 %577
    %579 = vrot.lane.b32.xlu0 %v566, 96
    %v580 = vpop.permute.xlu0 %579
    %vm581 = vcmask 785408
    %v582 = vsel %vm581, %v576, %v578
    %v583 = vsel %vm581, %v578, %v580
    %v587 = vadd.f32 %v542, %v582
    %v588 = vadd.f32 %v543, %v583
    %v589 = vadd.f32 %v544, %v580
    %593 = vrot.lane.b32.xlu0 %v569, 96
    %v594 = vpop.permute.xlu0 %593
    %595 = vrot.lane.b32.xlu0 %v570, 96
    %v596 = vpop.permute.xlu0 %595
    %597 = vrot.lane.b32.xlu0 %v571, 96
    %v598 = vpop.permute.xlu0 %597
    %v599 = vsel %vm581, %v594, %v596
    %v600 = vsel %vm581, %v596, %v598
    %v604 = vadd.f32 %v559, %v599
    %v605 = vadd.f32 %v560, %v600
    %v606 = vadd.f32 %v561, %v598
    %s607 = sld [smem:[#allocation4 + $0x19]]
    %v608 = vstv %s607
    %v609 = vmul.f32 %v608, %v45
    %v610 = vmul.f32 %v608, %v46
    %v611 = vmul.f32 %v608, %v47
    %s612 = sld [smem:[#allocation4 + $0x22]]
    %v613 = vstv %s612
    %v614 = vmul.f32 %v613, %v45
    %v615 = vmul.f32 %v613, %v46
    %v616 = vmul.f32 %v613, %v47
    %620 = vrot.lane.b32.xlu0 %v609, 88
    %v621 = vpop.permute.xlu0 %620
    %622 = vrot.lane.b32.xlu0 %v610, 88
    %v623 = vpop.permute.xlu0 %622
    %624 = vrot.lane.b32.xlu0 %v611, 88
    %v625 = vpop.permute.xlu0 %624
    %vm626 = vcmask 719872
    %v627 = vsel %vm626, %v621, %v623
    %v628 = vsel %vm626, %v623, %v625
    %v632 = vadd.f32 %v587, %v627
    %v633 = vadd.f32 %v588, %v628
    %v634 = vadd.f32 %v589, %v625
    %638 = vrot.lane.b32.xlu0 %v614, 88
    %v639 = vpop.permute.xlu0 %638
    %640 = vrot.lane.b32.xlu0 %v615, 88
    %v641 = vpop.permute.xlu0 %640
    %642 = vrot.lane.b32.xlu0 %v616, 88
    %v643 = vpop.permute.xlu0 %642
    %v644 = vsel %vm626, %v639, %v641
    %v645 = vsel %vm626, %v641, %v643
    %v649 = vadd.f32 %v604, %v644
    %v650 = vadd.f32 %v605, %v645
    %v651 = vadd.f32 %v606, %v643
    %s652 = sld [smem:[#allocation4 + $0x1a]]
    %v653 = vstv %s652
    %v654 = vmul.f32 %v653, %v45
    %v655 = vmul.f32 %v653, %v46
    %v656 = vmul.f32 %v653, %v47
    %s657 = sld [smem:[#allocation4 + $0x23]]
    %v658 = vstv %s657
    %v659 = vmul.f32 %v658, %v45
    %v660 = vmul.f32 %v658, %v46
    %v661 = vmul.f32 %v658, %v47
    %665 = vrot.lane.b32.xlu0 %v654, 80
    %v666 = vpop.permute.xlu0 %665
    %667 = vrot.lane.b32.xlu0 %v655, 80
    %v668 = vpop.permute.xlu0 %667
    %669 = vrot.lane.b32.xlu0 %v656, 80
    %v670 = vpop.permute.xlu0 %669
    %vm671 = vcmask 654336
    %v672 = vsel %vm671, %v666, %v668
    %v673 = vsel %vm671, %v668, %v670
    %v677 = vadd.f32 %v632, %v672
    %v678 = vadd.f32 %v633, %v673
    %v679 = vadd.f32 %v634, %v670
    %683 = vrot.lane.b32.xlu0 %v659, 80
    %v684 = vpop.permute.xlu0 %683
    %685 = vrot.lane.b32.xlu0 %v660, 80
    %v686 = vpop.permute.xlu0 %685
    %687 = vrot.lane.b32.xlu0 %v661, 80
    %v688 = vpop.permute.xlu0 %687
    %v689 = vsel %vm671, %v684, %v686
    %v690 = vsel %vm671, %v686, %v688
    %v694 = vadd.f32 %v649, %v689
    %v695 = vadd.f32 %v650, %v690
    %v696 = vadd.f32 %v651, %v688
    %s697 = sld [smem:[#allocation4 + $0x1b]]
    %v698 = vstv %s697
    %v699 = vmul.f32 %v698, %v45
    %v700 = vmul.f32 %v698, %v46
    %v701 = vmul.f32 %v698, %v47
    %s702 = sld [smem:[#allocation4 + $0x24]]
    %v703 = vstv %s702
    %v704 = vmul.f32 %v703, %v45
    %v705 = vmul.f32 %v703, %v46
    %v706 = vmul.f32 %v703, %v47
    %710 = vrot.lane.b32.xlu0 %v699, 72
    %v711 = vpop.permute.xlu0 %710
    %712 = vrot.lane.b32.xlu0 %v700, 72
    %v713 = vpop.permute.xlu0 %712
    %714 = vrot.lane.b32.xlu0 %v701, 72
    %v715 = vpop.permute.xlu0 %714
    %vm716 = vcmask 588800
    %v717 = vsel %vm716, %v711, %v713
    %v718 = vsel %vm716, %v713, %v715
    %v722 = vadd.f32 %v677, %v717
    %v723 = vadd.f32 %v678, %v718
    %v724 = vadd.f32 %v679, %v715
    %728 = vrot.lane.b32.xlu0 %v704, 72
    %v729 = vpop.permute.xlu0 %728
    %730 = vrot.lane.b32.xlu0 %v705, 72
    %v731 = vpop.permute.xlu0 %730
    %732 = vrot.lane.b32.xlu0 %v706, 72
    %v733 = vpop.permute.xlu0 %732
    %v734 = vsel %vm716, %v729, %v731
    %v735 = vsel %vm716, %v731, %v733
    %v739 = vadd.f32 %v694, %v734
    %v740 = vadd.f32 %v695, %v735
    %v741 = vadd.f32 %v696, %v733
    %s742 = sld [smem:[#allocation4 + $0x1c]]
    %v743 = vstv %s742
    %v744 = vmul.f32 %v743, %v46
    %v745 = vmul.f32 %v743, %v47
    %s746 = sld [smem:[#allocation4 + $0x25]]
    %v747 = vstv %s746
    %v748 = vmul.f32 %v747, %v46
    %v749 = vmul.f32 %v747, %v47
    %752 = vrot.lane.b32.xlu0 %v744, 64
    %v753 = vpop.permute.xlu0 %752
    %754 = vrot.lane.b32.xlu0 %v745, 64
    %v755 = vpop.permute.xlu0 %754
    %vm756 = vcmask 523264
    %v757 = vsel %vm756, %v753, %v755
    %v761 = vadd.f32 %v722, %v753
    %v762 = vadd.f32 %v723, %v757
    %v763 = vadd.f32 %v724, %v755
    %766 = vrot.lane.b32.xlu0 %v748, 64
    %v767 = vpop.permute.xlu0 %766
    %768 = vrot.lane.b32.xlu0 %v749, 64
    %v769 = vpop.permute.xlu0 %768
    %v770 = vsel %vm756, %v767, %v769
    %v774 = vadd.f32 %v739, %v767
    %v775 = vadd.f32 %v740, %v770
    %v776 = vadd.f32 %v741, %v769
    %s777 = sld [smem:[#allocation4 + $0x26]]
    %v778 = vstv %s777
    %v779 = vadd.f32 %v761, %v778
    %v780 = vadd.f32 %v762, %v778
    %v781 = vadd.f32 %v763, %v778
    %s782 = sld [smem:[#allocation4 + $0x27]]
    %v783 = vstv %s782
    %v784 = vadd.f32 %v774, %v783
    %v785 = vadd.f32 %v775, %v783
    %v786 = vadd.f32 %v776, %v783
    %790 = vrot.lane.b32.xlu0 %v779, 56
    %v791 = vpop.permute.xlu0 %790
    %792 = vrot.lane.b32.xlu0 %v780, 56
    %v793 = vpop.permute.xlu0 %792
    %794 = vrot.lane.b32.xlu0 %v781, 56
    %v795 = vpop.permute.xlu0 %794
    %vm796 = vcmask 457728
    %v797 = vsel %vm796, %v791, %v793
    %v798 = vsel %vm796, %v793, %v795
    %v802 = vadd.f32 %v410, %v791
    %v803 = vadd.f32 %v411, %v797
    %v804 = vadd.f32 %v412, %v798
    %808 = vrot.lane.b32.xlu0 %v784, 56
    %v809 = vpop.permute.xlu0 %808
    %810 = vrot.lane.b32.xlu0 %v785, 56
    %v811 = vpop.permute.xlu0 %810
    %812 = vrot.lane.b32.xlu0 %v786, 56
    %v813 = vpop.permute.xlu0 %812
    %v814 = vsel %vm796, %v809, %v811
    %v815 = vsel %vm796, %v811, %v813
    %v819 = vadd.f32 %v415, %v809
    %v820 = vadd.f32 %v416, %v814
    %v821 = vadd.f32 %v417, %v815
    %v822 = vtanh.pop %v410
    %v823 = vtanh.pop %v411
    %v824 = vtanh.pop %v412
    %v825 = vtanh.pop %v415
    %v826 = vtanh.pop %v416
    %v827 = vtanh.pop %v417
    %831 = vrot.lane.b32.xlu0 %v822, 8
    %v832 = vpop.permute.xlu0 %831
    %833 = vrot.lane.b32.xlu0 %v823, 8
    %v834 = vpop.permute.xlu0 %833
    %835 = vrot.lane.b32.xlu0 %v824, 8
    %v836 = vpop.permute.xlu0 %835
    %vm837 = vcmask 64512
    %v838 = vsel %vm837, %v832, %v834
    %v839 = vsel %vm837, %v834, %v836
    %842 = vst [vmem:[#allocation3 + $0x8] sm:$0xff] %v838
    %843 = vst [vmem:[#allocation3 + $0x10] sm:$0xff] %v839
    %847 = vrot.lane.b32.xlu0 %v825, 8
    %v848 = vpop.permute.xlu0 %847
    %849 = vrot.lane.b32.xlu0 %v826, 8
    %v850 = vpop.permute.xlu0 %849
    %851 = vrot.lane.b32.xlu0 %v827, 8
    %v852 = vpop.permute.xlu0 %851
    %v853 = vsel %vm837, %v848, %v850
    %v854 = vsel %vm837, %v850, %v852
    %857 = vst [vmem:[#allocation3 + $0x20] sm:$0xff] %v853
    %858 = vst [vmem:[#allocation3 + $0x28] sm:$0xff] %v854
    %v859 = vld [vmem:[#allocation3] sm:$0xff]
    %v860 = vld [vmem:[#allocation3 + $0x8] sm:$0xff]
    %v861 = vld [vmem:[#allocation3 + $0x10] sm:$0xff]
    %v862 = vld [vmem:[#allocation3 + $0x18] sm:$0xff]
    %v863 = vld [vmem:[#allocation3 + $0x20] sm:$0xff]
    %v864 = vld [vmem:[#allocation3 + $0x28] sm:$0xff]
    %s865 = sld [smem:[#allocation4 + $0x28]]
    %v866 = vstv %s865
    %v867 = vmul.f32 %v866, %v859
    %v868 = vmul.f32 %v866, %v860
    %v869 = vmul.f32 %v866, %v861
    %s870 = sld [smem:[#allocation4 + $0x31]]
    %v871 = vstv %s870
    %v872 = vmul.f32 %v871, %v862
    %v873 = vmul.f32 %v871, %v863
    %v874 = vmul.f32 %v871, %v864
    %v875 = vadd.f32 %v867, %v872
    %v876 = vadd.f32 %v868, %v873
    %v877 = vadd.f32 %v869, %v874
    %s878 = sld [smem:[#allocation4 + $0x3a]]
    %v879 = vstv %s878
    %v880 = vmul.f32 %v879, %v859
    %v881 = vmul.f32 %v879, %v860
    %v882 = vmul.f32 %v879, %v861
    %s883 = sld [smem:[#allocation4 + $0x43]]
    %v884 = vstv %s883
    %v885 = vmul.f32 %v884, %v862
    %v886 = vmul.f32 %v884, %v863
    %v887 = vmul.f32 %v884, %v864
    %v888 = vadd.f32 %v880, %v885
    %v889 = vadd.f32 %v881, %v886
    %v890 = vadd.f32 %v882, %v887
    %s891 = sld [smem:[#allocation4 + $0x29]]
    %v892 = vstv %s891
    %v893 = vmul.f32 %v892, %v859
    %v894 = vmul.f32 %v892, %v860
    %v895 = vmul.f32 %v892, %v861
    %s896 = sld [smem:[#allocation4 + $0x32]]
    %v897 = vstv %s896
    %v898 = vmul.f32 %v897, %v862
    %v899 = vmul.f32 %v897, %v863
    %v900 = vmul.f32 %v897, %v864
    %v901 = vadd.f32 %v893, %v898
    %v902 = vadd.f32 %v894, %v899
    %v903 = vadd.f32 %v895, %v900
    %s904 = sld [smem:[#allocation4 + $0x3b]]
    %v905 = vstv %s904
    %v906 = vmul.f32 %v905, %v859
    %v907 = vmul.f32 %v905, %v860
    %v908 = vmul.f32 %v905, %v861
    %s909 = sld [smem:[#allocation4 + $0x44]]
    %v910 = vstv %s909
    %v911 = vmul.f32 %v910, %v862
    %v912 = vmul.f32 %v910, %v863
    %v913 = vmul.f32 %v910, %v864
    %v914 = vadd.f32 %v906, %v911
    %v915 = vadd.f32 %v907, %v912
    %v916 = vadd.f32 %v908, %v913
    %920 = vrot.lane.b32.xlu0 %v901, 126
    %v921 = vpop.permute.xlu0 %920
    %922 = vrot.lane.b32.xlu0 %v902, 126
    %v923 = vpop.permute.xlu0 %922
    %924 = vrot.lane.b32.xlu0 %v903, 126
    %v925 = vpop.permute.xlu0 %924
    %v926 = vsel %vm122, %v921, %v923
    %v927 = vsel %vm122, %v923, %v925
    %v931 = vadd.f32 %v875, %v926
    %v932 = vadd.f32 %v876, %v927
    %v933 = vadd.f32 %v877, %v925
    %937 = vrot.lane.b32.xlu0 %v914, 126
    %v938 = vpop.permute.xlu0 %937
    %939 = vrot.lane.b32.xlu0 %v915, 126
    %v940 = vpop.permute.xlu0 %939
    %941 = vrot.lane.b32.xlu0 %v916, 126
    %v942 = vpop.permute.xlu0 %941
    %v943 = vsel %vm122, %v938, %v940
    %v944 = vsel %vm122, %v940, %v942
    %v948 = vadd.f32 %v888, %v943
    %v949 = vadd.f32 %v889, %v944
    %v950 = vadd.f32 %v890, %v942
    %s951 = sld [smem:[#allocation4 + $0x2a]]
    %v952 = vstv %s951
    %v953 = vmul.f32 %v952, %v859
    %v954 = vmul.f32 %v952, %v860
    %v955 = vmul.f32 %v952, %v861
    %s956 = sld [smem:[#allocation4 + $0x33]]
    %v957 = vstv %s956
    %v958 = vmul.f32 %v957, %v862
    %v959 = vmul.f32 %v957, %v863
    %v960 = vmul.f32 %v957, %v864
    %v961 = vadd.f32 %v953, %v958
    %v962 = vadd.f32 %v954, %v959
    %v963 = vadd.f32 %v955, %v960
    %s964 = sld [smem:[#allocation4 + $0x3c]]
    %v965 = vstv %s964
    %v966 = vmul.f32 %v965, %v859
    %v967 = vmul.f32 %v965, %v860
    %v968 = vmul.f32 %v965, %v861
    %s969 = sld [smem:[#allocation4 + $0x45]]
    %v970 = vstv %s969
    %v971 = vmul.f32 %v970, %v862
    %v972 = vmul.f32 %v970, %v863
    %v973 = vmul.f32 %v970, %v864
    %v974 = vadd.f32 %v966, %v971
    %v975 = vadd.f32 %v967, %v972
    %v976 = vadd.f32 %v968, %v973
    %980 = vrot.lane.b32.xlu0 %v961, 124
    %v981 = vpop.permute.xlu0 %980
    %982 = vrot.lane.b32.xlu0 %v962, 124
    %v983 = vpop.permute.xlu0 %982
    %984 = vrot.lane.b32.xlu0 %v963, 124
    %v985 = vpop.permute.xlu0 %984
    %v986 = vsel %vm212, %v981, %v983
    %v987 = vsel %vm212, %v983, %v985
    %v991 = vadd.f32 %v931, %v986
    %v992 = vadd.f32 %v932, %v987
    %v993 = vadd.f32 %v933, %v985
    %997 = vrot.lane.b32.xlu0 %v974, 124
    %v998 = vpop.permute.xlu0 %997
    %999 = vrot.lane.b32.xlu0 %v975, 124
    %v1000 = vpop.permute.xlu0 %999
    %1001 = vrot.lane.b32.xlu0 %v976, 124
    %v1002 = vpop.permute.xlu0 %1001
    %v1003 = vsel %vm212, %v998, %v1000
    %v1004 = vsel %vm212, %v1000, %v1002
    %v1008 = vadd.f32 %v948, %v1003
    %v1009 = vadd.f32 %v949, %v1004
    %v1010 = vadd.f32 %v950, %v1002
    %s1011 = sld [smem:[#allocation4 + $0x2b]]
    %v1012 = vstv %s1011
    %v1013 = vmul.f32 %v1012, %v859
    %v1014 = vmul.f32 %v1012, %v860
    %v1015 = vmul.f32 %v1012, %v861
    %s1016 = sld [smem:[#allocation4 + $0x34]]
    %v1017 = vstv %s1016
    %v1018 = vmul.f32 %v1017, %v862
    %v1019 = vmul.f32 %v1017, %v863
    %v1020 = vmul.f32 %v1017, %v864
    %v1021 = vadd.f32 %v1013, %v1018
    %v1022 = vadd.f32 %v1014, %v1019
    %v1023 = vadd.f32 %v1015, %v1020
    %s1024 = sld [smem:[#allocation4 + $0x3d]]
    %v1025 = vstv %s1024
    %v1026 = vmul.f32 %v1025, %v859
    %v1027 = vmul.f32 %v1025, %v860
    %v1028 = vmul.f32 %v1025, %v861
    %s1029 = sld [smem:[#allocation4 + $0x46]]
    %v1030 = vstv %s1029
    %v1031 = vmul.f32 %v1030, %v862
    %v1032 = vmul.f32 %v1030, %v863
    %v1033 = vmul.f32 %v1030, %v864
    %v1034 = vadd.f32 %v1026, %v1031
    %v1035 = vadd.f32 %v1027, %v1032
    %v1036 = vadd.f32 %v1028, %v1033
    %1040 = vrot.lane.b32.xlu0 %v1021, 122
    %v1041 = vpop.permute.xlu0 %1040
    %1042 = vrot.lane.b32.xlu0 %v1022, 122
    %v1043 = vpop.permute.xlu0 %1042
    %1044 = vrot.lane.b32.xlu0 %v1023, 122
    %v1045 = vpop.permute.xlu0 %1044
    %v1046 = vsel %vm302, %v1041, %v1043
    %v1047 = vsel %vm302, %v1043, %v1045
    %v1051 = vadd.f32 %v991, %v1046
    %v1052 = vadd.f32 %v992, %v1047
    %v1053 = vadd.f32 %v993, %v1045
    %1057 = vrot.lane.b32.xlu0 %v1034, 122
    %v1058 = vpop.permute.xlu0 %1057
    %1059 = vrot.lane.b32.xlu0 %v1035, 122
    %v1060 = vpop.permute.xlu0 %1059
    %1061 = vrot.lane.b32.xlu0 %v1036, 122
    %v1062 = vpop.permute.xlu0 %1061
    %v1063 = vsel %vm302, %v1058, %v1060
    %v1064 = vsel %vm302, %v1060, %v1062
    %v1068 = vadd.f32 %v1008, %v1063
    %v1069 = vadd.f32 %v1009, %v1064
    %v1070 = vadd.f32 %v1010, %v1062
    %s1071 = sld [smem:[#allocation4 + $0x2c]]
    %v1072 = vstv %s1071
    %v1073 = vmul.f32 %v1072, %v859
    %v1074 = vmul.f32 %v1072, %v860
    %v1075 = vmul.f32 %v1072, %v861
    %s1076 = sld [smem:[#allocation4 + $0x35]]
    %v1077 = vstv %s1076
    %v1078 = vmul.f32 %v1077, %v862
    %v1079 = vmul.f32 %v1077, %v863
    %v1080 = vmul.f32 %v1077, %v864
    %v1081 = vadd.f32 %v1073, %v1078
    %v1082 = vadd.f32 %v1074, %v1079
    %v1083 = vadd.f32 %v1075, %v1080
    %s1084 = sld [smem:[#allocation4 + $0x3e]]
    %v1085 = vstv %s1084
    %v1086 = vmul.f32 %v1085, %v859
    %v1087 = vmul.f32 %v1085, %v860
    %v1088 = vmul.f32 %v1085, %v861
    %s1089 = sld [smem:[#allocation4 + $0x47]]
    %v1090 = vstv %s1089
    %v1091 = vmul.f32 %v1090, %v862
    %v1092 = vmul.f32 %v1090, %v863
    %v1093 = vmul.f32 %v1090, %v864
    %v1094 = vadd.f32 %v1086, %v1091
    %v1095 = vadd.f32 %v1087, %v1092
    %v1096 = vadd.f32 %v1088, %v1093
    %1100 = vrot.lane.b32.xlu0 %v1081, 120
    %v1101 = vpop.permute.xlu0 %1100
    %1102 = vrot.lane.b32.xlu0 %v1082, 120
    %v1103 = vpop.permute.xlu0 %1102
    %1104 = vrot.lane.b32.xlu0 %v1083, 120
    %v1105 = vpop.permute.xlu0 %1104
    %v1106 = vsel %vm387, %v1101, %v1103
    %v1107 = vsel %vm387, %v1103, %v1105
    %v1111 = vadd.f32 %v1051, %v1106
    %v1112 = vadd.f32 %v1052, %v1107
    %v1113 = vadd.f32 %v1053, %v1105
    %1117 = vrot.lane.b32.xlu0 %v1094, 120
    %v1118 = vpop.permute.xlu0 %1117
    %1119 = vrot.lane.b32.xlu0 %v1095, 120
    %v1120 = vpop.permute.xlu0 %1119
    %1121 = vrot.lane.b32.xlu0 %v1096, 120
    %v1122 = vpop.permute.xlu0 %1121
    %v1123 = vsel %vm387, %v1118, %v1120
    %v1124 = vsel %vm387, %v1120, %v1122
    %v1128 = vadd.f32 %v1068, %v1123
    %v1129 = vadd.f32 %v1069, %v1124
    %v1130 = vadd.f32 %v1070, %v1122
    %s1131 = sld [smem:[#allocation4 + $0x2d]]
    %v1132 = vstv %s1131
    %v1133 = vmul.f32 %v1132, %v859
    %v1134 = vmul.f32 %v1132, %v860
    %v1135 = vmul.f32 %v1132, %v861
    %s1136 = sld [smem:[#allocation4 + $0x36]]
    %v1137 = vstv %s1136
    %v1138 = vmul.f32 %v1137, %v862
    %v1139 = vmul.f32 %v1137, %v863
    %v1140 = vmul.f32 %v1137, %v864
    %v1141 = vadd.f32 %v1133, %v1138
    %v1142 = vadd.f32 %v1134, %v1139
    %v1143 = vadd.f32 %v1135, %v1140
    %s1144 = sld [smem:[#allocation4 + $0x3f]]
    %v1145 = vstv %s1144
    %v1146 = vmul.f32 %v1145, %v859
    %v1147 = vmul.f32 %v1145, %v860
    %v1148 = vmul.f32 %v1145, %v861
    %s1149 = sld [smem:[#allocation4 + $0x48]]
    %v1150 = vstv %s1149
    %v1151 = vmul.f32 %v1150, %v862
    %v1152 = vmul.f32 %v1150, %v863
    %v1153 = vmul.f32 %v1150, %v864
    %v1154 = vadd.f32 %v1146, %v1151
    %v1155 = vadd.f32 %v1147, %v1152
    %v1156 = vadd.f32 %v1148, %v1153
    %1160 = vrot.lane.b32.xlu0 %v1141, 118
    %v1161 = vpop.permute.xlu0 %1160
    %1162 = vrot.lane.b32.xlu0 %v1142, 118
    %v1163 = vpop.permute.xlu0 %1162
    %1164 = vrot.lane.b32.xlu0 %v1143, 118
    %v1165 = vpop.permute.xlu0 %1164
    %vm1166 = vcmask 965632
    %v1167 = vsel %vm1166, %v1161, %v1163
    %v1168 = vsel %vm1166, %v1163, %v1165
    %v1172 = vadd.f32 %v1111, %v1167
    %v1173 = vadd.f32 %v1112, %v1168
    %v1174 = vadd.f32 %v1113, %v1165
    %1178 = vrot.lane.b32.xlu0 %v1154, 118
    %v1179 = vpop.permute.xlu0 %1178
    %1180 = vrot.lane.b32.xlu0 %v1155, 118
    %v1181 = vpop.permute.xlu0 %1180
    %1182 = vrot.lane.b32.xlu0 %v1156, 118
    %v1183 = vpop.permute.xlu0 %1182
    %v1184 = vsel %vm1166, %v1179, %v1181
    %v1185 = vsel %vm1166, %v1181, %v1183
    %v1189 = vadd.f32 %v1128, %v1184
    %v1190 = vadd.f32 %v1129, %v1185
    %v1191 = vadd.f32 %v1130, %v1183
    %s1192 = sld [smem:[#allocation4 + $0x2e]]
    %v1193 = vstv %s1192
    %v1194 = vmul.f32 %v1193, %v859
    %v1195 = vmul.f32 %v1193, %v860
    %v1196 = vmul.f32 %v1193, %v861
    %s1197 = sld [smem:[#allocation4 + $0x37]]
    %v1198 = vstv %s1197
    %v1199 = vmul.f32 %v1198, %v862
    %v1200 = vmul.f32 %v1198, %v863
    %v1201 = vmul.f32 %v1198, %v864
    %v1202 = vadd.f32 %v1194, %v1199
    %v1203 = vadd.f32 %v1195, %v1200
    %v1204 = vadd.f32 %v1196, %v1201
    %s1205 = sld [smem:[#allocation4 + $0x40]]
    %v1206 = vstv %s1205
    %v1207 = vmul.f32 %v1206, %v859
    %v1208 = vmul.f32 %v1206, %v860
    %v1209 = vmul.f32 %v1206, %v861
    %s1210 = sld [smem:[#allocation4 + $0x49]]
    %v1211 = vstv %s1210
    %v1212 = vmul.f32 %v1211, %v862
    %v1213 = vmul.f32 %v1211, %v863
    %v1214 = vmul.f32 %v1211, %v864
    %v1215 = vadd.f32 %v1207, %v1212
    %v1216 = vadd.f32 %v1208, %v1213
    %v1217 = vadd.f32 %v1209, %v1214
    %1221 = vrot.lane.b32.xlu0 %v1202, 116
    %v1222 = vpop.permute.xlu0 %1221
    %1223 = vrot.lane.b32.xlu0 %v1203, 116
    %v1224 = vpop.permute.xlu0 %1223
    %1225 = vrot.lane.b32.xlu0 %v1204, 116
    %v1226 = vpop.permute.xlu0 %1225
    %vm1227 = vcmask 949248
    %v1228 = vsel %vm1227, %v1222, %v1224
    %v1229 = vsel %vm1227, %v1224, %v1226
    %v1233 = vadd.f32 %v1172, %v1228
    %v1234 = vadd.f32 %v1173, %v1229
    %v1235 = vadd.f32 %v1174, %v1226
    %1239 = vrot.lane.b32.xlu0 %v1215, 116
    %v1240 = vpop.permute.xlu0 %1239
    %1241 = vrot.lane.b32.xlu0 %v1216, 116
    %v1242 = vpop.permute.xlu0 %1241
    %1243 = vrot.lane.b32.xlu0 %v1217, 116
    %v1244 = vpop.permute.xlu0 %1243
    %v1245 = vsel %vm1227, %v1240, %v1242
    %v1246 = vsel %vm1227, %v1242, %v1244
    %v1250 = vadd.f32 %v1189, %v1245
    %v1251 = vadd.f32 %v1190, %v1246
    %v1252 = vadd.f32 %v1191, %v1244
    %s1253 = sld [smem:[#allocation4 + $0x2f]]
    %v1254 = vstv %s1253
    %v1255 = vmul.f32 %v1254, %v859
    %v1256 = vmul.f32 %v1254, %v860
    %v1257 = vmul.f32 %v1254, %v861
    %s1258 = sld [smem:[#allocation4 + $0x38]]
    %v1259 = vstv %s1258
    %v1260 = vmul.f32 %v1259, %v862
    %v1261 = vmul.f32 %v1259, %v863
    %v1262 = vmul.f32 %v1259, %v864
    %v1263 = vadd.f32 %v1255, %v1260
    %v1264 = vadd.f32 %v1256, %v1261
    %v1265 = vadd.f32 %v1257, %v1262
    %s1266 = sld [smem:[#allocation4 + $0x41]]
    %v1267 = vstv %s1266
    %v1268 = vmul.f32 %v1267, %v859
    %v1269 = vmul.f32 %v1267, %v860
    %v1270 = vmul.f32 %v1267, %v861
    %s1271 = sld [smem:[#allocation4 + $0x4a]]
    %v1272 = vstv %s1271
    %v1273 = vmul.f32 %v1272, %v862
    %v1274 = vmul.f32 %v1272, %v863
    %v1275 = vmul.f32 %v1272, %v864
    %v1276 = vadd.f32 %v1268, %v1273
    %v1277 = vadd.f32 %v1269, %v1274
    %v1278 = vadd.f32 %v1270, %v1275
    %1282 = vrot.lane.b32.xlu0 %v1263, 114
    %v1283 = vpop.permute.xlu0 %1282
    %1284 = vrot.lane.b32.xlu0 %v1264, 114
    %v1285 = vpop.permute.xlu0 %1284
    %1286 = vrot.lane.b32.xlu0 %v1265, 114
    %v1287 = vpop.permute.xlu0 %1286
    %vm1288 = vcmask 932864
    %v1289 = vsel %vm1288, %v1283, %v1285
    %v1290 = vsel %vm1288, %v1285, %v1287
    %v1294 = vadd.f32 %v1233, %v1289
    %v1295 = vadd.f32 %v1234, %v1290
    %v1296 = vadd.f32 %v1235, %v1287
    %1300 = vrot.lane.b32.xlu0 %v1276, 114
    %v1301 = vpop.permute.xlu0 %1300
    %1302 = vrot.lane.b32.xlu0 %v1277, 114
    %v1303 = vpop.permute.xlu0 %1302
    %1304 = vrot.lane.b32.xlu0 %v1278, 114
    %v1305 = vpop.permute.xlu0 %1304
    %v1306 = vsel %vm1288, %v1301, %v1303
    %v1307 = vsel %vm1288, %v1303, %v1305
    %v1311 = vadd.f32 %v1250, %v1306
    %v1312 = vadd.f32 %v1251, %v1307
    %v1313 = vadd.f32 %v1252, %v1305
    %s1314 = sld [smem:[#allocation4 + $0x30]]
    %v1315 = vstv %s1314
    %v1316 = vmul.f32 %v1315, %v860
    %v1317 = vmul.f32 %v1315, %v861
    %s1318 = sld [smem:[#allocation4 + $0x39]]
    %v1319 = vstv %s1318
    %v1320 = vmul.f32 %v1319, %v863
    %v1321 = vmul.f32 %v1319, %v864
    %v1322 = vadd.f32 %v1316, %v1320
    %v1323 = vadd.f32 %v1317, %v1321
    %s1324 = sld [smem:[#allocation4 + $0x42]]
    %v1325 = vstv %s1324
    %v1326 = vmul.f32 %v1325, %v860
    %v1327 = vmul.f32 %v1325, %v861
    %s1328 = sld [smem:[#allocation4 + $0x4b]]
    %v1329 = vstv %s1328
    %v1330 = vmul.f32 %v1329, %v863
    %v1331 = vmul.f32 %v1329, %v864
    %v1332 = vadd.f32 %v1326, %v1330
    %v1333 = vadd.f32 %v1327, %v1331
    %1336 = vrot.lane.b32.xlu0 %v1322, 112
    %v1337 = vpop.permute.xlu0 %1336
    %1338 = vrot.lane.b32.xlu0 %v1323, 112
    %v1339 = vpop.permute.xlu0 %1338
    %v1340 = vsel %vm491, %v1337, %v1339
    %v1344 = vadd.f32 %v1294, %v1337
    %v1345 = vadd.f32 %v1295, %v1340
    %v1346 = vadd.f32 %v1296, %v1339
    %1349 = vrot.lane.b32.xlu0 %v1332, 112
    %v1350 = vpop.permute.xlu0 %1349
    %1351 = vrot.lane.b32.xlu0 %v1333, 112
    %v1352 = vpop.permute.xlu0 %1351
    %v1353 = vsel %vm491, %v1350, %v1352
    %v1357 = vadd.f32 %v1311, %v1350
    %v1358 = vadd.f32 %v1312, %v1353
    %v1359 = vadd.f32 %v1313, %v1352
    %s1360 = sld [smem:[#allocation4 + $0x4c]]
    %v1361 = vstv %s1360
    %v1362 = vadd.f32 %v1344, %v1361
    %v1363 = vadd.f32 %v1345, %v1361
    %v1364 = vadd.f32 %v1346, %v1361
    %s1365 = sld [smem:[#allocation4 + $0x4d]]
    %v1366 = vstv %s1365
    %v1367 = vadd.f32 %v1357, %v1366
    %v1368 = vadd.f32 %v1358, %v1366
    %v1369 = vadd.f32 %v1359, %v1366
    %v1370 = vtanh.pop %v1362
    %v1371 = vtanh.pop %v1363
    %v1372 = vtanh.pop %v1364
    %v1373 = vtanh.pop %v1367
    %v1374 = vtanh.pop %v1368
    %v1375 = vtanh.pop %v1369
    %1379 = vrot.lane.b32.xlu0 %v1370, 16
    %v1380 = vpop.permute.xlu0 %1379
    %1381 = vrot.lane.b32.xlu0 %v1371, 16
    %v1382 = vpop.permute.xlu0 %1381
    %1383 = vrot.lane.b32.xlu0 %v1372, 16
    %v1384 = vpop.permute.xlu0 %1383
    %vm1385 = vcmask 130048
    %v1386 = vsel %vm1385, %v1380, %v1382
    %v1387 = vsel %vm1385, %v1382, %v1384
    %1390 = vst [vmem:[#allocation3 + $0x8] sm:$0xff] %v1386
    %1391 = vst [vmem:[#allocation3 + $0x10] sm:$0xff] %v1387
    %1395 = vrot.lane.b32.xlu0 %v1373, 16
    %v1396 = vpop.permute.xlu0 %1395
    %1397 = vrot.lane.b32.xlu0 %v1374, 16
    %v1398 = vpop.permute.xlu0 %1397
    %1399 = vrot.lane.b32.xlu0 %v1375, 16
    %v1400 = vpop.permute.xlu0 %1399
    %v1401 = vsel %vm1385, %v1396, %v1398
    %v1402 = vsel %vm1385, %v1398, %v1400
    %1405 = vst [vmem:[#allocation3 + $0x20] sm:$0xff] %v1401
    %1406 = vst [vmem:[#allocation3 + $0x28] sm:$0xff] %v1402
    %v1407 = vld [vmem:[#allocation3] sm:$0xff]
    %v1408 = vld [vmem:[#allocation3 + $0x8] sm:$0xff]
    %v1409 = vld [vmem:[#allocation3 + $0x10] sm:$0xff]
    %v1410 = vld [vmem:[#allocation3 + $0x18] sm:$0xff]
    %v1411 = vld [vmem:[#allocation3 + $0x20] sm:$0xff]
    %v1412 = vld [vmem:[#allocation3 + $0x28] sm:$0xff]
    %s1413 = sld [smem:[#allocation4 + $0x4e]]
    %v1414 = vstv %s1413
    %v1415 = vmul.f32 %v1414, %v1407
    %v1416 = vmul.f32 %v1414, %v1408
    %v1417 = vmul.f32 %v1414, %v1409
    %s1418 = sld [smem:[#allocation4 + $0x57]]
    %v1419 = vstv %s1418
    %v1420 = vmul.f32 %v1419, %v1410
    %v1421 = vmul.f32 %v1419, %v1411
    %v1422 = vmul.f32 %v1419, %v1412
    %v1423 = vadd.f32 %v1415, %v1420
    %v1424 = vadd.f32 %v1416, %v1421
    %v1425 = vadd.f32 %v1417, %v1422
    %s1426 = sld [smem:[#allocation4 + $0x60]]
    %v1427 = vstv %s1426
    %v1428 = vmul.f32 %v1427, %v1407
    %v1429 = vmul.f32 %v1427, %v1408
    %v1430 = vmul.f32 %v1427, %v1409
    %s1431 = sld [smem:[#allocation4 + $0x69]]
    %v1432 = vstv %s1431
    %v1433 = vmul.f32 %v1432, %v1410
    %v1434 = vmul.f32 %v1432, %v1411
    %v1435 = vmul.f32 %v1432, %v1412
    %v1436 = vadd.f32 %v1428, %v1433
    %v1437 = vadd.f32 %v1429, %v1434
    %v1438 = vadd.f32 %v1430, %v1435
    %s1439 = sld [smem:[#allocation4 + $0x4f]]
    %v1440 = vstv %s1439
    %v1441 = vmul.f32 %v1440, %v1407
    %v1442 = vmul.f32 %v1440, %v1408
    %v1443 = vmul.f32 %v1440, %v1409
    %s1444 = sld [smem:[#allocation4 + $0x58]]
    %v1445 = vstv %s1444
    %v1446 = vmul.f32 %v1445, %v1410
    %v1447 = vmul.f32 %v1445, %v1411
    %v1448 = vmul.f32 %v1445, %v1412
    %v1449 = vadd.f32 %v1441, %v1446
    %v1450 = vadd.f32 %v1442, %v1447
    %v1451 = vadd.f32 %v1443, %v1448
    %s1452 = sld [smem:[#allocation4 + $0x61]]
    %v1453 = vstv %s1452
    %v1454 = vmul.f32 %v1453, %v1407
    %v1455 = vmul.f32 %v1453, %v1408
    %v1456 = vmul.f32 %v1453, %v1409
    %s1457 = sld [smem:[#allocation4 + $0x6a]]
    %v1458 = vstv %s1457
    %v1459 = vmul.f32 %v1458, %v1410
    %v1460 = vmul.f32 %v1458, %v1411
    %v1461 = vmul.f32 %v1458, %v1412
    %v1462 = vadd.f32 %v1454, %v1459
    %v1463 = vadd.f32 %v1455, %v1460
    %v1464 = vadd.f32 %v1456, %v1461
    %1468 = vrot.lane.b32.xlu0 %v1449, 124
    %v1469 = vpop.permute.xlu0 %1468
    %1470 = vrot.lane.b32.xlu0 %v1450, 124
    %v1471 = vpop.permute.xlu0 %1470
    %1472 = vrot.lane.b32.xlu0 %v1451, 124
    %v1473 = vpop.permute.xlu0 %1472
    %v1474 = vsel %vm212, %v1469, %v1471
    %v1475 = vsel %vm212, %v1471, %v1473
    %v1479 = vadd.f32 %v1423, %v1474
    %v1480 = vadd.f32 %v1424, %v1475
    %v1481 = vadd.f32 %v1425, %v1473
    %1485 = vrot.lane.b32.xlu0 %v1462, 124
    %v1486 = vpop.permute.xlu0 %1485
    %1487 = vrot.lane.b32.xlu0 %v1463, 124
    %v1488 = vpop.permute.xlu0 %1487
    %1489 = vrot.lane.b32.xlu0 %v1464, 124
    %v1490 = vpop.permute.xlu0 %1489
    %v1491 = vsel %vm212, %v1486, %v1488
    %v1492 = vsel %vm212, %v1488, %v1490
    %v1496 = vadd.f32 %v1436, %v1491
    %v1497 = vadd.f32 %v1437, %v1492
    %v1498 = vadd.f32 %v1438, %v1490
    %s1499 = sld [smem:[#allocation4 + $0x50]]
    %v1500 = vstv %s1499
    %v1501 = vmul.f32 %v1500, %v1407
    %v1502 = vmul.f32 %v1500, %v1408
    %v1503 = vmul.f32 %v1500, %v1409
    %s1504 = sld [smem:[#allocation4 + $0x59]]
    %v1505 = vstv %s1504
    %v1506 = vmul.f32 %v1505, %v1410
    %v1507 = vmul.f32 %v1505, %v1411
    %v1508 = vmul.f32 %v1505, %v1412
    %v1509 = vadd.f32 %v1501, %v1506
    %v1510 = vadd.f32 %v1502, %v1507
    %v1511 = vadd.f32 %v1503, %v1508
    %s1512 = sld [smem:[#allocation4 + $0x62]]
    %v1513 = vstv %s1512
    %v1514 = vmul.f32 %v1513, %v1407
    %v1515 = vmul.f32 %v1513, %v1408
    %v1516 = vmul.f32 %v1513, %v1409
    %s1517 = sld [smem:[#allocation4 + $0x6b]]
    %v1518 = vstv %s1517
    %v1519 = vmul.f32 %v1518, %v1410
    %v1520 = vmul.f32 %v1518, %v1411
    %v1521 = vmul.f32 %v1518, %v1412
    %v1522 = vadd.f32 %v1514, %v1519
    %v1523 = vadd.f32 %v1515, %v1520
    %v1524 = vadd.f32 %v1516, %v1521
    %1528 = vrot.lane.b32.xlu0 %v1509, 120
    %v1529 = vpop.permute.xlu0 %1528
    %1530 = vrot.lane.b32.xlu0 %v1510, 120
    %v1531 = vpop.permute.xlu0 %1530
    %1532 = vrot.lane.b32.xlu0 %v1511, 120
    %v1533 = vpop.permute.xlu0 %1532
    %v1534 = vsel %vm387, %v1529, %v1531
    %v1535 = vsel %vm387, %v1531, %v1533
    %v1539 = vadd.f32 %v1479, %v1534
    %v1540 = vadd.f32 %v1480, %v1535
    %v1541 = vadd.f32 %v1481, %v1533
    %1545 = vrot.lane.b32.xlu0 %v1522, 120
    %v1546 = vpop.permute.xlu0 %1545
    %1547 = vrot.lane.b32.xlu0 %v1523, 120
    %v1548 = vpop.permute.xlu0 %1547
    %1549 = vrot.lane.b32.xlu0 %v1524, 120
    %v1550 = vpop.permute.xlu0 %1549
    %v1551 = vsel %vm387, %v1546, %v1548
    %v1552 = vsel %vm387, %v1548, %v1550
    %v1556 = vadd.f32 %v1496, %v1551
    %v1557 = vadd.f32 %v1497, %v1552
    %v1558 = vadd.f32 %v1498, %v1550
    %s1559 = sld [smem:[#allocation4 + $0x51]]
    %v1560 = vstv %s1559
    %v1561 = vmul.f32 %v1560, %v1407
    %v1562 = vmul.f32 %v1560, %v1408
    %v1563 = vmul.f32 %v1560, %v1409
    %s1564 = sld [smem:[#allocation4 + $0x5a]]
    %v1565 = vstv %s1564
    %v1566 = vmul.f32 %v1565, %v1410
    %v1567 = vmul.f32 %v1565, %v1411
    %v1568 = vmul.f32 %v1565, %v1412
    %v1569 = vadd.f32 %v1561, %v1566
    %v1570 = vadd.f32 %v1562, %v1567
    %v1571 = vadd.f32 %v1563, %v1568
    %s1572 = sld [smem:[#allocation4 + $0x63]]
    %v1573 = vstv %s1572
    %v1574 = vmul.f32 %v1573, %v1407
    %v1575 = vmul.f32 %v1573, %v1408
    %v1576 = vmul.f32 %v1573, %v1409
    %s1577 = sld [smem:[#allocation4 + $0x6c]]
    %v1578 = vstv %s1577
    %v1579 = vmul.f32 %v1578, %v1410
    %v1580 = vmul.f32 %v1578, %v1411
    %v1581 = vmul.f32 %v1578, %v1412
    %v1582 = vadd.f32 %v1574, %v1579
    %v1583 = vadd.f32 %v1575, %v1580
    %v1584 = vadd.f32 %v1576, %v1581
    %1588 = vrot.lane.b32.xlu0 %v1569, 116
    %v1589 = vpop.permute.xlu0 %1588
    %1590 = vrot.lane.b32.xlu0 %v1570, 116
    %v1591 = vpop.permute.xlu0 %1590
    %1592 = vrot.lane.b32.xlu0 %v1571, 116
    %v1593 = vpop.permute.xlu0 %1592
    %v1594 = vsel %vm1227, %v1589, %v1591
    %v1595 = vsel %vm1227, %v1591, %v1593
    %v1599 = vadd.f32 %v1539, %v1594
    %v1600 = vadd.f32 %v1540, %v1595
    %v1601 = vadd.f32 %v1541, %v1593
    %1605 = vrot.lane.b32.xlu0 %v1582, 116
    %v1606 = vpop.permute.xlu0 %1605
    %1607 = vrot.lane.b32.xlu0 %v1583, 116
    %v1608 = vpop.permute.xlu0 %1607
    %1609 = vrot.lane.b32.xlu0 %v1584, 116
    %v1610 = vpop.permute.xlu0 %1609
    %v1611 = vsel %vm1227, %v1606, %v1608
    %v1612 = vsel %vm1227, %v1608, %v1610
    %v1616 = vadd.f32 %v1556, %v1611
    %v1617 = vadd.f32 %v1557, %v1612
    %v1618 = vadd.f32 %v1558, %v1610
    %s1619 = sld [smem:[#allocation4 + $0x52]]
    %v1620 = vstv %s1619
    %v1621 = vmul.f32 %v1620, %v1407
    %v1622 = vmul.f32 %v1620, %v1408
    %v1623 = vmul.f32 %v1620, %v1409
    %s1624 = sld [smem:[#allocation4 + $0x5b]]
    %v1625 = vstv %s1624
    %v1626 = vmul.f32 %v1625, %v1410
    %v1627 = vmul.f32 %v1625, %v1411
    %v1628 = vmul.f32 %v1625, %v1412
    %v1629 = vadd.f32 %v1621, %v1626
    %v1630 = vadd.f32 %v1622, %v1627
    %v1631 = vadd.f32 %v1623, %v1628
    %s1632 = sld [smem:[#allocation4 + $0x64]]
    %v1633 = vstv %s1632
    %v1634 = vmul.f32 %v1633, %v1407
    %v1635 = vmul.f32 %v1633, %v1408
    %v1636 = vmul.f32 %v1633, %v1409
    %s1637 = sld [smem:[#allocation4 + $0x6d]]
    %v1638 = vstv %s1637
    %v1639 = vmul.f32 %v1638, %v1410
    %v1640 = vmul.f32 %v1638, %v1411
    %v1641 = vmul.f32 %v1638, %v1412
    %v1642 = vadd.f32 %v1634, %v1639
    %v1643 = vadd.f32 %v1635, %v1640
    %v1644 = vadd.f32 %v1636, %v1641
    %1648 = vrot.lane.b32.xlu0 %v1629, 112
    %v1649 = vpop.permute.xlu0 %1648
    %1650 = vrot.lane.b32.xlu0 %v1630, 112
    %v1651 = vpop.permute.xlu0 %1650
    %1652 = vrot.lane.b32.xlu0 %v1631, 112
    %v1653 = vpop.permute.xlu0 %1652
    %v1654 = vsel %vm491, %v1649, %v1651
    %v1655 = vsel %vm491, %v1651, %v1653
    %v1659 = vadd.f32 %v1599, %v1654
    %v1660 = vadd.f32 %v1600, %v1655
    %v1661 = vadd.f32 %v1601, %v1653
    %1665 = vrot.lane.b32.xlu0 %v1642, 112
    %v1666 = vpop.permute.xlu0 %1665
    %1667 = vrot.lane.b32.xlu0 %v1643, 112
    %v1668 = vpop.permute.xlu0 %1667
    %1669 = vrot.lane.b32.xlu0 %v1644, 112
    %v1670 = vpop.permute.xlu0 %1669
    %v1671 = vsel %vm491, %v1666, %v1668
    %v1672 = vsel %vm491, %v1668, %v1670
    %v1676 = vadd.f32 %v1616, %v1671
    %v1677 = vadd.f32 %v1617, %v1672
    %v1678 = vadd.f32 %v1618, %v1670
    %s1679 = sld [smem:[#allocation4 + $0x53]]
    %v1680 = vstv %s1679
    %v1681 = vmul.f32 %v1680, %v1407
    %v1682 = vmul.f32 %v1680, %v1408
    %v1683 = vmul.f32 %v1680, %v1409
    %s1684 = sld [smem:[#allocation4 + $0x5c]]
    %v1685 = vstv %s1684
    %v1686 = vmul.f32 %v1685, %v1410
    %v1687 = vmul.f32 %v1685, %v1411
    %v1688 = vmul.f32 %v1685, %v1412
    %v1689 = vadd.f32 %v1681, %v1686
    %v1690 = vadd.f32 %v1682, %v1687
    %v1691 = vadd.f32 %v1683, %v1688
    %s1692 = sld [smem:[#allocation4 + $0x65]]
    %v1693 = vstv %s1692
    %v1694 = vmul.f32 %v1693, %v1407
    %v1695 = vmul.f32 %v1693, %v1408
    %v1696 = vmul.f32 %v1693, %v1409
    %s1697 = sld [smem:[#allocation4 + $0x6e]]
    %v1698 = vstv %s1697
    %v1699 = vmul.f32 %v1698, %v1410
    %v1700 = vmul.f32 %v1698, %v1411
    %v1701 = vmul.f32 %v1698, %v1412
    %v1702 = vadd.f32 %v1694, %v1699
    %v1703 = vadd.f32 %v1695, %v1700
    %v1704 = vadd.f32 %v1696, %v1701
    %1708 = vrot.lane.b32.xlu0 %v1689, 108
    %v1709 = vpop.permute.xlu0 %1708
    %1710 = vrot.lane.b32.xlu0 %v1690, 108
    %v1711 = vpop.permute.xlu0 %1710
    %1712 = vrot.lane.b32.xlu0 %v1691, 108
    %v1713 = vpop.permute.xlu0 %1712
    %vm1714 = vcmask 883712
    %v1715 = vsel %vm1714, %v1709, %v1711
    %v1716 = vsel %vm1714, %v1711, %v1713
    %v1720 = vadd.f32 %v1659, %v1715
    %v1721 = vadd.f32 %v1660, %v1716
    %v1722 = vadd.f32 %v1661, %v1713
    %1726 = vrot.lane.b32.xlu0 %v1702, 108
    %v1727 = vpop.permute.xlu0 %1726
    %1728 = vrot.lane.b32.xlu0 %v1703, 108
    %v1729 = vpop.permute.xlu0 %1728
    %1730 = vrot.lane.b32.xlu0 %v1704, 108
    %v1731 = vpop.permute.xlu0 %1730
    %v1732 = vsel %vm1714, %v1727, %v1729
    %v1733 = vsel %vm1714, %v1729, %v1731
    %v1737 = vadd.f32 %v1676, %v1732
    %v1738 = vadd.f32 %v1677, %v1733
    %v1739 = vadd.f32 %v1678, %v1731
    %s1740 = sld [smem:[#allocation4 + $0x54]]
    %v1741 = vstv %s1740
    %v1742 = vmul.f32 %v1741, %v1407
    %v1743 = vmul.f32 %v1741, %v1408
    %v1744 = vmul.f32 %v1741, %v1409
    %s1745 = sld [smem:[#allocation4 + $0x5d]]
    %v1746 = vstv %s1745
    %v1747 = vmul.f32 %v1746, %v1410
    %v1748 = vmul.f32 %v1746, %v1411
    %v1749 = vmul.f32 %v1746, %v1412
    %v1750 = vadd.f32 %v1742, %v1747
    %v1751 = vadd.f32 %v1743, %v1748
    %v1752 = vadd.f32 %v1744, %v1749
    %s1753 = sld [smem:[#allocation4 + $0x66]]
    %v1754 = vstv %s1753
    %v1755 = vmul.f32 %v1754, %v1407
    %v1756 = vmul.f32 %v1754, %v1408
    %v1757 = vmul.f32 %v1754, %v1409
    %s1758 = sld [smem:[#allocation4 + $0x6f]]
    %v1759 = vstv %s1758
    %v1760 = vmul.f32 %v1759, %v1410
    %v1761 = vmul.f32 %v1759, %v1411
    %v1762 = vmul.f32 %v1759, %v1412
    %v1763 = vadd.f32 %v1755, %v1760
    %v1764 = vadd.f32 %v1756, %v1761
    %v1765 = vadd.f32 %v1757, %v1762
    %1769 = vrot.lane.b32.xlu0 %v1750, 104
    %v1770 = vpop.permute.xlu0 %1769
    %1771 = vrot.lane.b32.xlu0 %v1751, 104
    %v1772 = vpop.permute.xlu0 %1771
    %1773 = vrot.lane.b32.xlu0 %v1752, 104
    %v1774 = vpop.permute.xlu0 %1773
    %v1775 = vsel %vm536, %v1770, %v1772
    %v1776 = vsel %vm536, %v1772, %v1774
    %v1780 = vadd.f32 %v1720, %v1775
    %v1781 = vadd.f32 %v1721, %v1776
    %v1782 = vadd.f32 %v1722, %v1774
    %1786 = vrot.lane.b32.xlu0 %v1763, 104
    %v1787 = vpop.permute.xlu0 %1786
    %1788 = vrot.lane.b32.xlu0 %v1764, 104
    %v1789 = vpop.permute.xlu0 %1788
    %1790 = vrot.lane.b32.xlu0 %v1765, 104
    %v1791 = vpop.permute.xlu0 %1790
    %v1792 = vsel %vm536, %v1787, %v1789
    %v1793 = vsel %vm536, %v1789, %v1791
    %v1797 = vadd.f32 %v1737, %v1792
    %v1798 = vadd.f32 %v1738, %v1793
    %v1799 = vadd.f32 %v1739, %v1791
    %s1800 = sld [smem:[#allocation4 + $0x55]]
    %v1801 = vstv %s1800
    %v1802 = vmul.f32 %v1801, %v1407
    %v1803 = vmul.f32 %v1801, %v1408
    %v1804 = vmul.f32 %v1801, %v1409
    %s1805 = sld [smem:[#allocation4 + $0x5e]]
    %v1806 = vstv %s1805
    %v1807 = vmul.f32 %v1806, %v1410
    %v1808 = vmul.f32 %v1806, %v1411
    %v1809 = vmul.f32 %v1806, %v1412
    %v1810 = vadd.f32 %v1802, %v1807
    %v1811 = vadd.f32 %v1803, %v1808
    %v1812 = vadd.f32 %v1804, %v1809
    %s1813 = sld [smem:[#allocation4 + $0x67]]
    %v1814 = vstv %s1813
    %v1815 = vmul.f32 %v1814, %v1407
    %v1816 = vmul.f32 %v1814, %v1408
    %v1817 = vmul.f32 %v1814, %v1409
    %s1818 = sld [smem:[#allocation4 + $0x70]]
    %v1819 = vstv %s1818
    %v1820 = vmul.f32 %v1819, %v1410
    %v1821 = vmul.f32 %v1819, %v1411
    %v1822 = vmul.f32 %v1819, %v1412
    %v1823 = vadd.f32 %v1815, %v1820
    %v1824 = vadd.f32 %v1816, %v1821
    %v1825 = vadd.f32 %v1817, %v1822
    %1829 = vrot.lane.b32.xlu0 %v1810, 100
    %v1830 = vpop.permute.xlu0 %1829
    %1831 = vrot.lane.b32.xlu0 %v1811, 100
    %v1832 = vpop.permute.xlu0 %1831
    %1833 = vrot.lane.b32.xlu0 %v1812, 100
    %v1834 = vpop.permute.xlu0 %1833
    %vm1835 = vcmask 818176
    %v1836 = vsel %vm1835, %v1830, %v1832
    %v1837 = vsel %vm1835, %v1832, %v1834
    %v1841 = vadd.f32 %v1780, %v1836
    %v1842 = vadd.f32 %v1781, %v1837
    %v1843 = vadd.f32 %v1782, %v1834
    %1847 = vrot.lane.b32.xlu0 %v1823, 100
    %v1848 = vpop.permute.xlu0 %1847
    %1849 = vrot.lane.b32.xlu0 %v1824, 100
    %v1850 = vpop.permute.xlu0 %1849
    %1851 = vrot.lane.b32.xlu0 %v1825, 100
    %v1852 = vpop.permute.xlu0 %1851
    %v1853 = vsel %vm1835, %v1848, %v1850
    %v1854 = vsel %vm1835, %v1850, %v1852
    %v1858 = vadd.f32 %v1797, %v1853
    %v1859 = vadd.f32 %v1798, %v1854
    %v1860 = vadd.f32 %v1799, %v1852
    %s1861 = sld [smem:[#allocation4 + $0x56]]
    %v1862 = vstv %s1861
    %v1863 = vmul.f32 %v1862, %v1408
    %v1864 = vmul.f32 %v1862, %v1409
    %s1865 = sld [smem:[#allocation4 + $0x5f]]
    %v1866 = vstv %s1865
    %v1867 = vmul.f32 %v1866, %v1411
    %v1868 = vmul.f32 %v1866, %v1412
    %v1869 = vadd.f32 %v1863, %v1867
    %v1870 = vadd.f32 %v1864, %v1868
    %s1871 = sld [smem:[#allocation4 + $0x68]]
    %v1872 = vstv %s1871
    %v1873 = vmul.f32 %v1872, %v1408
    %v1874 = vmul.f32 %v1872, %v1409
    %s1875 = sld [smem:[#allocation4 + $0x71]]
    %v1876 = vstv %s1875
    %v1877 = vmul.f32 %v1876, %v1411
    %v1878 = vmul.f32 %v1876, %v1412
    %v1879 = vadd.f32 %v1873, %v1877
    %v1880 = vadd.f32 %v1874, %v1878
    %1883 = vrot.lane.b32.xlu0 %v1869, 96
    %v1884 = vpop.permute.xlu0 %1883
    %1885 = vrot.lane.b32.xlu0 %v1870, 96
    %v1886 = vpop.permute.xlu0 %1885
    %v1887 = vsel %vm581, %v1884, %v1886
    %v1891 = vadd.f32 %v1841, %v1884
    %v1892 = vadd.f32 %v1842, %v1887
    %v1893 = vadd.f32 %v1843, %v1886
    %1896 = vrot.lane.b32.xlu0 %v1879, 96
    %v1897 = vpop.permute.xlu0 %1896
    %1898 = vrot.lane.b32.xlu0 %v1880, 96
    %v1899 = vpop.permute.xlu0 %1898
    %v1900 = vsel %vm581, %v1897, %v1899
    %v1904 = vadd.f32 %v1858, %v1897
    %v1905 = vadd.f32 %v1859, %v1900
    %v1906 = vadd.f32 %v1860, %v1899
    %s1907 = sld [smem:[#allocation4 + $0x72]]
    %v1908 = vstv %s1907
    %v1909 = vadd.f32 %v1891, %v1908
    %v1910 = vadd.f32 %v1892, %v1908
    %v1911 = vadd.f32 %v1893, %v1908
    %s1912 = sld [smem:[#allocation4 + $0x73]]
    %v1913 = vstv %s1912
    %v1914 = vadd.f32 %v1904, %v1913
    %v1915 = vadd.f32 %v1905, %v1913
    %v1916 = vadd.f32 %v1906, %v1913
    %v1917 = vtanh.pop %v1909
    %v1918 = vtanh.pop %v1910
    %v1919 = vtanh.pop %v1911
    %v1920 = vtanh.pop %v1914
    %v1921 = vtanh.pop %v1915
    %v1922 = vtanh.pop %v1916
    %1926 = vrot.lane.b32.xlu0 %v1917, 32
    %v1927 = vpop.permute.xlu0 %1926
    %1928 = vrot.lane.b32.xlu0 %v1918, 32
    %v1929 = vpop.permute.xlu0 %1928
    %1930 = vrot.lane.b32.xlu0 %v1919, 32
    %v1931 = vpop.permute.xlu0 %1930
    %vm1932 = vcmask 261120
    %v1933 = vsel %vm1932, %v1927, %v1929
    %v1934 = vsel %vm1932, %v1929, %v1931
    %1937 = vst [vmem:[#allocation3 + $0x8] sm:$0xff] %v1933
    %1938 = vst [vmem:[#allocation3 + $0x10] sm:$0xff] %v1934
    %1942 = vrot.lane.b32.xlu0 %v1920, 32
    %v1943 = vpop.permute.xlu0 %1942
    %1944 = vrot.lane.b32.xlu0 %v1921, 32
    %v1945 = vpop.permute.xlu0 %1944
    %1946 = vrot.lane.b32.xlu0 %v1922, 32
    %v1947 = vpop.permute.xlu0 %1946
    %v1948 = vsel %vm1932, %v1943, %v1945
    %v1949 = vsel %vm1932, %v1945, %v1947
    %1952 = vst [vmem:[#allocation3 + $0x20] sm:$0xff] %v1948
    %1953 = vst [vmem:[#allocation3 + $0x28] sm:$0xff] %v1949
    %v1954 = vld [vmem:[#allocation3] sm:$0xff]
    %v1955 = vld [vmem:[#allocation3 + $0x8] sm:$0xff]
    %v1956 = vld [vmem:[#allocation3 + $0x10] sm:$0xff]
    %v1957 = vld [vmem:[#allocation3 + $0x18] sm:$0xff]
    %v1958 = vld [vmem:[#allocation3 + $0x20] sm:$0xff]
    %v1959 = vld [vmem:[#allocation3 + $0x28] sm:$0xff]
    %s1960 = sld [smem:[#allocation4 + $0x74]]
    %v1961 = vstv %s1960
    %v1962 = vmul.f32 %v1961, %v1954
    %v1963 = vmul.f32 %v1961, %v1955
    %v1964 = vmul.f32 %v1961, %v1956
    %s1965 = sld [smem:[#allocation4 + $0x7d]]
    %v1966 = vstv %s1965
    %v1967 = vmul.f32 %v1966, %v1957
    %v1968 = vmul.f32 %v1966, %v1958
    %v1969 = vmul.f32 %v1966, %v1959
    %v1970 = vadd.f32 %v1962, %v1967
    %v1971 = vadd.f32 %v1963, %v1968
    %v1972 = vadd.f32 %v1964, %v1969
    %s1973 = sld [smem:[#allocation4 + $0x86]]
    %v1974 = vstv %s1973
    %v1975 = vmul.f32 %v1974, %v1954
    %v1976 = vmul.f32 %v1974, %v1955
    %v1977 = vmul.f32 %v1974, %v1956
    %s1978 = sld [smem:[#allocation4 + $0x8f]]
    %v1979 = vstv %s1978
    %v1980 = vmul.f32 %v1979, %v1957
    %v1981 = vmul.f32 %v1979, %v1958
    %v1982 = vmul.f32 %v1979, %v1959
    %v1983 = vadd.f32 %v1975, %v1980
    %v1984 = vadd.f32 %v1976, %v1981
    %v1985 = vadd.f32 %v1977, %v1982
    %s1986 = sld [smem:[#allocation4 + $0x75]]
    %v1987 = vstv %s1986
    %v1988 = vmul.f32 %v1987, %v1954
    %v1989 = vmul.f32 %v1987, %v1955
    %v1990 = vmul.f32 %v1987, %v1956
    %s1991 = sld [smem:[#allocation4 + $0x7e]]
    %v1992 = vstv %s1991
    %v1993 = vmul.f32 %v1992, %v1957
    %v1994 = vmul.f32 %v1992, %v1958
    %v1995 = vmul.f32 %v1992, %v1959
    %v1996 = vadd.f32 %v1988, %v1993
    %v1997 = vadd.f32 %v1989, %v1994
    %v1998 = vadd.f32 %v1990, %v1995
    %s1999 = sld [smem:[#allocation4 + $0x87]]
    %v2000 = vstv %s1999
    %v2001 = vmul.f32 %v2000, %v1954
    %v2002 = vmul.f32 %v2000, %v1955
    %v2003 = vmul.f32 %v2000, %v1956
    %s2004 = sld [smem:[#allocation4 + $0x90]]
    %v2005 = vstv %s2004
    %v2006 = vmul.f32 %v2005, %v1957
    %v2007 = vmul.f32 %v2005, %v1958
    %v2008 = vmul.f32 %v2005, %v1959
    %v2009 = vadd.f32 %v2001, %v2006
    %v2010 = vadd.f32 %v2002, %v2007
    %v2011 = vadd.f32 %v2003, %v2008
    %2015 = vrot.lane.b32.xlu0 %v1996, 120
    %v2016 = vpop.permute.xlu0 %2015
    %2017 = vrot.lane.b32.xlu0 %v1997, 120
    %v2018 = vpop.permute.xlu0 %2017
    %2019 = vrot.lane.b32.xlu0 %v1998, 120
    %v2020 = vpop.permute.xlu0 %2019
    %v2021 = vsel %vm387, %v2016, %v2018
    %v2022 = vsel %vm387, %v2018, %v2020
    %v2026 = vadd.f32 %v1970, %v2021
    %v2027 = vadd.f32 %v1971, %v2022
    %v2028 = vadd.f32 %v1972, %v2020
    %2032 = vrot.lane.b32.xlu0 %v2009, 120
    %v2033 = vpop.permute.xlu0 %2032
    %2034 = vrot.lane.b32.xlu0 %v2010, 120
    %v2035 = vpop.permute.xlu0 %2034
    %2036 = vrot.lane.b32.xlu0 %v2011, 120
    %v2037 = vpop.permute.xlu0 %2036
    %v2038 = vsel %vm387, %v2033, %v2035
    %v2039 = vsel %vm387, %v2035, %v2037
    %v2043 = vadd.f32 %v1983, %v2038
    %v2044 = vadd.f32 %v1984, %v2039
    %v2045 = vadd.f32 %v1985, %v2037
    %s2046 = sld [smem:[#allocation4 + $0x76]]
    %v2047 = vstv %s2046
    %v2048 = vmul.f32 %v2047, %v1954
    %v2049 = vmul.f32 %v2047, %v1955
    %v2050 = vmul.f32 %v2047, %v1956
    %s2051 = sld [smem:[#allocation4 + $0x7f]]
    %v2052 = vstv %s2051
    %v2053 = vmul.f32 %v2052, %v1957
    %v2054 = vmul.f32 %v2052, %v1958
    %v2055 = vmul.f32 %v2052, %v1959
    %v2056 = vadd.f32 %v2048, %v2053
    %v2057 = vadd.f32 %v2049, %v2054
    %v2058 = vadd.f32 %v2050, %v2055
    %s2059 = sld [smem:[#allocation4 + $0x88]]
    %v2060 = vstv %s2059
    %v2061 = vmul.f32 %v2060, %v1954
    %v2062 = vmul.f32 %v2060, %v1955
    %v2063 = vmul.f32 %v2060, %v1956
    %s2064 = sld [smem:[#allocation4 + $0x91]]
    %v2065 = vstv %s2064
    %v2066 = vmul.f32 %v2065, %v1957
    %v2067 = vmul.f32 %v2065, %v1958
    %v2068 = vmul.f32 %v2065, %v1959
    %v2069 = vadd.f32 %v2061, %v2066
    %v2070 = vadd.f32 %v2062, %v2067
    %v2071 = vadd.f32 %v2063, %v2068
    %2075 = vrot.lane.b32.xlu0 %v2056, 112
    %v2076 = vpop.permute.xlu0 %2075
    %2077 = vrot.lane.b32.xlu0 %v2057, 112
    %v2078 = vpop.permute.xlu0 %2077
    %2079 = vrot.lane.b32.xlu0 %v2058, 112
    %v2080 = vpop.permute.xlu0 %2079
    %v2081 = vsel %vm491, %v2076, %v2078
    %v2082 = vsel %vm491, %v2078, %v2080
    %v2086 = vadd.f32 %v2026, %v2081
    %v2087 = vadd.f32 %v2027, %v2082
    %v2088 = vadd.f32 %v2028, %v2080
    %2092 = vrot.lane.b32.xlu0 %v2069, 112
    %v2093 = vpop.permute.xlu0 %2092
    %2094 = vrot.lane.b32.xlu0 %v2070, 112
    %v2095 = vpop.permute.xlu0 %2094
    %2096 = vrot.lane.b32.xlu0 %v2071, 112
    %v2097 = vpop.permute.xlu0 %2096
    %v2098 = vsel %vm491, %v2093, %v2095
    %v2099 = vsel %vm491, %v2095, %v2097
    %v2103 = vadd.f32 %v2043, %v2098
    %v2104 = vadd.f32 %v2044, %v2099
    %v2105 = vadd.f32 %v2045, %v2097
    %s2106 = sld [smem:[#allocation4 + $0x77]]
    %v2107 = vstv %s2106
    %v2108 = vmul.f32 %v2107, %v1954
    %v2109 = vmul.f32 %v2107, %v1955
    %v2110 = vmul.f32 %v2107, %v1956
    %s2111 = sld [smem:[#allocation4 + $0x80]]
    %v2112 = vstv %s2111
    %v2113 = vmul.f32 %v2112, %v1957
    %v2114 = vmul.f32 %v2112, %v1958
    %v2115 = vmul.f32 %v2112, %v1959
    %v2116 = vadd.f32 %v2108, %v2113
    %v2117 = vadd.f32 %v2109, %v2114
    %v2118 = vadd.f32 %v2110, %v2115
    %s2119 = sld [smem:[#allocation4 + $0x89]]
    %v2120 = vstv %s2119
    %v2121 = vmul.f32 %v2120, %v1954
    %v2122 = vmul.f32 %v2120, %v1955
    %v2123 = vmul.f32 %v2120, %v1956
    %s2124 = sld [smem:[#allocation4 + $0x92]]
    %v2125 = vstv %s2124
    %v2126 = vmul.f32 %v2125, %v1957
    %v2127 = vmul.f32 %v2125, %v1958
    %v2128 = vmul.f32 %v2125, %v1959
    %v2129 = vadd.f32 %v2121, %v2126
    %v2130 = vadd.f32 %v2122, %v2127
    %v2131 = vadd.f32 %v2123, %v2128
    %2135 = vrot.lane.b32.xlu0 %v2116, 104
    %v2136 = vpop.permute.xlu0 %2135
    %2137 = vrot.lane.b32.xlu0 %v2117, 104
    %v2138 = vpop.permute.xlu0 %2137
    %2139 = vrot.lane.b32.xlu0 %v2118, 104
    %v2140 = vpop.permute.xlu0 %2139
    %v2141 = vsel %vm536, %v2136, %v2138
    %v2142 = vsel %vm536, %v2138, %v2140
    %v2146 = vadd.f32 %v2086, %v2141
    %v2147 = vadd.f32 %v2087, %v2142
    %v2148 = vadd.f32 %v2088, %v2140
    %2152 = vrot.lane.b32.xlu0 %v2129, 104
    %v2153 = vpop.permute.xlu0 %2152
    %2154 = vrot.lane.b32.xlu0 %v2130, 104
    %v2155 = vpop.permute.xlu0 %2154
    %2156 = vrot.lane.b32.xlu0 %v2131, 104
    %v2157 = vpop.permute.xlu0 %2156
    %v2158 = vsel %vm536, %v2153, %v2155
    %v2159 = vsel %vm536, %v2155, %v2157
    %v2163 = vadd.f32 %v2103, %v2158
    %v2164 = vadd.f32 %v2104, %v2159
    %v2165 = vadd.f32 %v2105, %v2157
    %s2166 = sld [smem:[#allocation4 + $0x78]]
    %v2167 = vstv %s2166
    %v2168 = vmul.f32 %v2167, %v1954
    %v2169 = vmul.f32 %v2167, %v1955
    %v2170 = vmul.f32 %v2167, %v1956
    %s2171 = sld [smem:[#allocation4 + $0x81]]
    %v2172 = vstv %s2171
    %v2173 = vmul.f32 %v2172, %v1957
    %v2174 = vmul.f32 %v2172, %v1958
    %v2175 = vmul.f32 %v2172, %v1959
    %v2176 = vadd.f32 %v2168, %v2173
    %v2177 = vadd.f32 %v2169, %v2174
    %v2178 = vadd.f32 %v2170, %v2175
    %s2179 = sld [smem:[#allocation4 + $0x8a]]
    %v2180 = vstv %s2179
    %v2181 = vmul.f32 %v2180, %v1954
    %v2182 = vmul.f32 %v2180, %v1955
    %v2183 = vmul.f32 %v2180, %v1956
    %s2184 = sld [smem:[#allocation4 + $0x93]]
    %v2185 = vstv %s2184
    %v2186 = vmul.f32 %v2185, %v1957
    %v2187 = vmul.f32 %v2185, %v1958
    %v2188 = vmul.f32 %v2185, %v1959
    %v2189 = vadd.f32 %v2181, %v2186
    %v2190 = vadd.f32 %v2182, %v2187
    %v2191 = vadd.f32 %v2183, %v2188
    %2195 = vrot.lane.b32.xlu0 %v2176, 96
    %v2196 = vpop.permute.xlu0 %2195
    %2197 = vrot.lane.b32.xlu0 %v2177, 96
    %v2198 = vpop.permute.xlu0 %2197
    %2199 = vrot.lane.b32.xlu0 %v2178, 96
    %v2200 = vpop.permute.xlu0 %2199
    %v2201 = vsel %vm581, %v2196, %v2198
    %v2202 = vsel %vm581, %v2198, %v2200
    %v2206 = vadd.f32 %v2146, %v2201
    %v2207 = vadd.f32 %v2147, %v2202
    %v2208 = vadd.f32 %v2148, %v2200
    %2212 = vrot.lane.b32.xlu0 %v2189, 96
    %v2213 = vpop.permute.xlu0 %2212
    %2214 = vrot.lane.b32.xlu0 %v2190, 96
    %v2215 = vpop.permute.xlu0 %2214
    %2216 = vrot.lane.b32.xlu0 %v2191, 96
    %v2217 = vpop.permute.xlu0 %2216
    %v2218 = vsel %vm581, %v2213, %v2215
    %v2219 = vsel %vm581, %v2215, %v2217
    %v2223 = vadd.f32 %v2163, %v2218
    %v2224 = vadd.f32 %v2164, %v2219
    %v2225 = vadd.f32 %v2165, %v2217
    %s2226 = sld [smem:[#allocation4 + $0x79]]
    %v2227 = vstv %s2226
    %v2228 = vmul.f32 %v2227, %v1954
    %v2229 = vmul.f32 %v2227, %v1955
    %v2230 = vmul.f32 %v2227, %v1956
    %s2231 = sld [smem:[#allocation4 + $0x82]]
    %v2232 = vstv %s2231
    %v2233 = vmul.f32 %v2232, %v1957
    %v2234 = vmul.f32 %v2232, %v1958
    %v2235 = vmul.f32 %v2232, %v1959
    %v2236 = vadd.f32 %v2228, %v2233
    %v2237 = vadd.f32 %v2229, %v2234
    %v2238 = vadd.f32 %v2230, %v2235
    %s2239 = sld [smem:[#allocation4 + $0x8b]]
    %v2240 = vstv %s2239
    %v2241 = vmul.f32 %v2240, %v1954
    %v2242 = vmul.f32 %v2240, %v1955
    %v2243 = vmul.f32 %v2240, %v1956
    %s2244 = sld [smem:[#allocation4 + $0x94]]
    %v2245 = vstv %s2244
    %v2246 = vmul.f32 %v2245, %v1957
    %v2247 = vmul.f32 %v2245, %v1958
    %v2248 = vmul.f32 %v2245, %v1959
    %v2249 = vadd.f32 %v2241, %v2246
    %v2250 = vadd.f32 %v2242, %v2247
    %v2251 = vadd.f32 %v2243, %v2248
    %2255 = vrot.lane.b32.xlu0 %v2236, 88
    %v2256 = vpop.permute.xlu0 %2255
    %2257 = vrot.lane.b32.xlu0 %v2237, 88
    %v2258 = vpop.permute.xlu0 %2257
    %2259 = vrot.lane.b32.xlu0 %v2238, 88
    %v2260 = vpop.permute.xlu0 %2259
    %v2261 = vsel %vm626, %v2256, %v2258
    %v2262 = vsel %vm626, %v2258, %v2260
    %v2266 = vadd.f32 %v2206, %v2261
    %v2267 = vadd.f32 %v2207, %v2262
    %v2268 = vadd.f32 %v2208, %v2260
    %2272 = vrot.lane.b32.xlu0 %v2249, 88
    %v2273 = vpop.permute.xlu0 %2272
    %2274 = vrot.lane.b32.xlu0 %v2250, 88
    %v2275 = vpop.permute.xlu0 %2274
    %2276 = vrot.lane.b32.xlu0 %v2251, 88
    %v2277 = vpop.permute.xlu0 %2276
    %v2278 = vsel %vm626, %v2273, %v2275
    %v2279 = vsel %vm626, %v2275, %v2277
    %v2283 = vadd.f32 %v2223, %v2278
    %v2284 = vadd.f32 %v2224, %v2279
    %v2285 = vadd.f32 %v2225, %v2277
    %s2286 = sld [smem:[#allocation4 + $0x7a]]
    %v2287 = vstv %s2286
    %v2288 = vmul.f32 %v2287, %v1954
    %v2289 = vmul.f32 %v2287, %v1955
    %v2290 = vmul.f32 %v2287, %v1956
    %s2291 = sld [smem:[#allocation4 + $0x83]]
    %v2292 = vstv %s2291
    %v2293 = vmul.f32 %v2292, %v1957
    %v2294 = vmul.f32 %v2292, %v1958
    %v2295 = vmul.f32 %v2292, %v1959
    %v2296 = vadd.f32 %v2288, %v2293
    %v2297 = vadd.f32 %v2289, %v2294
    %v2298 = vadd.f32 %v2290, %v2295
    %s2299 = sld [smem:[#allocation4 + $0x8c]]
    %v2300 = vstv %s2299
    %v2301 = vmul.f32 %v2300, %v1954
    %v2302 = vmul.f32 %v2300, %v1955
    %v2303 = vmul.f32 %v2300, %v1956
    %s2304 = sld [smem:[#allocation4 + $0x95]]
    %v2305 = vstv %s2304
    %v2306 = vmul.f32 %v2305, %v1957
    %v2307 = vmul.f32 %v2305, %v1958
    %v2308 = vmul.f32 %v2305, %v1959
    %v2309 = vadd.f32 %v2301, %v2306
    %v2310 = vadd.f32 %v2302, %v2307
    %v2311 = vadd.f32 %v2303, %v2308
    %2315 = vrot.lane.b32.xlu0 %v2296, 80
    %v2316 = vpop.permute.xlu0 %2315
    %2317 = vrot.lane.b32.xlu0 %v2297, 80
    %v2318 = vpop.permute.xlu0 %2317
    %2319 = vrot.lane.b32.xlu0 %v2298, 80
    %v2320 = vpop.permute.xlu0 %2319
    %v2321 = vsel %vm671, %v2316, %v2318
    %v2322 = vsel %vm671, %v2318, %v2320
    %v2326 = vadd.f32 %v2266, %v2321
    %v2327 = vadd.f32 %v2267, %v2322
    %v2328 = vadd.f32 %v2268, %v2320
    %2332 = vrot.lane.b32.xlu0 %v2309, 80
    %v2333 = vpop.permute.xlu0 %2332
    %2334 = vrot.lane.b32.xlu0 %v2310, 80
    %v2335 = vpop.permute.xlu0 %2334
    %2336 = vrot.lane.b32.xlu0 %v2311, 80
    %v2337 = vpop.permute.xlu0 %2336
    %v2338 = vsel %vm671, %v2333, %v2335
    %v2339 = vsel %vm671, %v2335, %v2337
    %v2343 = vadd.f32 %v2283, %v2338
    %v2344 = vadd.f32 %v2284, %v2339
    %v2345 = vadd.f32 %v2285, %v2337
    %s2346 = sld [smem:[#allocation4 + $0x7b]]
    %v2347 = vstv %s2346
    %v2348 = vmul.f32 %v2347, %v1954
    %v2349 = vmul.f32 %v2347, %v1955
    %v2350 = vmul.f32 %v2347, %v1956
    %s2351 = sld [smem:[#allocation4 + $0x84]]
    %v2352 = vstv %s2351
    %v2353 = vmul.f32 %v2352, %v1957
    %v2354 = vmul.f32 %v2352, %v1958
    %v2355 = vmul.f32 %v2352, %v1959
    %v2356 = vadd.f32 %v2348, %v2353
    %v2357 = vadd.f32 %v2349, %v2354
    %v2358 = vadd.f32 %v2350, %v2355
    %s2359 = sld [smem:[#allocation4 + $0x8d]]
    %v2360 = vstv %s2359
    %v2361 = vmul.f32 %v2360, %v1954
    %v2362 = vmul.f32 %v2360, %v1955
    %v2363 = vmul.f32 %v2360, %v1956
    %s2364 = sld [smem:[#allocation4 + $0x96]]
    %v2365 = vstv %s2364
    %v2366 = vmul.f32 %v2365, %v1957
    %v2367 = vmul.f32 %v2365, %v1958
    %v2368 = vmul.f32 %v2365, %v1959
    %v2369 = vadd.f32 %v2361, %v2366
    %v2370 = vadd.f32 %v2362, %v2367
    %v2371 = vadd.f32 %v2363, %v2368
    %2375 = vrot.lane.b32.xlu0 %v2356, 72
    %v2376 = vpop.permute.xlu0 %2375
    %2377 = vrot.lane.b32.xlu0 %v2357, 72
    %v2378 = vpop.permute.xlu0 %2377
    %2379 = vrot.lane.b32.xlu0 %v2358, 72
    %v2380 = vpop.permute.xlu0 %2379
    %v2381 = vsel %vm716, %v2376, %v2378
    %v2382 = vsel %vm716, %v2378, %v2380
    %v2386 = vadd.f32 %v2326, %v2381
    %v2387 = vadd.f32 %v2327, %v2382
    %v2388 = vadd.f32 %v2328, %v2380
    %2392 = vrot.lane.b32.xlu0 %v2369, 72
    %v2393 = vpop.permute.xlu0 %2392
    %2394 = vrot.lane.b32.xlu0 %v2370, 72
    %v2395 = vpop.permute.xlu0 %2394
    %2396 = vrot.lane.b32.xlu0 %v2371, 72
    %v2397 = vpop.permute.xlu0 %2396
    %v2398 = vsel %vm716, %v2393, %v2395
    %v2399 = vsel %vm716, %v2395, %v2397
    %v2403 = vadd.f32 %v2343, %v2398
    %v2404 = vadd.f32 %v2344, %v2399
    %v2405 = vadd.f32 %v2345, %v2397
    %s2406 = sld [smem:[#allocation4 + $0x7c]]
    %v2407 = vstv %s2406
    %v2408 = vmul.f32 %v2407, %v1955
    %v2409 = vmul.f32 %v2407, %v1956
    %s2410 = sld [smem:[#allocation4 + $0x85]]
    %v2411 = vstv %s2410
    %v2412 = vmul.f32 %v2411, %v1958
    %v2413 = vmul.f32 %v2411, %v1959
    %v2414 = vadd.f32 %v2408, %v2412
    %v2415 = vadd.f32 %v2409, %v2413
    %s2416 = sld [smem:[#allocation4 + $0x8e]]
    %v2417 = vstv %s2416
    %v2418 = vmul.f32 %v2417, %v1955
    %v2419 = vmul.f32 %v2417, %v1956
    %s2420 = sld [smem:[#allocation4 + $0x97]]
    %v2421 = vstv %s2420
    %v2422 = vmul.f32 %v2421, %v1958
    %v2423 = vmul.f32 %v2421, %v1959
    %v2424 = vadd.f32 %v2418, %v2422
    %v2425 = vadd.f32 %v2419, %v2423
    %2428 = vrot.lane.b32.xlu0 %v2414, 64
    %v2429 = vpop.permute.xlu0 %2428
    %2430 = vrot.lane.b32.xlu0 %v2415, 64
    %v2431 = vpop.permute.xlu0 %2430
    %v2432 = vsel %vm756, %v2429, %v2431
    %v2436 = vadd.f32 %v2386, %v2429
    %v2437 = vadd.f32 %v2387, %v2432
    %v2438 = vadd.f32 %v2388, %v2431
    %2441 = vrot.lane.b32.xlu0 %v2424, 64
    %v2442 = vpop.permute.xlu0 %2441
    %2443 = vrot.lane.b32.xlu0 %v2425, 64
    %v2444 = vpop.permute.xlu0 %2443
    %v2445 = vsel %vm756, %v2442, %v2444
    %v2449 = vadd.f32 %v2403, %v2442
    %v2450 = vadd.f32 %v2404, %v2445
    %v2451 = vadd.f32 %v2405, %v2444
    %s2452 = sld [smem:[#allocation4 + $0x98]]
    %v2453 = vstv %s2452
    %v2454 = vadd.f32 %v2436, %v2453
    %v2455 = vadd.f32 %v2437, %v2453
    %v2456 = vadd.f32 %v2438, %v2453
    %s2457 = sld [smem:[#allocation4 + $0x99]]
    %v2458 = vstv %s2457
    %v2459 = vadd.f32 %v2449, %v2458
    %v2460 = vadd.f32 %v2450, %v2458
    %v2461 = vadd.f32 %v2451, %v2458
    %2465 = vrot.lane.b32.xlu0 %v802, 72
    %v2466 = vpop.permute.xlu0 %2465
    %2467 = vrot.lane.b32.xlu0 %v803, 72
    %v2468 = vpop.permute.xlu0 %2467
    %2469 = vrot.lane.b32.xlu0 %v804, 72
    %v2470 = vpop.permute.xlu0 %2469
    %v2471 = vsel %vm716, %v2466, %v2468
    %v2472 = vsel %vm716, %v2468, %v2470
    %v2476 = vadd.f32 %v2454, %v2471
    %v2477 = vadd.f32 %v2455, %v2472
    %v2478 = vadd.f32 %v2456, %v2470
    %2482 = vrot.lane.b32.xlu0 %v2476, 64
    %v2483 = vpop.permute.xlu0 %2482
    %2484 = vrot.lane.b32.xlu0 %v2477, 64
    %v2485 = vpop.permute.xlu0 %2484
    %2486 = vrot.lane.b32.xlu0 %v2478, 64
    %v2487 = vpop.permute.xlu0 %2486
    %v2488 = vsel %vm756, %v2483, %v2485
    %v2489 = vsel %vm756, %v2485, %v2487
    %2492 = vst [vmem:[#allocation9] sm:$0xff] %v2488
    %2493 = vst [vmem:[#allocation9 + $0x8] sm:$0xff] %v2489
    %2497 = vrot.lane.b32.xlu0 %v819, 72
    %v2498 = vpop.permute.xlu0 %2497
    %2499 = vrot.lane.b32.xlu0 %v820, 72
    %v2500 = vpop.permute.xlu0 %2499
    %2501 = vrot.lane.b32.xlu0 %v821, 72
    %v2502 = vpop.permute.xlu0 %2501
    %v2503 = vsel %vm716, %v2498, %v2500
    %v2504 = vsel %vm716, %v2500, %v2502
    %v2508 = vadd.f32 %v2459, %v2503
    %v2509 = vadd.f32 %v2460, %v2504
    %v2510 = vadd.f32 %v2461, %v2502
    %v2511 = vmul.f32 %v2508, 0.5
    %v2512 = vmul.f32 %v2509, 0.5
    %v2513 = vmul.f32 %v2510, 0.5
    %v2514 = vmul.f32 %v2511, 1.442695
    %v2515 = vpow.pop %v2514
    %v2516 = vmul.f32 %v2512, 1.442695
    %v2517 = vpow.pop %v2516
    %v2518 = vmul.f32 %v2513, 1.442695
    %v2519 = vpow.pop %v2518
    %2523 = vrot.lane.b32.xlu0 %v2515, 64
    %v2524 = vpop.permute.xlu0 %2523
    %2525 = vrot.lane.b32.xlu0 %v2517, 64
    %v2526 = vpop.permute.xlu0 %2525
    %2527 = vrot.lane.b32.xlu0 %v2519, 64
    %v2528 = vpop.permute.xlu0 %2527
    %v2529 = vsel %vm756, %v2524, %v2526
    %v2530 = vsel %vm756, %v2526, %v2528
    %2533 = vst [vmem:[#allocation10] sm:$0xff] %v2529
    %2534 = vst [vmem:[#allocation10 + $0x8] sm:$0xff] %v2530
    // Predicated region
    $region18: #{tpu_custom_call.1} parent=1 // pred_check
      _
    $region19: #{tpu_custom_call.1} parent=1 // pred_check_branch
      %2536 = sbr.rel (0) target = $region21
    $region20: #{tpu_custom_call.1} parent=1 // pred_region
      %s2538 = ssub.s32 256, 256
      %2539 = vsyncadd [#allocation6], %s2538
      %s2541 = sshll.u32 [#allocation9], 4
      %s2542 = int_to_ptr.vmem [resolvable:$true] %s2541
      %2544 = dma.vmem_to_hbm [thread:$0]  %s2542, 256, %s2, [#allocation6]
    $region21: #{tpu_custom_call.1} parent=1 // pred_fallthru
      _
    // Predicated region
    $region22: #{tpu_custom_call.1} parent=1 // pred_check
      _
    $region23: #{tpu_custom_call.1} parent=1 // pred_check_branch
      %2546 = sbr.rel (0) target = $region25
    $region24: #{tpu_custom_call.1} parent=1 // pred_region
      %s2548 = ssub.s32 256, 256
      %2549 = vsyncadd [#allocation11], %s2548
      %s2551 = sshll.u32 [#allocation10], 4
      %s2552 = int_to_ptr.vmem [resolvable:$true] %s2551
      %2554 = dma.vmem_to_hbm [thread:$0]  %s2552, 256, %s3, [#allocation11]
    $region25: #{tpu_custom_call.1} parent=1 // pred_fallthru
      _
    // Predicated region
    $region26: #{tpu_custom_call.1} parent=1 // pred_check
      _
    $region27: #{tpu_custom_call.1} parent=1 // pred_check_branch
      %2556 = sbr.rel (0) target = $region29
    $region28: #{tpu_custom_call.1} parent=1 // pred_region
      %2557 = dma.done [#allocation6], 256
    $region29: #{tpu_custom_call.1} parent=1 // pred_fallthru
      _
    // Predicated region
    $region30: #{tpu_custom_call.1} parent=1 // pred_check
      _
    $region31: #{tpu_custom_call.1} parent=1 // pred_check_branch
      %2559 = sbr.rel (0) target = $region33
    $region32: #{tpu_custom_call.1} parent=1 // pred_region
      %2560 = dma.done [#allocation11], 256
    $region33: #{tpu_custom_call.1} parent=1 // pred_fallthru
      _
    %2561 = vsyncpa [#allocation5], 1
    %2562 = vsyncpa [#allocation6], 1
    %2563 = vsyncpa [#allocation11], 1
    %2564 = vsyncpa [#allocation7], 1

</llo_original>
